<compile_context>
chip_gen: v7x
topology: tpu7x:2x2x1
jax: 0.10.0
libtpu: 0.0.40
codegen_flags: <defaults>
</compile_context>

<pallas_src>
import functools

import jax
import jax.numpy as jnp
from jax.experimental import pallas as pl
from jax.experimental.pallas import tpu as pltpu

C_IN = 4
C_BACK = 32
PROJ_DIM = 128
NUM_CLASSES = 10
HEAD_PAD = 128                        # lane-dense width for head weights / output slabs
MAX_BLOCK_B = 128                     # cap on batch tile (multiple of 8)
TARGET_TILE_BYTES = 2 * 1024 * 1024   # ~2 MB patch tiles (~85% of HBM roofline)


def _round_up(x, m):
    return -(-x // m) * m


def _choose_block_b(b, hw, k_cols):
    """Batch tile: multiple of 8, sized for ~2 MB bf16 patch tiles, capped at 128."""
    row_bytes = hw * k_cols * 2                       # bf16 patches per image
    cap = max(8, min(MAX_BLOCK_B, (TARGET_TILE_BYTES // row_bytes) // 8 * 8))
    if b <= cap:
        return _round_up(max(b, 1), 8)                # tiny batch -> single grid step
    return cap


# ----------------------------------------------------------------------------
# Single fused kernel: conv-as-matmul + ReLU + GAP (mean) + projector + classifier
# ----------------------------------------------------------------------------
def fused_kernel(with_z, p_ref, wc_ref, bc_ref, w1_ref, b1_ref, w2_ref, b2_ref,
                 w3_ref, b3_ref, *out_refs):
    if with_z:
        z_ref, pred_ref = out_refs
    else:
        (pred_ref,) = out_refs

    block_b, hw, kc = p_ref.shape
    c_out = wc_ref.shape[1]

    # ---- backbone: 3x3 conv as one matmul over every row of this batch block.
    #      K = 36 (unpadded); MXU pads the contraction dim internally.
    p = p_ref[...].reshape(block_b * hw, kc)                          # bf16
    y = jnp.dot(p, wc_ref[...], preferred_element_type=jnp.float32)  # (bb*HW, 32) f32
    y = jnp.maximum(y + bc_ref[...], 0.0)

    # ---- global average pool: direct sublane-axis mean (VPU/XLU, true f32 accum)
    feats = jnp.mean(y.reshape(block_b, hw, c_out), axis=1)          # (bb, 32) f32

    # ---- projector + linear classifier (weights pre-padded to 128-wide outputs)
    z = jnp.maximum(
        jnp.dot(feats.astype(jnp.bfloat16), w1_ref[...],
                preferred_element_type=jnp.float32) + b1_ref[...], 0.0)   # (bb, 128)
    proj = jnp.dot(z.astype(jnp.bfloat16), w2_ref[...],
                   preferred_element_type=jnp.float32) + b2_ref[...]      # (bb, 128)
    preds = jnp.dot(proj.astype(jnp.bfloat16), w3_ref[...],
                    preferred_element_type=jnp.float32) + b3_ref[...]     # (bb, 128)

    if with_z:
        z_ref[...] = z.astype(z_ref.dtype)        # cols >= 32 are exactly 0
    pred_ref[...] = preds.astype(pred_ref.dtype)  # cols >= 10 are exactly 0


def run_fused(patches, params, *, block_b, with_z):
    b_pad, hw, k = patches.shape
    assert b_pad % block_b == 0
    grid = b_pad // block_b
    c_back = params["w_conv"].shape[1]
    hp = params["b1"].shape[1]

    rep = lambda shape: pl.BlockSpec(shape, lambda i: (0,) * len(shape))
    out_spec = pl.BlockSpec((block_b, hp), lambda i: (i, 0))

    out_shapes = [jax.ShapeDtypeStruct((b_pad, hp), jnp.bfloat16)]   # preds slab
    out_specs = [out_spec]
    if with_z:
        out_shapes = [jax.ShapeDtypeStruct((b_pad, hp), jnp.bfloat16)] + out_shapes
        out_specs = [out_spec] + out_specs

    return pl.pallas_call(
        functools.partial(fused_kernel, with_z),
        out_shape=tuple(out_shapes),
        grid_spec=pltpu.PrefetchScalarGridSpec(
            num_scalar_prefetch=0,
            grid=(grid,),
            in_specs=[
                pl.BlockSpec((block_b, hw, k), lambda i: (i, 0, 0)),  # patches
                rep((k, c_back)), rep((1, c_back)),                   # conv w/b
                rep((c_back, hp)), rep((1, hp)),                      # w1/b1
                rep((hp, hp)), rep((1, hp)),                          # w2/b2
                rep((hp, hp)), rep((1, hp)),                          # w3/b3
            ],
            out_specs=out_specs),
        compiler_params=pltpu.CompilerParams(
            dimension_semantics=("parallel",),
            vmem_limit_bytes=32 * 1024 * 1024),
    )(patches, params["w_conv"], params["b_conv"],
      params["w1"], params["b1"], params["w2"], params["b2"],
      params["w3"], params["b3"])


# ----------------------------------------------------------------------------
# Glue: im2col (plain JAX), param packing, full forward
# ----------------------------------------------------------------------------
def im2col_3x3_same(x):
    # x: (B, C_in, H, W) NCHW, 3x3 kernel, stride 1, pad 1 -> (B, H*W, C_in*9)
    b, c, h, w = x.shape
    xp = jnp.pad(x, ((0, 0), (0, 0), (1, 1), (1, 1)))
    cols = [xp[:, :, di:di + h, dj:dj + w] for di in range(3) for dj in range(3)]
    p = jnp.stack(cols, axis=2)                    # (B, C, 9, H, W)
    p = jnp.transpose(p, (0, 3, 4, 1, 2))          # (B, H, W, C, 9)
    return p.reshape(b, h * w, c * 9)
# TODO(synk): for large images, do the conv inside the kernel (9 shifted
# (M, C_in)@(C_in, 32) accumulations over the raw padded input) to remove the
# 9x im2col HBM blow-up entirely.


@functools.partial(jax.jit, static_argnames=("return_z",))
def classifier_forward(x_nchw, params, return_z=False):
    b = x_nchw.shape[0]
    patches = im2col_3x3_same(x_nchw).astype(jnp.bfloat16)    # (B, HW, 36) bf16
    hw, k = patches.shape[1], patches.shape[2]
    block_b = _choose_block_b(b, hw, k)
    b_pad = _round_up(b, block_b)
    patches = jnp.pad(patches, ((0, b_pad - b), (0, 0), (0, 0)))

    outs = run_fused(patches, params, block_b=block_b, with_z=return_z)
    if return_z:
        z_slab, pred_slab = outs
        preds = pred_slab[:b, :NUM_CLASSES].astype(jnp.float32)
        z = z_slab[:b, :C_BACK].astype(jnp.float32)
        return preds, z
    (pred_slab,) = outs
    return pred_slab[:b, :NUM_CLASSES].astype(jnp.float32)


def init_params(key, c_in=C_IN, c_back=C_BACK, proj_dim=PROJ_DIM,
                num_classes=NUM_CLASSES):
    # Raw PyTorch-convention parameters ([out, in] / OIHW), fp32.
    ks = jax.random.split(key, 8)
    s = 0.05
    return dict(
        w_conv=jax.random.normal(ks[0], (c_back, c_in, 3, 3), jnp.float32) * s,
        b_conv=jax.random.normal(ks[1], (c_back,), jnp.float32) * s,
        w1=jax.random.normal(ks[2], (c_back, c_back), jnp.float32) * s,
        b1=jax.random.normal(ks[3], (c_back,), jnp.float32) * s,
        w2=jax.random.normal(ks[4], (proj_dim, c_back), jnp.float32) * s,
        b2=jax.random.normal(ks[5], (proj_dim,), jnp.float32) * s,
        w3=jax.random.normal(ks[6], (num_classes, proj_dim), jnp.float32) * s,
        b3=jax.random.normal(ks[7], (num_classes,), jnp.float32) * s,
    )


def pack_params(raw):
    # Kernel layout: weights transposed to (in, out); head output dims zero-padded
    # to 128 for lane-dense loads/stores; matmul operands in bf16; conv contraction
    # dim left at 36 (no HBM padding).
    c_back, c_in = raw["w_conv"].shape[0], raw["w_conv"].shape[1]
    k = c_in * 9
    w_conv = raw["w_conv"].reshape(c_back, k).T                        # (36, 32)
    w1 = jnp.pad(raw["w1"].T, ((0, 0), (0, HEAD_PAD - c_back)))        # (32, 128)
    b1 = jnp.pad(raw["b1"], (0, HEAD_PAD - raw["b1"].shape[0]))
    w2 = jnp.pad(raw["w2"].T, ((0, HEAD_PAD - c_back),
                               (0, HEAD_PAD - raw["w2"].shape[0])))    # (128, 128)
    b2 = jnp.pad(raw["b2"], (0, HEAD_PAD - raw["b2"].shape[0]))
    w3 = jnp.pad(raw["w3"].T, ((0, HEAD_PAD - raw["w3"].shape[1]),
                               (0, HEAD_PAD - raw["w3"].shape[0])))    # (128, 128)
    b3 = jnp.pad(raw["b3"], (0, HEAD_PAD - raw["b3"].shape[0]))
    return dict(
        w_conv=w_conv.astype(jnp.bfloat16),
        b_conv=raw["b_conv"].reshape(1, c_back).astype(jnp.float32),
        w1=w1.astype(jnp.bfloat16), b1=b1.reshape(1, HEAD_PAD).astype(jnp.float32),
        w2=w2.astype(jnp.bfloat16), b2=b2.reshape(1, HEAD_PAD).astype(jnp.float32),
        w3=w3.astype(jnp.bfloat16), b3=b3.reshape(1, HEAD_PAD).astype(jnp.float32),
    )


def reference_forward(x_nchw, raw):
    # Plain-JAX fp32 reference matching the PyTorch module semantics.
    y = jax.lax.conv_general_dilated(
        x_nchw, raw["w_conv"], window_strides=(1, 1), padding="SAME",
        dimension_numbers=("NCHW", "OIHW", "NCHW"))
    y = jnp.maximum(y + raw["b_conv"][None, :, None, None], 0.0)
    feats = jnp.mean(y, axis=(2, 3))
    z = jnp.maximum(feats @ raw["w1"].T + raw["b1"], 0.0)
    proj = z @ raw["w2"].T + raw["b2"]
    preds = proj @ raw["w3"].T + raw["b3"]
    return preds, z


if __name__ == "__main__":
    key = jax.random.PRNGKey(0)
    k_x, k_p = jax.random.split(key)
    # Small NCHW input consistent with a CNN classifier: batch=2, 4 channels, 16x16.
    x = jax.random.normal(k_x, (2, 4, 16, 16), jnp.float32)
    raw = init_params(k_p)
    params = pack_params(raw)

    preds = classifier_forward(x, params)                       # (2, 10)
    preds = jax.block_until_ready(preds)
    preds_z, z = classifier_forward(x, params, return_z=True)
    jax.block_until_ready((preds_z, z))

    assert preds.shape == (2, NUM_CLASSES)
    assert z.shape == (2, C_BACK)

    # Numerical check vs fp32 reference (bf16 matmul operands/outputs -> loose tol).
    preds_ref, z_ref = reference_forward(x, raw)
    assert float(jnp.max(jnp.abs(preds - preds_ref))) < 5e-2
    assert float(jnp.max(jnp.abs(preds_z - preds_ref))) < 5e-2
    assert float(jnp.max(jnp.abs(z - z_ref))) < 5e-2

    print("KERNEL_OK")
</pallas_src>

<mosaic_0001>
module attributes {stable_mosaic.version = 11 : i64} {
  func.func @fused_kernel(%arg0: i32, %arg1: memref<8x256x36xbf16, #tpu.memory_space<vmem>>, %arg2: memref<36x32xbf16, #tpu.memory_space<vmem>>, %arg3: memref<1x32xf32, #tpu.memory_space<vmem>>, %arg4: memref<32x128xbf16, #tpu.memory_space<vmem>>, %arg5: memref<1x128xf32, #tpu.memory_space<vmem>>, %arg6: memref<128x128xbf16, #tpu.memory_space<vmem>>, %arg7: memref<1x128xf32, #tpu.memory_space<vmem>>, %arg8: memref<128x128xbf16, #tpu.memory_space<vmem>>, %arg9: memref<1x128xf32, #tpu.memory_space<vmem>>, %arg10: memref<8x128xbf16, #tpu.memory_space<vmem>>) attributes {dimension_semantics = [#tpu.dimension_semantics<parallel>], iteration_bounds = array<i64: 1>, scalar_prefetch = 0 : i64, scratch_operands = 0 : i64, tpu.core_type = #tpu.core_type<tc>, window_params = [{transform_indices = @transform_0, window_bounds = array<i64: 8, 256, 36>}, {pipeline_mode = #tpu.pipeline_mode<synchronous>, transform_indices = @transform_1, window_bounds = array<i64: 36, 32>}, {pipeline_mode = #tpu.pipeline_mode<synchronous>, transform_indices = @transform_2, window_bounds = array<i64: 1, 32>}, {pipeline_mode = #tpu.pipeline_mode<synchronous>, transform_indices = @transform_3, window_bounds = array<i64: 32, 128>}, {pipeline_mode = #tpu.pipeline_mode<synchronous>, transform_indices = @transform_4, window_bounds = array<i64: 1, 128>}, {pipeline_mode = #tpu.pipeline_mode<synchronous>, transform_indices = @transform_5, window_bounds = array<i64: 128, 128>}, {pipeline_mode = #tpu.pipeline_mode<synchronous>, transform_indices = @transform_6, window_bounds = array<i64: 1, 128>}, {pipeline_mode = #tpu.pipeline_mode<synchronous>, transform_indices = @transform_7, window_bounds = array<i64: 128, 128>}, {pipeline_mode = #tpu.pipeline_mode<synchronous>, transform_indices = @transform_8, window_bounds = array<i64: 1, 128>}, {transform_indices = @transform_9, window_bounds = array<i64: 8, 128>}]} {
    %c0 = arith.constant 0 : index
    %c0_0 = arith.constant 0 : index
    %c0_1 = arith.constant 0 : index
    %0 = vector.load %arg1[%c0, %c0_0, %c0_1] : memref<8x256x36xbf16, #tpu.memory_space<vmem>>, vector<8x256x36xbf16>
    %1 = vector.shape_cast %0 : vector<8x256x36xbf16> to vector<2048x36xbf16>
    %c0_2 = arith.constant 0 : index
    %c0_3 = arith.constant 0 : index
    %2 = vector.load %arg2[%c0_2, %c0_3] : memref<36x32xbf16, #tpu.memory_space<vmem>>, vector<36x32xbf16>
    %cst = arith.constant dense<0.000000e+00> : vector<2048x32xf32>
    %3 = tpu.matmul %1, %2, %cst {dimension_numbers = #tpu.dot_dimension_numbers<[1], [0], [0], [1], [0, 0, 1, 1], [], []>} : vector<2048x36xbf16>, vector<36x32xbf16>, vector<2048x32xf32> -> vector<2048x32xf32>
    %c0_4 = arith.constant 0 : index
    %c0_5 = arith.constant 0 : index
    %4 = vector.load %arg3[%c0_4, %c0_5] : memref<1x32xf32, #tpu.memory_space<vmem>>, vector<1x32xf32>
    %5 = vector.broadcast %4 : vector<1x32xf32> to vector<2048x32xf32>
    %6 = arith.addf %3, %5 : vector<2048x32xf32>
    %cst_6 = arith.constant 0.000000e+00 : f32
    %7 = vector.broadcast %cst_6 : f32 to vector<2048x32xf32>
    %8 = arith.maximumf %6, %7 : vector<2048x32xf32>
    %9 = vector.shape_cast %8 : vector<2048x32xf32> to vector<8x256x32xf32>
    %cst_7 = arith.constant dense<0.000000e+00> : vector<8x32xf32>
    %10 = vector.multi_reduction <add>, %9, %cst_7 [1] : vector<8x256x32xf32> to vector<8x32xf32>
    %cst_8 = arith.constant 2.560000e+02 : f32
    %11 = vector.broadcast %cst_8 : f32 to vector<8x32xf32>
    %12 = arith.divf %10, %11 : vector<8x32xf32>
    %13 = arith.truncf %12 : vector<8x32xf32> to vector<8x32xbf16>
    %c0_9 = arith.constant 0 : index
    %c0_10 = arith.constant 0 : index
    %14 = vector.load %arg4[%c0_9, %c0_10] : memref<32x128xbf16, #tpu.memory_space<vmem>>, vector<32x128xbf16>
    %cst_11 = arith.constant dense<0.000000e+00> : vector<8x128xf32>
    %15 = tpu.matmul %13, %14, %cst_11 {dimension_numbers = #tpu.dot_dimension_numbers<[1], [0], [0], [1], [0, 0, 1, 1], [], []>} : vector<8x32xbf16>, vector<32x128xbf16>, vector<8x128xf32> -> vector<8x128xf32>
    %c0_12 = arith.constant 0 : index
    %c0_13 = arith.constant 0 : index
    %16 = vector.load %arg5[%c0_12, %c0_13] : memref<1x128xf32, #tpu.memory_space<vmem>>, vector<1x128xf32>
    %17 = vector.broadcast %16 : vector<1x128xf32> to vector<8x128xf32>
    %18 = arith.addf %15, %17 : vector<8x128xf32>
    %cst_14 = arith.constant 0.000000e+00 : f32
    %19 = vector.broadcast %cst_14 : f32 to vector<8x128xf32>
    %20 = arith.maximumf %18, %19 : vector<8x128xf32>
    %21 = arith.truncf %20 : vector<8x128xf32> to vector<8x128xbf16>
    %c0_15 = arith.constant 0 : index
    %c0_16 = arith.constant 0 : index
    %22 = vector.load %arg6[%c0_15, %c0_16] : memref<128x128xbf16, #tpu.memory_space<vmem>>, vector<128x128xbf16>
    %cst_17 = arith.constant dense<0.000000e+00> : vector<8x128xf32>
    %23 = tpu.matmul %21, %22, %cst_17 {dimension_numbers = #tpu.dot_dimension_numbers<[1], [0], [0], [1], [0, 0, 1, 1], [], []>} : vector<8x128xbf16>, vector<128x128xbf16>, vector<8x128xf32> -> vector<8x128xf32>
    %c0_18 = arith.constant 0 : index
    %c0_19 = arith.constant 0 : index
    %24 = vector.load %arg7[%c0_18, %c0_19] : memref<1x128xf32, #tpu.memory_space<vmem>>, vector<1x128xf32>
    %25 = vector.broadcast %24 : vector<1x128xf32> to vector<8x128xf32>
    %26 = arith.addf %23, %25 : vector<8x128xf32>
    %27 = arith.truncf %26 : vector<8x128xf32> to vector<8x128xbf16>
    %c0_20 = arith.constant 0 : index
    %c0_21 = arith.constant 0 : index
    %28 = vector.load %arg8[%c0_20, %c0_21] : memref<128x128xbf16, #tpu.memory_space<vmem>>, vector<128x128xbf16>
    %cst_22 = arith.constant dense<0.000000e+00> : vector<8x128xf32>
    %29 = tpu.matmul %27, %28, %cst_22 {dimension_numbers = #tpu.dot_dimension_numbers<[1], [0], [0], [1], [0, 0, 1, 1], [], []>} : vector<8x128xbf16>, vector<128x128xbf16>, vector<8x128xf32> -> vector<8x128xf32>
    %c0_23 = arith.constant 0 : index
    %c0_24 = arith.constant 0 : index
    %30 = vector.load %arg9[%c0_23, %c0_24] : memref<1x128xf32, #tpu.memory_space<vmem>>, vector<1x128xf32>
    %31 = vector.broadcast %30 : vector<1x128xf32> to vector<8x128xf32>
    %32 = arith.addf %29, %31 : vector<8x128xf32>
    %33 = arith.truncf %32 : vector<8x128xf32> to vector<8x128xbf16>
    %c0_25 = arith.constant 0 : index
    %c0_26 = arith.constant 0 : index
    %34 = vector.load %arg10[%c0_25, %c0_26] : memref<8x128xbf16, #tpu.memory_space<vmem>>, vector<8x128xbf16>
    tpu.vector_store %arg10[%c0_25, %c0_26], %33 {strides = array<i32>} : memref<8x128xbf16, #tpu.memory_space<vmem>>, vector<8x128xbf16>,
    return
  }
  func.func @transform_0(%arg0: i32) -> (i32, i32, i32) {
    %c0_i32 = arith.constant 0 : i32
    %c0_i32_0 = arith.constant 0 : i32
    %c0_i32_1 = arith.constant 0 : i32
    return %arg0, %c0_i32, %c0_i32_0 : i32, i32, i32
  }
  func.func @transform_1(%arg0: i32) -> (i32, i32) {
    %c0_i32 = arith.constant 0 : i32
    %c0_i32_0 = arith.constant 0 : i32
    %c0_i32_1 = arith.constant 0 : i32
    return %c0_i32, %c0_i32_0 : i32, i32
  }
  func.func @transform_2(%arg0: i32) -> (i32, i32) {
    %c0_i32 = arith.constant 0 : i32
    %c0_i32_0 = arith.constant 0 : i32
    %c0_i32_1 = arith.constant 0 : i32
    return %c0_i32, %c0_i32_0 : i32, i32
  }
  func.func @transform_3(%arg0: i32) -> (i32, i32) {
    %c0_i32 = arith.constant 0 : i32
    %c0_i32_0 = arith.constant 0 : i32
    %c0_i32_1 = arith.constant 0 : i32
    return %c0_i32, %c0_i32_0 : i32, i32
  }
  func.func @transform_4(%arg0: i32) -> (i32, i32) {
    %c0_i32 = arith.constant 0 : i32
    %c0_i32_0 = arith.constant 0 : i32
    %c0_i32_1 = arith.constant 0 : i32
    return %c0_i32, %c0_i32_0 : i32, i32
  }
  func.func @transform_5(%arg0: i32) -> (i32, i32) {
    %c0_i32 = arith.constant 0 : i32
    %c0_i32_0 = arith.constant 0 : i32
    %c0_i32_1 = arith.constant 0 : i32
    return %c0_i32, %c0_i32_0 : i32, i32
  }
  func.func @transform_6(%arg0: i32) -> (i32, i32) {
    %c0_i32 = arith.constant 0 : i32
    %c0_i32_0 = arith.constant 0 : i32
    %c0_i32_1 = arith.constant 0 : i32
    return %c0_i32, %c0_i32_0 : i32, i32
  }
  func.func @transform_7(%arg0: i32) -> (i32, i32) {
    %c0_i32 = arith.constant 0 : i32
    %c0_i32_0 = arith.constant 0 : i32
    %c0_i32_1 = arith.constant 0 : i32
    return %c0_i32, %c0_i32_0 : i32, i32
  }
  func.func @transform_8(%arg0: i32) -> (i32, i32) {
    %c0_i32 = arith.constant 0 : i32
    %c0_i32_0 = arith.constant 0 : i32
    %c0_i32_1 = arith.constant 0 : i32
    return %c0_i32, %c0_i32_0 : i32, i32
  }
  func.func @transform_9(%arg0: i32) -> (i32, i32) {
    %c0_i32 = arith.constant 0 : i32
    %c0_i32_0 = arith.constant 0 : i32
    return %arg0, %c0_i32 : i32, i32
  }
}

</mosaic_0001>

<llo_original>
// kernel: classifier_forward.1
$region0: #{classifier_forward.1}
  #allocation0 [shape = 'u32[]', space=smem, size = 0x4, offset = 0x4, fixed_abs, tag = 'smem constant byte address 0x4 - core index']
  #allocation1 [shape = 'u32[144,128]{1,0:T(1,128)}', space=vmem, size = 0x12000, scoped, tag = 'internal scratch']
  %s0 = inlined_call_operand.vmem [shape: bf16[8,256,36], index: 0, kind: input, shape index: {}]
  %s1 = inlined_call_operand.vmem [shape: bf16[36,32], index: 1, kind: input, shape index: {}]
  %s2 = inlined_call_operand.vmem [shape: f32[1,32], index: 2, kind: input, shape index: {}]
  %s3 = inlined_call_operand.vmem [shape: bf16[32,128], index: 3, kind: input, shape index: {}]
  %s4 = inlined_call_operand.vmem [shape: f32[1,128], index: 4, kind: input, shape index: {}]
  %s5 = inlined_call_operand.vmem [shape: bf16[128,128], index: 5, kind: input, shape index: {}]
  %s6 = inlined_call_operand.vmem [shape: f32[1,128], index: 6, kind: input, shape index: {}]
  %s7 = inlined_call_operand.vmem [shape: bf16[128,128], index: 7, kind: input, shape index: {}]
  %s8 = inlined_call_operand.vmem [shape: f32[1,128], index: 8, kind: input, shape index: {}]
  %s9 = inlined_call_operand.vmem [shape: bf16[8,128], index: 9, kind: output, shape index: {}]
  %s10 = sld [smem:[#allocation0]]
  $region46: #{classifier_forward.1} parent=0
    _
  %s12 = ssub.s32 1, %s10
  %s13 = scalar_select 0, %s12, %s10
  // Predicated region
  $region2: #{classifier_forward.1} parent=0 // pred_check
    _
  $region3: #{classifier_forward.1} parent=0 // pred_check_branch
    %15 = sbr.rel (0) target = $region5
  $region4: #{classifier_forward.1} parent=0 // pred_region
    _
  $region5: #{classifier_forward.1} parent=0 // pred_fallthru
    _
  // Predicated region
  $region6: #{classifier_forward.1} parent=0 // pred_check
    _
  $region7: #{classifier_forward.1} parent=0 // pred_check_branch
    %17 = sbr.rel (0) target = $region9
  $region8: #{classifier_forward.1} parent=0 // pred_region
    _
  $region9: #{classifier_forward.1} parent=0 // pred_fallthru
    _
  // Predicated region
  $region10: #{classifier_forward.1} parent=0 // pred_check
    _
  $region11: #{classifier_forward.1} parent=0 // pred_check_branch
    %19 = sbr.rel (0) target = $region13
  $region12: #{classifier_forward.1} parent=0 // pred_region
    _
  $region13: #{classifier_forward.1} parent=0 // pred_fallthru
    _
  // Predicated region
  $region14: #{classifier_forward.1} parent=0 // pred_check
    _
  $region15: #{classifier_forward.1} parent=0 // pred_check_branch
    %21 = sbr.rel (0) target = $region17
  $region16: #{classifier_forward.1} parent=0 // pred_region
    _
  $region17: #{classifier_forward.1} parent=0 // pred_fallthru
    _
  // Predicated region
  $region18: #{classifier_forward.1} parent=0 // pred_check
    _
  $region19: #{classifier_forward.1} parent=0 // pred_check_branch
    %23 = sbr.rel (0) target = $region21
  $region20: #{classifier_forward.1} parent=0 // pred_region
    _
  $region21: #{classifier_forward.1} parent=0 // pred_fallthru
    _
  // Predicated region
  $region22: #{classifier_forward.1} parent=0 // pred_check
    _
  $region23: #{classifier_forward.1} parent=0 // pred_check_branch
    %25 = sbr.rel (0) target = $region25
  $region24: #{classifier_forward.1} parent=0 // pred_region
    _
  $region25: #{classifier_forward.1} parent=0 // pred_fallthru
    _
  // Predicated region
  $region26: #{classifier_forward.1} parent=0 // pred_check
    _
  $region27: #{classifier_forward.1} parent=0 // pred_check_branch
    %27 = sbr.rel (0) target = $region29
  $region28: #{classifier_forward.1} parent=0 // pred_region
    _
  $region29: #{classifier_forward.1} parent=0 // pred_fallthru
    _
  // Predicated region
  $region30: #{classifier_forward.1} parent=0 // pred_check
    _
  $region31: #{classifier_forward.1} parent=0 // pred_check_branch
    %29 = sbr.rel (0) target = $region33
  $region32: #{classifier_forward.1} parent=0 // pred_region
    _
  $region33: #{classifier_forward.1} parent=0 // pred_fallthru
    _
  // Predicated region
  $region34: #{classifier_forward.1} parent=0 // pred_check
    _
  $region35: #{classifier_forward.1} parent=0 // pred_check_branch
    %31 = sbr.rel (0) target = $region37
  $region36: #{classifier_forward.1} parent=0 // pred_region
    _
  $region37: #{classifier_forward.1} parent=0 // pred_fallthru
    _
  %v33 = vld [vmem:[%s0] sm:$0xf]
  %v34 = vld [vmem:[%s0 + $0x4] sm:$0xf]
  %v35 = vld [vmem:[%s0 + $0x8] sm:$0xf]
  %v36 = vld [vmem:[%s0 + $0xc] sm:$0xf]
  %v37 = vld [vmem:[%s0 + $0x10] sm:$0xf]
  %v38 = vld [vmem:[%s0 + $0x14] sm:$0xf]
  %v39 = vld [vmem:[%s0 + $0x18] sm:$0xf]
  %v40 = vld [vmem:[%s0 + $0x1c] sm:$0xf]
  %v41 = vld [vmem:[%s0 + $0x20] sm:$0xf]
  %v42 = vld [vmem:[%s0 + $0x24] sm:$0xf]
  %v43 = vld [vmem:[%s0 + $0x28] sm:$0xf]
  %v44 = vld [vmem:[%s0 + $0x2c] sm:$0xf]
  %v45 = vld [vmem:[%s0 + $0x30] sm:$0xf]
  %v46 = vld [vmem:[%s0 + $0x34] sm:$0xf]
  %v47 = vld [vmem:[%s0 + $0x38] sm:$0xf]
  %v48 = vld [vmem:[%s0 + $0x3c] sm:$0xf]
  %v49 = vld [vmem:[%s0 + $0x40] sm:$0xf]
  %v50 = vld [vmem:[%s0 + $0x44] sm:$0xf]
  %v51 = vld [vmem:[%s0 + $0x48] sm:$0xf]
  %v52 = vld [vmem:[%s0 + $0x4c] sm:$0xf]
  %v53 = vld [vmem:[%s0 + $0x50] sm:$0xf]
  %v54 = vld [vmem:[%s0 + $0x54] sm:$0xf]
  %v55 = vld [vmem:[%s0 + $0x58] sm:$0xf]
  %v56 = vld [vmem:[%s0 + $0x5c] sm:$0xf]
  %v57 = vld [vmem:[%s0 + $0x60] sm:$0xf]
  %v58 = vld [vmem:[%s0 + $0x64] sm:$0xf]
  %v59 = vld [vmem:[%s0 + $0x68] sm:$0xf]
  %v60 = vld [vmem:[%s0 + $0x6c] sm:$0xf]
  %v61 = vld [vmem:[%s0 + $0x70] sm:$0xf]
  %v62 = vld [vmem:[%s0 + $0x74] sm:$0xf]
  %v63 = vld [vmem:[%s0 + $0x78] sm:$0xf]
  %v64 = vld [vmem:[%s0 + $0x7c] sm:$0xf]
  %v65 = vld [vmem:[%s0 + $0x80] sm:$0xf]
  %v66 = vld [vmem:[%s0 + $0x84] sm:$0xf]
  %v67 = vld [vmem:[%s0 + $0x88] sm:$0xf]
  %v68 = vld [vmem:[%s0 + $0x8c] sm:$0xf]
  %v69 = vld [vmem:[%s0 + $0x90] sm:$0xf]
  %v70 = vld [vmem:[%s0 + $0x94] sm:$0xf]
  %v71 = vld [vmem:[%s0 + $0x98] sm:$0xf]
  %v72 = vld [vmem:[%s0 + $0x9c] sm:$0xf]
  %v73 = vld [vmem:[%s0 + $0xa0] sm:$0xf]
  %v74 = vld [vmem:[%s0 + $0xa4] sm:$0xf]
  %v75 = vld [vmem:[%s0 + $0xa8] sm:$0xf]
  %v76 = vld [vmem:[%s0 + $0xac] sm:$0xf]
  %v77 = vld [vmem:[%s0 + $0xb0] sm:$0xf]
  %v78 = vld [vmem:[%s0 + $0xb4] sm:$0xf]
  %v79 = vld [vmem:[%s0 + $0xb8] sm:$0xf]
  %v80 = vld [vmem:[%s0 + $0xbc] sm:$0xf]
  %v81 = vld [vmem:[%s0 + $0xc0] sm:$0xf]
  %v82 = vld [vmem:[%s0 + $0xc4] sm:$0xf]
  %v83 = vld [vmem:[%s0 + $0xc8] sm:$0xf]
  %v84 = vld [vmem:[%s0 + $0xcc] sm:$0xf]
  %v85 = vld [vmem:[%s0 + $0xd0] sm:$0xf]
  %v86 = vld [vmem:[%s0 + $0xd4] sm:$0xf]
  %v87 = vld [vmem:[%s0 + $0xd8] sm:$0xf]
  %v88 = vld [vmem:[%s0 + $0xdc] sm:$0xf]
  %v89 = vld [vmem:[%s0 + $0xe0] sm:$0xf]
  %v90 = vld [vmem:[%s0 + $0xe4] sm:$0xf]
  %v91 = vld [vmem:[%s0 + $0xe8] sm:$0xf]
  %v92 = vld [vmem:[%s0 + $0xec] sm:$0xf]
  %v93 = vld [vmem:[%s0 + $0xf0] sm:$0xf]
  %v94 = vld [vmem:[%s0 + $0xf4] sm:$0xf]
  %v95 = vld [vmem:[%s0 + $0xf8] sm:$0xf]
  %v96 = vld [vmem:[%s0 + $0xfc] sm:$0xf]
  %v97 = vld [vmem:[%s0 + $0x100] sm:$0xf]
  %v98 = vld [vmem:[%s0 + $0x104] sm:$0xf]
  %v99 = vld [vmem:[%s0 + $0x108] sm:$0xf]
  %v100 = vld [vmem:[%s0 + $0x10c] sm:$0xf]
  %v101 = vld [vmem:[%s0 + $0x110] sm:$0xf]
  %v102 = vld [vmem:[%s0 + $0x114] sm:$0xf]
  %v103 = vld [vmem:[%s0 + $0x118] sm:$0xf]
  %v104 = vld [vmem:[%s0 + $0x11c] sm:$0xf]
  %v105 = vld [vmem:[%s0 + $0x120] sm:$0xf]
  %v106 = vld [vmem:[%s0 + $0x124] sm:$0xf]
  %v107 = vld [vmem:[%s0 + $0x128] sm:$0xf]
  %v108 = vld [vmem:[%s0 + $0x12c] sm:$0xf]
  %v109 = vld [vmem:[%s0 + $0x130] sm:$0xf]
  %v110 = vld [vmem:[%s0 + $0x134] sm:$0xf]
  %v111 = vld [vmem:[%s0 + $0x138] sm:$0xf]
  %v112 = vld [vmem:[%s0 + $0x13c] sm:$0xf]
  %v113 = vld [vmem:[%s0 + $0x140] sm:$0xf]
  %v114 = vld [vmem:[%s0 + $0x144] sm:$0xf]
  %v115 = vld [vmem:[%s0 + $0x148] sm:$0xf]
  %v116 = vld [vmem:[%s0 + $0x14c] sm:$0xf]
  %v117 = vld [vmem:[%s0 + $0x150] sm:$0xf]
  %v118 = vld [vmem:[%s0 + $0x154] sm:$0xf]
  %v119 = vld [vmem:[%s0 + $0x158] sm:$0xf]
  %v120 = vld [vmem:[%s0 + $0x15c] sm:$0xf]
  %v121 = vld [vmem:[%s0 + $0x160] sm:$0xf]
  %v122 = vld [vmem:[%s0 + $0x164] sm:$0xf]
  %v123 = vld [vmem:[%s0 + $0x168] sm:$0xf]
  %v124 = vld [vmem:[%s0 + $0x16c] sm:$0xf]
  %v125 = vld [vmem:[%s0 + $0x170] sm:$0xf]
  %v126 = vld [vmem:[%s0 + $0x174] sm:$0xf]
  %v127 = vld [vmem:[%s0 + $0x178] sm:$0xf]
  %v128 = vld [vmem:[%s0 + $0x17c] sm:$0xf]
  %v129 = vld [vmem:[%s0 + $0x180] sm:$0xf]
  %v130 = vld [vmem:[%s0 + $0x184] sm:$0xf]
  %v131 = vld [vmem:[%s0 + $0x188] sm:$0xf]
  %v132 = vld [vmem:[%s0 + $0x18c] sm:$0xf]
  %v133 = vld [vmem:[%s0 + $0x190] sm:$0xf]
  %v134 = vld [vmem:[%s0 + $0x194] sm:$0xf]
  %v135 = vld [vmem:[%s0 + $0x198] sm:$0xf]
  %v136 = vld [vmem:[%s0 + $0x19c] sm:$0xf]
  %v137 = vld [vmem:[%s0 + $0x1a0] sm:$0xf]
  %v138 = vld [vmem:[%s0 + $0x1a4] sm:$0xf]
  %v139 = vld [vmem:[%s0 + $0x1a8] sm:$0xf]
  %v140 = vld [vmem:[%s0 + $0x1ac] sm:$0xf]
  %v141 = vld [vmem:[%s0 + $0x1b0] sm:$0xf]
  %v142 = vld [vmem:[%s0 + $0x1b4] sm:$0xf]
  %v143 = vld [vmem:[%s0 + $0x1b8] sm:$0xf]
  %v144 = vld [vmem:[%s0 + $0x1bc] sm:$0xf]
  %v145 = vld [vmem:[%s0 + $0x1c0] sm:$0xf]
  %v146 = vld [vmem:[%s0 + $0x1c4] sm:$0xf]
  %v147 = vld [vmem:[%s0 + $0x1c8] sm:$0xf]
  %v148 = vld [vmem:[%s0 + $0x1cc] sm:$0xf]
  %v149 = vld [vmem:[%s0 + $0x1d0] sm:$0xf]
  %v150 = vld [vmem:[%s0 + $0x1d4] sm:$0xf]
  %v151 = vld [vmem:[%s0 + $0x1d8] sm:$0xf]
  %v152 = vld [vmem:[%s0 + $0x1dc] sm:$0xf]
  %v153 = vld [vmem:[%s0 + $0x1e0] sm:$0xf]
  %v154 = vld [vmem:[%s0 + $0x1e4] sm:$0xf]
  %v155 = vld [vmem:[%s0 + $0x1e8] sm:$0xf]
  %v156 = vld [vmem:[%s0 + $0x1ec] sm:$0xf]
  %v157 = vld [vmem:[%s0 + $0x1f0] sm:$0xf]
  %v158 = vld [vmem:[%s0 + $0x1f4] sm:$0xf]
  %v159 = vld [vmem:[%s0 + $0x1f8] sm:$0xf]
  %v160 = vld [vmem:[%s0 + $0x1fc] sm:$0xf]
  %v161 = vld [vmem:[%s0 + $0x200] sm:$0xf]
  %v162 = vld [vmem:[%s0 + $0x204] sm:$0xf]
  %v163 = vld [vmem:[%s0 + $0x208] sm:$0xf]
  %v164 = vld [vmem:[%s0 + $0x20c] sm:$0xf]
  %v165 = vld [vmem:[%s0 + $0x210] sm:$0xf]
  %v166 = vld [vmem:[%s0 + $0x214] sm:$0xf]
  %v167 = vld [vmem:[%s0 + $0x218] sm:$0xf]
  %v168 = vld [vmem:[%s0 + $0x21c] sm:$0xf]
  %v169 = vld [vmem:[%s0 + $0x220] sm:$0xf]
  %v170 = vld [vmem:[%s0 + $0x224] sm:$0xf]
  %v171 = vld [vmem:[%s0 + $0x228] sm:$0xf]
  %v172 = vld [vmem:[%s0 + $0x22c] sm:$0xf]
  %v173 = vld [vmem:[%s0 + $0x230] sm:$0xf]
  %v174 = vld [vmem:[%s0 + $0x234] sm:$0xf]
  %v175 = vld [vmem:[%s0 + $0x238] sm:$0xf]
  %v176 = vld [vmem:[%s0 + $0x23c] sm:$0xf]
  %v177 = vld [vmem:[%s0 + $0x240] sm:$0xf]
  %v178 = vld [vmem:[%s0 + $0x244] sm:$0xf]
  %v179 = vld [vmem:[%s0 + $0x248] sm:$0xf]
  %v180 = vld [vmem:[%s0 + $0x24c] sm:$0xf]
  %v181 = vld [vmem:[%s0 + $0x250] sm:$0xf]
  %v182 = vld [vmem:[%s0 + $0x254] sm:$0xf]
  %v183 = vld [vmem:[%s0 + $0x258] sm:$0xf]
  %v184 = vld [vmem:[%s0 + $0x25c] sm:$0xf]
  %v185 = vld [vmem:[%s0 + $0x260] sm:$0xf]
  %v186 = vld [vmem:[%s0 + $0x264] sm:$0xf]
  %v187 = vld [vmem:[%s0 + $0x268] sm:$0xf]
  %v188 = vld [vmem:[%s0 + $0x26c] sm:$0xf]
  %v189 = vld [vmem:[%s0 + $0x270] sm:$0xf]
  %v190 = vld [vmem:[%s0 + $0x274] sm:$0xf]
  %v191 = vld [vmem:[%s0 + $0x278] sm:$0xf]
  %v192 = vld [vmem:[%s0 + $0x27c] sm:$0xf]
  %v193 = vld [vmem:[%s0 + $0x280] sm:$0xf]
  %v194 = vld [vmem:[%s0 + $0x284] sm:$0xf]
  %v195 = vld [vmem:[%s0 + $0x288] sm:$0xf]
  %v196 = vld [vmem:[%s0 + $0x28c] sm:$0xf]
  %v197 = vld [vmem:[%s0 + $0x290] sm:$0xf]
  %v198 = vld [vmem:[%s0 + $0x294] sm:$0xf]
  %v199 = vld [vmem:[%s0 + $0x298] sm:$0xf]
  %v200 = vld [vmem:[%s0 + $0x29c] sm:$0xf]
  %v201 = vld [vmem:[%s0 + $0x2a0] sm:$0xf]
  %v202 = vld [vmem:[%s0 + $0x2a4] sm:$0xf]
  %v203 = vld [vmem:[%s0 + $0x2a8] sm:$0xf]
  %v204 = vld [vmem:[%s0 + $0x2ac] sm:$0xf]
  %v205 = vld [vmem:[%s0 + $0x2b0] sm:$0xf]
  %v206 = vld [vmem:[%s0 + $0x2b4] sm:$0xf]
  %v207 = vld [vmem:[%s0 + $0x2b8] sm:$0xf]
  %v208 = vld [vmem:[%s0 + $0x2bc] sm:$0xf]
  %v209 = vld [vmem:[%s0 + $0x2c0] sm:$0xf]
  %v210 = vld [vmem:[%s0 + $0x2c4] sm:$0xf]
  %v211 = vld [vmem:[%s0 + $0x2c8] sm:$0xf]
  %v212 = vld [vmem:[%s0 + $0x2cc] sm:$0xf]
  %v213 = vld [vmem:[%s0 + $0x2d0] sm:$0xf]
  %v214 = vld [vmem:[%s0 + $0x2d4] sm:$0xf]
  %v215 = vld [vmem:[%s0 + $0x2d8] sm:$0xf]
  %v216 = vld [vmem:[%s0 + $0x2dc] sm:$0xf]
  %v217 = vld [vmem:[%s0 + $0x2e0] sm:$0xf]
  %v218 = vld [vmem:[%s0 + $0x2e4] sm:$0xf]
  %v219 = vld [vmem:[%s0 + $0x2e8] sm:$0xf]
  %v220 = vld [vmem:[%s0 + $0x2ec] sm:$0xf]
  %v221 = vld [vmem:[%s0 + $0x2f0] sm:$0xf]
  %v222 = vld [vmem:[%s0 + $0x2f4] sm:$0xf]
  %v223 = vld [vmem:[%s0 + $0x2f8] sm:$0xf]
  %v224 = vld [vmem:[%s0 + $0x2fc] sm:$0xf]
  %v225 = vld [vmem:[%s0 + $0x300] sm:$0xf]
  %v226 = vld [vmem:[%s0 + $0x304] sm:$0xf]
  %v227 = vld [vmem:[%s0 + $0x308] sm:$0xf]
  %v228 = vld [vmem:[%s0 + $0x30c] sm:$0xf]
  %v229 = vld [vmem:[%s0 + $0x310] sm:$0xf]
  %v230 = vld [vmem:[%s0 + $0x314] sm:$0xf]
  %v231 = vld [vmem:[%s0 + $0x318] sm:$0xf]
  %v232 = vld [vmem:[%s0 + $0x31c] sm:$0xf]
  %v233 = vld [vmem:[%s0 + $0x320] sm:$0xf]
  %v234 = vld [vmem:[%s0 + $0x324] sm:$0xf]
  %v235 = vld [vmem:[%s0 + $0x328] sm:$0xf]
  %v236 = vld [vmem:[%s0 + $0x32c] sm:$0xf]
  %v237 = vld [vmem:[%s0 + $0x330] sm:$0xf]
  %v238 = vld [vmem:[%s0 + $0x334] sm:$0xf]
  %v239 = vld [vmem:[%s0 + $0x338] sm:$0xf]
  %v240 = vld [vmem:[%s0 + $0x33c] sm:$0xf]
  %v241 = vld [vmem:[%s0 + $0x340] sm:$0xf]
  %v242 = vld [vmem:[%s0 + $0x344] sm:$0xf]
  %v243 = vld [vmem:[%s0 + $0x348] sm:$0xf]
  %v244 = vld [vmem:[%s0 + $0x34c] sm:$0xf]
  %v245 = vld [vmem:[%s0 + $0x350] sm:$0xf]
  %v246 = vld [vmem:[%s0 + $0x354] sm:$0xf]
  %v247 = vld [vmem:[%s0 + $0x358] sm:$0xf]
  %v248 = vld [vmem:[%s0 + $0x35c] sm:$0xf]
  %v249 = vld [vmem:[%s0 + $0x360] sm:$0xf]
  %v250 = vld [vmem:[%s0 + $0x364] sm:$0xf]
  %v251 = vld [vmem:[%s0 + $0x368] sm:$0xf]
  %v252 = vld [vmem:[%s0 + $0x36c] sm:$0xf]
  %v253 = vld [vmem:[%s0 + $0x370] sm:$0xf]
  %v254 = vld [vmem:[%s0 + $0x374] sm:$0xf]
  %v255 = vld [vmem:[%s0 + $0x378] sm:$0xf]
  %v256 = vld [vmem:[%s0 + $0x37c] sm:$0xf]
  %v257 = vld [vmem:[%s0 + $0x380] sm:$0xf]
  %v258 = vld [vmem:[%s0 + $0x384] sm:$0xf]
  %v259 = vld [vmem:[%s0 + $0x388] sm:$0xf]
  %v260 = vld [vmem:[%s0 + $0x38c] sm:$0xf]
  %v261 = vld [vmem:[%s0 + $0x390] sm:$0xf]
  %v262 = vld [vmem:[%s0 + $0x394] sm:$0xf]
  %v263 = vld [vmem:[%s0 + $0x398] sm:$0xf]
  %v264 = vld [vmem:[%s0 + $0x39c] sm:$0xf]
  %v265 = vld [vmem:[%s0 + $0x3a0] sm:$0xf]
  %v266 = vld [vmem:[%s0 + $0x3a4] sm:$0xf]
  %v267 = vld [vmem:[%s0 + $0x3a8] sm:$0xf]
  %v268 = vld [vmem:[%s0 + $0x3ac] sm:$0xf]
  %v269 = vld [vmem:[%s0 + $0x3b0] sm:$0xf]
  %v270 = vld [vmem:[%s0 + $0x3b4] sm:$0xf]
  %v271 = vld [vmem:[%s0 + $0x3b8] sm:$0xf]
  %v272 = vld [vmem:[%s0 + $0x3bc] sm:$0xf]
  %v273 = vld [vmem:[%s0 + $0x3c0] sm:$0xf]
  %v274 = vld [vmem:[%s0 + $0x3c4] sm:$0xf]
  %v275 = vld [vmem:[%s0 + $0x3c8] sm:$0xf]
  %v276 = vld [vmem:[%s0 + $0x3cc] sm:$0xf]
  %v277 = vld [vmem:[%s0 + $0x3d0] sm:$0xf]
  %v278 = vld [vmem:[%s0 + $0x3d4] sm:$0xf]
  %v279 = vld [vmem:[%s0 + $0x3d8] sm:$0xf]
  %v280 = vld [vmem:[%s0 + $0x3dc] sm:$0xf]
  %v281 = vld [vmem:[%s0 + $0x3e0] sm:$0xf]
  %v282 = vld [vmem:[%s0 + $0x3e4] sm:$0xf]
  %v283 = vld [vmem:[%s0 + $0x3e8] sm:$0xf]
  %v284 = vld [vmem:[%s0 + $0x3ec] sm:$0xf]
  %v285 = vld [vmem:[%s0 + $0x3f0] sm:$0xf]
  %v286 = vld [vmem:[%s0 + $0x3f4] sm:$0xf]
  %v287 = vld [vmem:[%s0 + $0x3f8] sm:$0xf]
  %v288 = vld [vmem:[%s0 + $0x3fc] sm:$0xf]
  %v289 = vld [vmem:[%s1] sm:$0xf]
  %v290 = vld [vmem:[%s1 + $0x4] sm:$0xf]
  %v291 = vld [vmem:[%s1 + $0x8] sm:$0xf]
  %v292 = vld [vmem:[%s1 + $0xc] sm:$0xf]
  %v293 = vld [vmem:[%s1 + $0x10] sm:$0x3]
  %v294 = vld [vmem:[%s2] sm:$0x1]
  %v296 = vlaneseq
  %v297 = vshrl.u32 %v296, 7
  %v298 = vsub.s32 0, %v297
  %v299 = vrot.slane %v294, %v298
  %v557 = vunpack.c.l.b16 %v33
  %v558 = vunpack.c.l.b16 %v34
  %v559 = vunpack.c.l.b16 %v35
  %v560 = vunpack.c.l.b16 %v36
  %v561 = vunpack.c.l.b16 %v37
  %v562 = vunpack.c.l.b16 %v38
  %v563 = vunpack.c.l.b16 %v39
  %v564 = vunpack.c.l.b16 %v40
  %v565 = vunpack.c.l.b16 %v41
  %v566 = vunpack.c.l.b16 %v42
  %v567 = vunpack.c.l.b16 %v43
  %v568 = vunpack.c.l.b16 %v44
  %v569 = vunpack.c.l.b16 %v45
  %v570 = vunpack.c.l.b16 %v46
  %v571 = vunpack.c.l.b16 %v47
  %v572 = vunpack.c.l.b16 %v48
  %v573 = vunpack.c.l.b16 %v49
  %v574 = vunpack.c.l.b16 %v50
  %v575 = vunpack.c.l.b16 %v51
  %v576 = vunpack.c.l.b16 %v52
  %v577 = vunpack.c.l.b16 %v53
  %v578 = vunpack.c.l.b16 %v54
  %v579 = vunpack.c.l.b16 %v55
  %v580 = vunpack.c.l.b16 %v56
  %v581 = vunpack.c.l.b16 %v57
  %v582 = vunpack.c.l.b16 %v58
  %v583 = vunpack.c.l.b16 %v59
  %v584 = vunpack.c.l.b16 %v60
  %v585 = vunpack.c.l.b16 %v61
  %v586 = vunpack.c.l.b16 %v62
  %v587 = vunpack.c.l.b16 %v63
  %v588 = vunpack.c.l.b16 %v64
  %v589 = vunpack.c.l.b16 %v65
  %v590 = vunpack.c.l.b16 %v66
  %v591 = vunpack.c.l.b16 %v67
  %v592 = vunpack.c.l.b16 %v68
  %v593 = vunpack.c.l.b16 %v69
  %v594 = vunpack.c.l.b16 %v70
  %v595 = vunpack.c.l.b16 %v71
  %v596 = vunpack.c.l.b16 %v72
  %v597 = vunpack.c.l.b16 %v73
  %v598 = vunpack.c.l.b16 %v74
  %v599 = vunpack.c.l.b16 %v75
  %v600 = vunpack.c.l.b16 %v76
  %v601 = vunpack.c.l.b16 %v77
  %v602 = vunpack.c.l.b16 %v78
  %v603 = vunpack.c.l.b16 %v79
  %v604 = vunpack.c.l.b16 %v80
  %v605 = vunpack.c.l.b16 %v81
  %v606 = vunpack.c.l.b16 %v82
  %v607 = vunpack.c.l.b16 %v83
  %v608 = vunpack.c.l.b16 %v84
  %v609 = vunpack.c.l.b16 %v85
  %v610 = vunpack.c.l.b16 %v86
  %v611 = vunpack.c.l.b16 %v87
  %v612 = vunpack.c.l.b16 %v88
  %v613 = vunpack.c.l.b16 %v89
  %v614 = vunpack.c.l.b16 %v90
  %v615 = vunpack.c.l.b16 %v91
  %v616 = vunpack.c.l.b16 %v92
  %v617 = vunpack.c.l.b16 %v93
  %v618 = vunpack.c.l.b16 %v94
  %v619 = vunpack.c.l.b16 %v95
  %v620 = vunpack.c.l.b16 %v96
  %v621 = vunpack.c.l.b16 %v97
  %v622 = vunpack.c.l.b16 %v98
  %v623 = vunpack.c.l.b16 %v99
  %v624 = vunpack.c.l.b16 %v100
  %v625 = vunpack.c.l.b16 %v101
  %v626 = vunpack.c.l.b16 %v102
  %v627 = vunpack.c.l.b16 %v103
  %v628 = vunpack.c.l.b16 %v104
  %v629 = vunpack.c.l.b16 %v105
  %v630 = vunpack.c.l.b16 %v106
  %v631 = vunpack.c.l.b16 %v107
  %v632 = vunpack.c.l.b16 %v108
  %v633 = vunpack.c.l.b16 %v109
  %v634 = vunpack.c.l.b16 %v110
  %v635 = vunpack.c.l.b16 %v111
  %v636 = vunpack.c.l.b16 %v112
  %v637 = vunpack.c.l.b16 %v113
  %v638 = vunpack.c.l.b16 %v114
  %v639 = vunpack.c.l.b16 %v115
  %v640 = vunpack.c.l.b16 %v116
  %v641 = vunpack.c.l.b16 %v117
  %v642 = vunpack.c.l.b16 %v118
  %v643 = vunpack.c.l.b16 %v119
  %v644 = vunpack.c.l.b16 %v120
  %v645 = vunpack.c.l.b16 %v121
  %v646 = vunpack.c.l.b16 %v122
  %v647 = vunpack.c.l.b16 %v123
  %v648 = vunpack.c.l.b16 %v124
  %v649 = vunpack.c.l.b16 %v125
  %v650 = vunpack.c.l.b16 %v126
  %v651 = vunpack.c.l.b16 %v127
  %v652 = vunpack.c.l.b16 %v128
  %v653 = vunpack.c.l.b16 %v129
  %v654 = vunpack.c.l.b16 %v130
  %v655 = vunpack.c.l.b16 %v131
  %v656 = vunpack.c.l.b16 %v132
  %v657 = vunpack.c.l.b16 %v133
  %v658 = vunpack.c.l.b16 %v134
  %v659 = vunpack.c.l.b16 %v135
  %v660 = vunpack.c.l.b16 %v136
  %v661 = vunpack.c.l.b16 %v137
  %v662 = vunpack.c.l.b16 %v138
  %v663 = vunpack.c.l.b16 %v139
  %v664 = vunpack.c.l.b16 %v140
  %v665 = vunpack.c.l.b16 %v141
  %v666 = vunpack.c.l.b16 %v142
  %v667 = vunpack.c.l.b16 %v143
  %v668 = vunpack.c.l.b16 %v144
  %v669 = vunpack.c.l.b16 %v145
  %v670 = vunpack.c.l.b16 %v146
  %v671 = vunpack.c.l.b16 %v147
  %v672 = vunpack.c.l.b16 %v148
  %v673 = vunpack.c.l.b16 %v149
  %v674 = vunpack.c.l.b16 %v150
  %v675 = vunpack.c.l.b16 %v151
  %v676 = vunpack.c.l.b16 %v152
  %v677 = vunpack.c.l.b16 %v153
  %v678 = vunpack.c.l.b16 %v154
  %v679 = vunpack.c.l.b16 %v155
  %v680 = vunpack.c.l.b16 %v156
  %v681 = vunpack.c.l.b16 %v157
  %v682 = vunpack.c.l.b16 %v158
  %v683 = vunpack.c.l.b16 %v159
  %v684 = vunpack.c.l.b16 %v160
  %v685 = vunpack.c.l.b16 %v161
  %v686 = vunpack.c.l.b16 %v162
  %v687 = vunpack.c.l.b16 %v163
  %v688 = vunpack.c.l.b16 %v164
  %v689 = vunpack.c.l.b16 %v165
  %v690 = vunpack.c.l.b16 %v166
  %v691 = vunpack.c.l.b16 %v167
  %v692 = vunpack.c.l.b16 %v168
  %v693 = vunpack.c.l.b16 %v169
  %v694 = vunpack.c.l.b16 %v170
  %v695 = vunpack.c.l.b16 %v171
  %v696 = vunpack.c.l.b16 %v172
  %v697 = vunpack.c.l.b16 %v173
  %v698 = vunpack.c.l.b16 %v174
  %v699 = vunpack.c.l.b16 %v175
  %v700 = vunpack.c.l.b16 %v176
  %v701 = vunpack.c.l.b16 %v177
  %v702 = vunpack.c.l.b16 %v178
  %v703 = vunpack.c.l.b16 %v179
  %v704 = vunpack.c.l.b16 %v180
  %v705 = vunpack.c.l.b16 %v181
  %v706 = vunpack.c.l.b16 %v182
  %v707 = vunpack.c.l.b16 %v183
  %v708 = vunpack.c.l.b16 %v184
  %v709 = vunpack.c.l.b16 %v185
  %v710 = vunpack.c.l.b16 %v186
  %v711 = vunpack.c.l.b16 %v187
  %v712 = vunpack.c.l.b16 %v188
  %v713 = vunpack.c.l.b16 %v189
  %v714 = vunpack.c.l.b16 %v190
  %v715 = vunpack.c.l.b16 %v191
  %v716 = vunpack.c.l.b16 %v192
  %v717 = vunpack.c.l.b16 %v193
  %v718 = vunpack.c.l.b16 %v194
  %v719 = vunpack.c.l.b16 %v195
  %v720 = vunpack.c.l.b16 %v196
  %v721 = vunpack.c.l.b16 %v197
  %v722 = vunpack.c.l.b16 %v198
  %v723 = vunpack.c.l.b16 %v199
  %v724 = vunpack.c.l.b16 %v200
  %v725 = vunpack.c.l.b16 %v201
  %v726 = vunpack.c.l.b16 %v202
  %v727 = vunpack.c.l.b16 %v203
  %v728 = vunpack.c.l.b16 %v204
  %v729 = vunpack.c.l.b16 %v205
  %v730 = vunpack.c.l.b16 %v206
  %v731 = vunpack.c.l.b16 %v207
  %v732 = vunpack.c.l.b16 %v208
  %v733 = vunpack.c.l.b16 %v209
  %v734 = vunpack.c.l.b16 %v210
  %v735 = vunpack.c.l.b16 %v211
  %v736 = vunpack.c.l.b16 %v212
  %v737 = vunpack.c.l.b16 %v213
  %v738 = vunpack.c.l.b16 %v214
  %v739 = vunpack.c.l.b16 %v215
  %v740 = vunpack.c.l.b16 %v216
  %v741 = vunpack.c.l.b16 %v217
  %v742 = vunpack.c.l.b16 %v218
  %v743 = vunpack.c.l.b16 %v219
  %v744 = vunpack.c.l.b16 %v220
  %v745 = vunpack.c.l.b16 %v221
  %v746 = vunpack.c.l.b16 %v222
  %v747 = vunpack.c.l.b16 %v223
  %v748 = vunpack.c.l.b16 %v224
  %v749 = vunpack.c.l.b16 %v225
  %v750 = vunpack.c.l.b16 %v226
  %v751 = vunpack.c.l.b16 %v227
  %v752 = vunpack.c.l.b16 %v228
  %v753 = vunpack.c.l.b16 %v229
  %v754 = vunpack.c.l.b16 %v230
  %v755 = vunpack.c.l.b16 %v231
  %v756 = vunpack.c.l.b16 %v232
  %v757 = vunpack.c.l.b16 %v233
  %v758 = vunpack.c.l.b16 %v234
  %v759 = vunpack.c.l.b16 %v235
  %v760 = vunpack.c.l.b16 %v236
  %v761 = vunpack.c.l.b16 %v237
  %v762 = vunpack.c.l.b16 %v238
  %v763 = vunpack.c.l.b16 %v239
  %v764 = vunpack.c.l.b16 %v240
  %v765 = vunpack.c.l.b16 %v241
  %v766 = vunpack.c.l.b16 %v242
  %v767 = vunpack.c.l.b16 %v243
  %v768 = vunpack.c.l.b16 %v244
  %v769 = vunpack.c.l.b16 %v245
  %v770 = vunpack.c.l.b16 %v246
  %v771 = vunpack.c.l.b16 %v247
  %v772 = vunpack.c.l.b16 %v248
  %v773 = vunpack.c.l.b16 %v249
  %v774 = vunpack.c.l.b16 %v250
  %v775 = vunpack.c.l.b16 %v251
  %v776 = vunpack.c.l.b16 %v252
  %v777 = vunpack.c.l.b16 %v253
  %v778 = vunpack.c.l.b16 %v254
  %v779 = vunpack.c.l.b16 %v255
  %v780 = vunpack.c.l.b16 %v256
  %v781 = vunpack.c.l.b16 %v257
  %v782 = vunpack.c.l.b16 %v258
  %v783 = vunpack.c.l.b16 %v259
  %v784 = vunpack.c.l.b16 %v260
  %v785 = vunpack.c.l.b16 %v261
  %v786 = vunpack.c.l.b16 %v262
  %v787 = vunpack.c.l.b16 %v263
  %v788 = vunpack.c.l.b16 %v264
  %v789 = vunpack.c.l.b16 %v265
  %v790 = vunpack.c.l.b16 %v266
  %v791 = vunpack.c.l.b16 %v267
  %v792 = vunpack.c.l.b16 %v268
  %v793 = vunpack.c.l.b16 %v269
  %v794 = vunpack.c.l.b16 %v270
  %v795 = vunpack.c.l.b16 %v271
  %v796 = vunpack.c.l.b16 %v272
  %v797 = vunpack.c.l.b16 %v273
  %v798 = vunpack.c.l.b16 %v274
  %v799 = vunpack.c.l.b16 %v275
  %v800 = vunpack.c.l.b16 %v276
  %v801 = vunpack.c.l.b16 %v277
  %v802 = vunpack.c.l.b16 %v278
  %v803 = vunpack.c.l.b16 %v279
  %v804 = vunpack.c.l.b16 %v280
  %v805 = vunpack.c.l.b16 %v281
  %v806 = vunpack.c.l.b16 %v282
  %v807 = vunpack.c.l.b16 %v283
  %v808 = vunpack.c.l.b16 %v284
  %v809 = vunpack.c.l.b16 %v285
  %v810 = vunpack.c.l.b16 %v286
  %v811 = vunpack.c.l.b16 %v287
  %v812 = vunpack.c.l.b16 %v288
  %v813 = vpack.c.b16 %v558, %v557
  %v814 = vpack.c.b16 %v560, %v559
  %v815 = vpack.c.b16 %v562, %v561
  %v816 = vpack.c.b16 %v564, %v563
  %v817 = vpack.c.b16 %v566, %v565
  %v818 = vpack.c.b16 %v568, %v567
  %v819 = vpack.c.b16 %v570, %v569
  %v820 = vpack.c.b16 %v572, %v571
  %v821 = vpack.c.b16 %v574, %v573
  %v822 = vpack.c.b16 %v576, %v575
  %v823 = vpack.c.b16 %v578, %v577
  %v824 = vpack.c.b16 %v580, %v579
  %v825 = vpack.c.b16 %v582, %v581
  %v826 = vpack.c.b16 %v584, %v583
  %v827 = vpack.c.b16 %v586, %v585
  %v828 = vpack.c.b16 %v588, %v587
  %v829 = vpack.c.b16 %v590, %v589
  %v830 = vpack.c.b16 %v592, %v591
  %v831 = vpack.c.b16 %v594, %v593
  %v832 = vpack.c.b16 %v596, %v595
  %v833 = vpack.c.b16 %v598, %v597
  %v834 = vpack.c.b16 %v600, %v599
  %v835 = vpack.c.b16 %v602, %v601
  %v836 = vpack.c.b16 %v604, %v603
  %v837 = vpack.c.b16 %v606, %v605
  %v838 = vpack.c.b16 %v608, %v607
  %v839 = vpack.c.b16 %v610, %v609
  %v840 = vpack.c.b16 %v612, %v611
  %v841 = vpack.c.b16 %v614, %v613
  %v842 = vpack.c.b16 %v616, %v615
  %v843 = vpack.c.b16 %v618, %v617
  %v844 = vpack.c.b16 %v620, %v619
  %v845 = vpack.c.b16 %v622, %v621
  %v846 = vpack.c.b16 %v624, %v623
  %v847 = vpack.c.b16 %v626, %v625
  %v848 = vpack.c.b16 %v628, %v627
  %v849 = vpack.c.b16 %v630, %v629
  %v850 = vpack.c.b16 %v632, %v631
  %v851 = vpack.c.b16 %v634, %v633
  %v852 = vpack.c.b16 %v636, %v635
  %v853 = vpack.c.b16 %v638, %v637
  %v854 = vpack.c.b16 %v640, %v639
  %v855 = vpack.c.b16 %v642, %v641
  %v856 = vpack.c.b16 %v644, %v643
  %v857 = vpack.c.b16 %v646, %v645
  %v858 = vpack.c.b16 %v648, %v647
  %v859 = vpack.c.b16 %v650, %v649
  %v860 = vpack.c.b16 %v652, %v651
  %v861 = vpack.c.b16 %v654, %v653
  %v862 = vpack.c.b16 %v656, %v655
  %v863 = vpack.c.b16 %v658, %v657
  %v864 = vpack.c.b16 %v660, %v659
  %v865 = vpack.c.b16 %v662, %v661
  %v866 = vpack.c.b16 %v664, %v663
  %v867 = vpack.c.b16 %v666, %v665
  %v868 = vpack.c.b16 %v668, %v667
  %v869 = vpack.c.b16 %v670, %v669
  %v870 = vpack.c.b16 %v672, %v671
  %v871 = vpack.c.b16 %v674, %v673
  %v872 = vpack.c.b16 %v676, %v675
  %v873 = vpack.c.b16 %v678, %v677
  %v874 = vpack.c.b16 %v680, %v679
  %v875 = vpack.c.b16 %v682, %v681
  %v876 = vpack.c.b16 %v684, %v683
  %v877 = vpack.c.b16 %v686, %v685
  %v878 = vpack.c.b16 %v688, %v687
  %v879 = vpack.c.b16 %v690, %v689
  %v880 = vpack.c.b16 %v692, %v691
  %v881 = vpack.c.b16 %v694, %v693
  %v882 = vpack.c.b16 %v696, %v695
  %v883 = vpack.c.b16 %v698, %v697
  %v884 = vpack.c.b16 %v700, %v699
  %v885 = vpack.c.b16 %v702, %v701
  %v886 = vpack.c.b16 %v704, %v703
  %v887 = vpack.c.b16 %v706, %v705
  %v888 = vpack.c.b16 %v708, %v707
  %v889 = vpack.c.b16 %v710, %v709
  %v890 = vpack.c.b16 %v712, %v711
  %v891 = vpack.c.b16 %v714, %v713
  %v892 = vpack.c.b16 %v716, %v715
  %v893 = vpack.c.b16 %v718, %v717
  %v894 = vpack.c.b16 %v720, %v719
  %v895 = vpack.c.b16 %v722, %v721
  %v896 = vpack.c.b16 %v724, %v723
  %v897 = vpack.c.b16 %v726, %v725
  %v898 = vpack.c.b16 %v728, %v727
  %v899 = vpack.c.b16 %v730, %v729
  %v900 = vpack.c.b16 %v732, %v731
  %v901 = vpack.c.b16 %v734, %v733
  %v902 = vpack.c.b16 %v736, %v735
  %v903 = vpack.c.b16 %v738, %v737
  %v904 = vpack.c.b16 %v740, %v739
  %v905 = vpack.c.b16 %v742, %v741
  %v906 = vpack.c.b16 %v744, %v743
  %v907 = vpack.c.b16 %v746, %v745
  %v908 = vpack.c.b16 %v748, %v747
  %v909 = vpack.c.b16 %v750, %v749
  %v910 = vpack.c.b16 %v752, %v751
  %v911 = vpack.c.b16 %v754, %v753
  %v912 = vpack.c.b16 %v756, %v755
  %v913 = vpack.c.b16 %v758, %v757
  %v914 = vpack.c.b16 %v760, %v759
  %v915 = vpack.c.b16 %v762, %v761
  %v916 = vpack.c.b16 %v764, %v763
  %v917 = vpack.c.b16 %v766, %v765
  %v918 = vpack.c.b16 %v768, %v767
  %v919 = vpack.c.b16 %v770, %v769
  %v920 = vpack.c.b16 %v772, %v771
  %v921 = vpack.c.b16 %v774, %v773
  %v922 = vpack.c.b16 %v776, %v775
  %v923 = vpack.c.b16 %v778, %v777
  %v924 = vpack.c.b16 %v780, %v779
  %v925 = vpack.c.b16 %v782, %v781
  %v926 = vpack.c.b16 %v784, %v783
  %v927 = vpack.c.b16 %v786, %v785
  %v928 = vpack.c.b16 %v788, %v787
  %v929 = vpack.c.b16 %v790, %v789
  %v930 = vpack.c.b16 %v792, %v791
  %v931 = vpack.c.b16 %v794, %v793
  %v932 = vpack.c.b16 %v796, %v795
  %v933 = vpack.c.b16 %v798, %v797
  %v934 = vpack.c.b16 %v800, %v799
  %v935 = vpack.c.b16 %v802, %v801
  %v936 = vpack.c.b16 %v804, %v803
  %v937 = vpack.c.b16 %v806, %v805
  %v938 = vpack.c.b16 %v808, %v807
  %v939 = vpack.c.b16 %v810, %v809
  %v940 = vpack.c.b16 %v812, %v811
  %v946 = vunpack.c.l.b16 %v289
  %v947 = vunpack.c.l.b16 %v290
  %v948 = vunpack.c.l.b16 %v291
  %v949 = vunpack.c.l.b16 %v292
  %v950 = vunpack.c.l.b16 %v293
  %v951 = vpack.c.b16 %v947, %v946
  %v952 = vpack.c.b16 %v949, %v948
  %v953 = vpack.c.b16 %v950, %v950
  %vm956 = vcmask 293888
  %v958 = vsel %vm956, %v813, 0
  %v961 = vsel %vm956, %v814, 0
  %v964 = vsel %vm956, %v815, 0
  %v967 = vsel %vm956, %v816, 0
  %v970 = vsel %vm956, %v817, 0
  %v973 = vsel %vm956, %v818, 0
  %v976 = vsel %vm956, %v819, 0
  %v979 = vsel %vm956, %v820, 0
  %v982 = vsel %vm956, %v821, 0
  %v985 = vsel %vm956, %v822, 0
  %v988 = vsel %vm956, %v823, 0
  %v991 = vsel %vm956, %v824, 0
  %v994 = vsel %vm956, %v825, 0
  %v997 = vsel %vm956, %v826, 0
  %v1000 = vsel %vm956, %v827, 0
  %v1003 = vsel %vm956, %v828, 0
  %v1006 = vsel %vm956, %v829, 0
  %v1009 = vsel %vm956, %v830, 0
  %v1012 = vsel %vm956, %v831, 0
  %v1015 = vsel %vm956, %v832, 0
  %v1018 = vsel %vm956, %v833, 0
  %v1021 = vsel %vm956, %v834, 0
  %v1024 = vsel %vm956, %v835, 0
  %v1027 = vsel %vm956, %v836, 0
  %v1030 = vsel %vm956, %v837, 0
  %v1033 = vsel %vm956, %v838, 0
  %v1036 = vsel %vm956, %v839, 0
  %v1039 = vsel %vm956, %v840, 0
  %v1042 = vsel %vm956, %v841, 0
  %v1045 = vsel %vm956, %v842, 0
  %v1048 = vsel %vm956, %v843, 0
  %v1051 = vsel %vm956, %v844, 0
  %v1054 = vsel %vm956, %v845, 0
  %v1057 = vsel %vm956, %v846, 0
  %v1060 = vsel %vm956, %v847, 0
  %v1063 = vsel %vm956, %v848, 0
  %v1066 = vsel %vm956, %v849, 0
  %v1069 = vsel %vm956, %v850, 0
  %v1072 = vsel %vm956, %v851, 0
  %v1075 = vsel %vm956, %v852, 0
  %v1078 = vsel %vm956, %v853, 0
  %v1081 = vsel %vm956, %v854, 0
  %v1084 = vsel %vm956, %v855, 0
  %v1087 = vsel %vm956, %v856, 0
  %v1090 = vsel %vm956, %v857, 0
  %v1093 = vsel %vm956, %v858, 0
  %v1096 = vsel %vm956, %v859, 0
  %v1099 = vsel %vm956, %v860, 0
  %v1102 = vsel %vm956, %v861, 0
  %v1105 = vsel %vm956, %v862, 0
  %v1108 = vsel %vm956, %v863, 0
  %v1111 = vsel %vm956, %v864, 0
  %v1114 = vsel %vm956, %v865, 0
  %v1117 = vsel %vm956, %v866, 0
  %v1120 = vsel %vm956, %v867, 0
  %v1123 = vsel %vm956, %v868, 0
  %v1126 = vsel %vm956, %v869, 0
  %v1129 = vsel %vm956, %v870, 0
  %v1132 = vsel %vm956, %v871, 0
  %v1135 = vsel %vm956, %v872, 0
  %v1138 = vsel %vm956, %v873, 0
  %v1141 = vsel %vm956, %v874, 0
  %v1144 = vsel %vm956, %v875, 0
  %v1147 = vsel %vm956, %v876, 0
  %v1150 = vsel %vm956, %v877, 0
  %v1153 = vsel %vm956, %v878, 0
  %v1156 = vsel %vm956, %v879, 0
  %v1159 = vsel %vm956, %v880, 0
  %v1162 = vsel %vm956, %v881, 0
  %v1165 = vsel %vm956, %v882, 0
  %v1168 = vsel %vm956, %v883, 0
  %v1171 = vsel %vm956, %v884, 0
  %v1174 = vsel %vm956, %v885, 0
  %v1177 = vsel %vm956, %v886, 0
  %v1180 = vsel %vm956, %v887, 0
  %v1183 = vsel %vm956, %v888, 0
  %v1186 = vsel %vm956, %v889, 0
  %v1189 = vsel %vm956, %v890, 0
  %v1192 = vsel %vm956, %v891, 0
  %v1195 = vsel %vm956, %v892, 0
  %v1198 = vsel %vm956, %v893, 0
  %v1201 = vsel %vm956, %v894, 0
  %v1204 = vsel %vm956, %v895, 0
  %v1207 = vsel %vm956, %v896, 0
  %v1210 = vsel %vm956, %v897, 0
  %v1213 = vsel %vm956, %v898, 0
  %v1216 = vsel %vm956, %v899, 0
  %v1219 = vsel %vm956, %v900, 0
  %v1222 = vsel %vm956, %v901, 0
  %v1225 = vsel %vm956, %v902, 0
  %v1228 = vsel %vm956, %v903, 0
  %v1231 = vsel %vm956, %v904, 0
  %v1234 = vsel %vm956, %v905, 0
  %v1237 = vsel %vm956, %v906, 0
  %v1240 = vsel %vm956, %v907, 0
  %v1243 = vsel %vm956, %v908, 0
  %v1246 = vsel %vm956, %v909, 0
  %v1249 = vsel %vm956, %v910, 0
  %v1252 = vsel %vm956, %v911, 0
  %v1255 = vsel %vm956, %v912, 0
  %v1258 = vsel %vm956, %v913, 0
  %v1261 = vsel %vm956, %v914, 0
  %v1264 = vsel %vm956, %v915, 0
  %v1267 = vsel %vm956, %v916, 0
  %v1270 = vsel %vm956, %v917, 0
  %v1273 = vsel %vm956, %v918, 0
  %v1276 = vsel %vm956, %v919, 0
  %v1279 = vsel %vm956, %v920, 0
  %v1282 = vsel %vm956, %v921, 0
  %v1285 = vsel %vm956, %v922, 0
  %v1288 = vsel %vm956, %v923, 0
  %v1291 = vsel %vm956, %v924, 0
  %v1294 = vsel %vm956, %v925, 0
  %v1297 = vsel %vm956, %v926, 0
  %v1300 = vsel %vm956, %v927, 0
  %v1303 = vsel %vm956, %v928, 0
  %v1306 = vsel %vm956, %v929, 0
  %v1309 = vsel %vm956, %v930, 0
  %v1312 = vsel %vm956, %v931, 0
  %v1315 = vsel %vm956, %v932, 0
  %v1318 = vsel %vm956, %v933, 0
  %v1321 = vsel %vm956, %v934, 0
  %v1324 = vsel %vm956, %v935, 0
  %v1327 = vsel %vm956, %v936, 0
  %v1330 = vsel %vm956, %v937, 0
  %v1333 = vsel %vm956, %v938, 0
  %v1336 = vsel %vm956, %v939, 0
  %v1339 = vsel %vm956, %v940, 0
  %vm1341 = vcmask 1041408
  %v1343 = vsel %vm1341, %v953, 0
  %1345 = vmatprep.subr.bf16.mxu0 0
  %1346 = vmatpush1.bf16.msra.mxu0 %v951
  %1347 = vmatprep.subr.bf16.mxu0 0
  %1348 = vmatpush1.bf16.msra.mxu0 %v952
  %1349 = vmatprep.subr.bf16.mxu0 0
  %1350 = vmatpush1.bf16.msra.mxu0 %v1343
  %1351 = vmatprep.subr.bf16.mxu0 0
  %1352 = vmatpush1.bf16.msra.mxu0 0
  %1353 = vmatprep.subr.bf16.mxu0 0
  %1354 = vmatpush1.bf16.msra.mxu0 0
  %1355 = vmatprep.subr.bf16.mxu0 0
  %1356 = vmatpush1.bf16.msra.mxu0 0
  %1357 = vmatprep.subr.bf16.mxu0 0
  %1358 = vmatpush1.bf16.msra.mxu0 0
  %1359 = vmatprep.subr.bf16.mxu0 0
  %1360 = vmatpush1.bf16.msra.mxu0 0
  %1361 = vmatprep.subr.bf16.mxu0 0
  %1362 = vmatpush1.bf16.msra.mxu0 0
  %1363 = vmatprep.subr.bf16.mxu0 0
  %1364 = vmatpush1.bf16.msra.mxu0 0
  %1365 = vmatprep.subr.bf16.mxu0 0
  %1366 = vmatpush1.bf16.msra.mxu0 0
  %1367 = vmatprep.subr.bf16.mxu0 0
  %1368 = vmatpush1.bf16.msra.mxu0 0
  %1369 = vmatprep.subr.bf16.mxu0 0
  %1370 = vmatpush1.bf16.msra.mxu0 0
  %1371 = vmatprep.subr.bf16.mxu0 0
  %1372 = vmatpush1.bf16.msra.mxu0 0
  %1373 = vmatprep.subr.bf16.mxu0 0
  %1374 = vmatpush1.bf16.msra.mxu0 0
  %1375 = vmatprep.subr.bf16.mxu0 0
  %1376 = vmatpush1.bf16.msra.mxu0 0
  %1377 = vmatprep.mubr.bf16.mxu0 0
  %1378 = vmatmul.mubr.bf16.gmra.mrb[0].mxu0 %v958
  %v1379 = vpop.f32.mrb[0].mxu0
  %v1380 = vadd.f32 %v299, %v1379
  %v1381 = vpop.f32.mrb[0].mxu0
  %v1382 = vpop.f32.mrb[0].mxu0
  %v1383 = vadd.f32 %v299, %v1382
  %v1384 = vpop.f32.mrb[0].mxu0
  %1385 = vmatprep.mubr.bf16.mxu0 0
  %1386 = vmatmul.mubr.bf16.gmra.mrb[0].mxu0 %v961
  %v1387 = vpop.f32.mrb[0].mxu0
  %v1388 = vadd.f32 %v299, %v1387
  %v1389 = vpop.f32.mrb[0].mxu0
  %v1390 = vpop.f32.mrb[0].mxu0
  %v1391 = vadd.f32 %v299, %v1390
  %v1392 = vpop.f32.mrb[0].mxu0
  %1393 = vmatprep.mubr.bf16.mxu0 0
  %1394 = vmatmul.mubr.bf16.gmra.mrb[0].mxu0 %v964
  %v1395 = vpop.f32.mrb[0].mxu0
  %v1396 = vadd.f32 %v299, %v1395
  %v1397 = vpop.f32.mrb[0].mxu0
  %v1398 = vpop.f32.mrb[0].mxu0
  %v1399 = vadd.f32 %v299, %v1398
  %v1400 = vpop.f32.mrb[0].mxu0
  %1401 = vmatprep.mubr.bf16.mxu0 0
  %1402 = vmatmul.mubr.bf16.gmra.mrb[0].mxu0 %v967
  %v1403 = vpop.f32.mrb[0].mxu0
  %v1404 = vadd.f32 %v299, %v1403
  %v1405 = vpop.f32.mrb[0].mxu0
  %v1406 = vpop.f32.mrb[0].mxu0
  %v1407 = vadd.f32 %v299, %v1406
  %v1408 = vpop.f32.mrb[0].mxu0
  %1409 = vmatprep.mubr.bf16.mxu0 0
  %1410 = vmatmul.mubr.bf16.gmra.mrb[0].mxu0 %v970
  %v1411 = vpop.f32.mrb[0].mxu0
  %v1412 = vadd.f32 %v299, %v1411
  %v1413 = vpop.f32.mrb[0].mxu0
  %v1414 = vpop.f32.mrb[0].mxu0
  %v1415 = vadd.f32 %v299, %v1414
  %v1416 = vpop.f32.mrb[0].mxu0
  %1417 = vmatprep.mubr.bf16.mxu0 0
  %1418 = vmatmul.mubr.bf16.gmra.mrb[0].mxu0 %v973
  %v1419 = vpop.f32.mrb[0].mxu0
  %v1420 = vadd.f32 %v299, %v1419
  %v1421 = vpop.f32.mrb[0].mxu0
  %v1422 = vpop.f32.mrb[0].mxu0
  %v1423 = vadd.f32 %v299, %v1422
  %v1424 = vpop.f32.mrb[0].mxu0
  %1425 = vmatprep.mubr.bf16.mxu0 0
  %1426 = vmatmul.mubr.bf16.gmra.mrb[0].mxu0 %v976
  %v1427 = vpop.f32.mrb[0].mxu0
  %v1428 = vadd.f32 %v299, %v1427
  %v1429 = vpop.f32.mrb[0].mxu0
  %v1430 = vpop.f32.mrb[0].mxu0
  %v1431 = vadd.f32 %v299, %v1430
  %v1432 = vpop.f32.mrb[0].mxu0
  %1433 = vmatprep.mubr.bf16.mxu0 0
  %1434 = vmatmul.mubr.bf16.gmra.mrb[0].mxu0 %v979
  %v1435 = vpop.f32.mrb[0].mxu0
  %v1436 = vadd.f32 %v299, %v1435
  %v1437 = vpop.f32.mrb[0].mxu0
  %v1438 = vpop.f32.mrb[0].mxu0
  %v1439 = vadd.f32 %v299, %v1438
  %v1440 = vpop.f32.mrb[0].mxu0
  %1441 = vmatprep.mubr.bf16.mxu0 0
  %1442 = vmatmul.mubr.bf16.gmra.mrb[0].mxu0 %v982
  %v1443 = vpop.f32.mrb[0].mxu0
  %v1444 = vadd.f32 %v299, %v1443
  %v1445 = vpop.f32.mrb[0].mxu0
  %v1446 = vpop.f32.mrb[0].mxu0
  %v1447 = vadd.f32 %v299, %v1446
  %v1448 = vpop.f32.mrb[0].mxu0
  %1449 = vmatprep.mubr.bf16.mxu0 0
  %1450 = vmatmul.mubr.bf16.gmra.mrb[0].mxu0 %v985
  %v1451 = vpop.f32.mrb[0].mxu0
  %v1452 = vadd.f32 %v299, %v1451
  %v1453 = vpop.f32.mrb[0].mxu0
  %v1454 = vpop.f32.mrb[0].mxu0
  %v1455 = vadd.f32 %v299, %v1454
  %v1456 = vpop.f32.mrb[0].mxu0
  %1457 = vmatprep.mubr.bf16.mxu0 0
  %1458 = vmatmul.mubr.bf16.gmra.mrb[0].mxu0 %v988
  %v1459 = vpop.f32.mrb[0].mxu0
  %v1460 = vadd.f32 %v299, %v1459
  %v1461 = vpop.f32.mrb[0].mxu0
  %v1462 = vpop.f32.mrb[0].mxu0
  %v1463 = vadd.f32 %v299, %v1462
  %v1464 = vpop.f32.mrb[0].mxu0
  %1465 = vmatprep.mubr.bf16.mxu0 0
  %1466 = vmatmul.mubr.bf16.gmra.mrb[0].mxu0 %v991
  %v1467 = vpop.f32.mrb[0].mxu0
  %v1468 = vadd.f32 %v299, %v1467
  %v1469 = vpop.f32.mrb[0].mxu0
  %v1470 = vpop.f32.mrb[0].mxu0
  %v1471 = vadd.f32 %v299, %v1470
  %v1472 = vpop.f32.mrb[0].mxu0
  %1473 = vmatprep.mubr.bf16.mxu0 0
  %1474 = vmatmul.mubr.bf16.gmra.mrb[0].mxu0 %v994
  %v1475 = vpop.f32.mrb[0].mxu0
  %v1476 = vadd.f32 %v299, %v1475
  %v1477 = vpop.f32.mrb[0].mxu0
  %v1478 = vpop.f32.mrb[0].mxu0
  %v1479 = vadd.f32 %v299, %v1478
  %v1480 = vpop.f32.mrb[0].mxu0
  %1481 = vmatprep.mubr.bf16.mxu0 0
  %1482 = vmatmul.mubr.bf16.gmra.mrb[0].mxu0 %v997
  %v1483 = vpop.f32.mrb[0].mxu0
  %v1484 = vadd.f32 %v299, %v1483
  %v1485 = vpop.f32.mrb[0].mxu0
  %v1486 = vpop.f32.mrb[0].mxu0
  %v1487 = vadd.f32 %v299, %v1486
  %v1488 = vpop.f32.mrb[0].mxu0
  %1489 = vmatprep.mubr.bf16.mxu0 0
  %1490 = vmatmul.mubr.bf16.gmra.mrb[0].mxu0 %v1000
  %v1491 = vpop.f32.mrb[0].mxu0
  %v1492 = vadd.f32 %v299, %v1491
  %v1493 = vpop.f32.mrb[0].mxu0
  %v1494 = vpop.f32.mrb[0].mxu0
  %v1495 = vadd.f32 %v299, %v1494
  %v1496 = vpop.f32.mrb[0].mxu0
  %1497 = vmatprep.mubr.bf16.mxu0 0
  %1498 = vmatmul.mubr.bf16.gmra.mrb[0].mxu0 %v1003
  %v1499 = vpop.f32.mrb[0].mxu0
  %v1500 = vadd.f32 %v299, %v1499
  %v1501 = vpop.f32.mrb[0].mxu0
  %v1502 = vpop.f32.mrb[0].mxu0
  %v1503 = vadd.f32 %v299, %v1502
  %v1504 = vpop.f32.mrb[0].mxu0
  %1505 = vmatprep.mubr.bf16.mxu0 0
  %1506 = vmatmul.mubr.bf16.gmra.mrb[0].mxu0 %v1006
  %v1507 = vpop.f32.mrb[0].mxu0
  %v1508 = vadd.f32 %v299, %v1507
  %v1509 = vpop.f32.mrb[0].mxu0
  %v1510 = vpop.f32.mrb[0].mxu0
  %v1511 = vadd.f32 %v299, %v1510
  %v1512 = vpop.f32.mrb[0].mxu0
  %1513 = vmatprep.mubr.bf16.mxu0 0
  %1514 = vmatmul.mubr.bf16.gmra.mrb[0].mxu0 %v1009
  %v1515 = vpop.f32.mrb[0].mxu0
  %v1516 = vadd.f32 %v299, %v1515
  %v1517 = vpop.f32.mrb[0].mxu0
  %v1518 = vpop.f32.mrb[0].mxu0
  %v1519 = vadd.f32 %v299, %v1518
  %v1520 = vpop.f32.mrb[0].mxu0
  %1521 = vmatprep.mubr.bf16.mxu0 0
  %1522 = vmatmul.mubr.bf16.gmra.mrb[0].mxu0 %v1012
  %v1523 = vpop.f32.mrb[0].mxu0
  %v1524 = vadd.f32 %v299, %v1523
  %v1525 = vpop.f32.mrb[0].mxu0
  %v1526 = vpop.f32.mrb[0].mxu0
  %v1527 = vadd.f32 %v299, %v1526
  %v1528 = vpop.f32.mrb[0].mxu0
  %1529 = vmatprep.mubr.bf16.mxu0 0
  %1530 = vmatmul.mubr.bf16.gmra.mrb[0].mxu0 %v1015
  %v1531 = vpop.f32.mrb[0].mxu0
  %v1532 = vadd.f32 %v299, %v1531
  %v1533 = vpop.f32.mrb[0].mxu0
  %v1534 = vpop.f32.mrb[0].mxu0
  %v1535 = vadd.f32 %v299, %v1534
  %v1536 = vpop.f32.mrb[0].mxu0
  %1537 = vmatprep.mubr.bf16.mxu0 0
  %1538 = vmatmul.mubr.bf16.gmra.mrb[0].mxu0 %v1018
  %v1539 = vpop.f32.mrb[0].mxu0
  %v1540 = vadd.f32 %v299, %v1539
  %v1541 = vpop.f32.mrb[0].mxu0
  %v1542 = vpop.f32.mrb[0].mxu0
  %v1543 = vadd.f32 %v299, %v1542
  %v1544 = vpop.f32.mrb[0].mxu0
  %1545 = vmatprep.mubr.bf16.mxu0 0
  %1546 = vmatmul.mubr.bf16.gmra.mrb[0].mxu0 %v1021
  %v1547 = vpop.f32.mrb[0].mxu0
  %v1548 = vadd.f32 %v299, %v1547
  %v1549 = vpop.f32.mrb[0].mxu0
  %v1550 = vpop.f32.mrb[0].mxu0
  %v1551 = vadd.f32 %v299, %v1550
  %v1552 = vpop.f32.mrb[0].mxu0
  %1553 = vmatprep.mubr.bf16.mxu0 0
  %1554 = vmatmul.mubr.bf16.gmra.mrb[0].mxu0 %v1024
  %v1555 = vpop.f32.mrb[0].mxu0
  %v1556 = vadd.f32 %v299, %v1555
  %v1557 = vpop.f32.mrb[0].mxu0
  %v1558 = vpop.f32.mrb[0].mxu0
  %v1559 = vadd.f32 %v299, %v1558
  %v1560 = vpop.f32.mrb[0].mxu0
  %1561 = vmatprep.mubr.bf16.mxu0 0
  %1562 = vmatmul.mubr.bf16.gmra.mrb[0].mxu0 %v1027
  %v1563 = vpop.f32.mrb[0].mxu0
  %v1564 = vadd.f32 %v299, %v1563
  %v1565 = vpop.f32.mrb[0].mxu0
  %v1566 = vpop.f32.mrb[0].mxu0
  %v1567 = vadd.f32 %v299, %v1566
  %v1568 = vpop.f32.mrb[0].mxu0
  %1569 = vmatprep.mubr.bf16.mxu0 0
  %1570 = vmatmul.mubr.bf16.gmra.mrb[0].mxu0 %v1030
  %v1571 = vpop.f32.mrb[0].mxu0
  %v1572 = vadd.f32 %v299, %v1571
  %v1573 = vpop.f32.mrb[0].mxu0
  %v1574 = vpop.f32.mrb[0].mxu0
  %v1575 = vadd.f32 %v299, %v1574
  %v1576 = vpop.f32.mrb[0].mxu0
  %1577 = vmatprep.mubr.bf16.mxu0 0
  %1578 = vmatmul.mubr.bf16.gmra.mrb[0].mxu0 %v1033
  %v1579 = vpop.f32.mrb[0].mxu0
  %v1580 = vadd.f32 %v299, %v1579
  %v1581 = vpop.f32.mrb[0].mxu0
  %v1582 = vpop.f32.mrb[0].mxu0
  %v1583 = vadd.f32 %v299, %v1582
  %v1584 = vpop.f32.mrb[0].mxu0
  %1585 = vmatprep.mubr.bf16.mxu0 0
  %1586 = vmatmul.mubr.bf16.gmra.mrb[0].mxu0 %v1036
  %v1587 = vpop.f32.mrb[0].mxu0
  %v1588 = vadd.f32 %v299, %v1587
  %v1589 = vpop.f32.mrb[0].mxu0
  %v1590 = vpop.f32.mrb[0].mxu0
  %v1591 = vadd.f32 %v299, %v1590
  %v1592 = vpop.f32.mrb[0].mxu0
  %1593 = vmatprep.mubr.bf16.mxu0 0
  %1594 = vmatmul.mubr.bf16.gmra.mrb[0].mxu0 %v1039
  %v1595 = vpop.f32.mrb[0].mxu0
  %v1596 = vadd.f32 %v299, %v1595
  %v1597 = vpop.f32.mrb[0].mxu0
  %v1598 = vpop.f32.mrb[0].mxu0
  %v1599 = vadd.f32 %v299, %v1598
  %v1600 = vpop.f32.mrb[0].mxu0
  %1601 = vmatprep.mubr.bf16.mxu0 0
  %1602 = vmatmul.mubr.bf16.gmra.mrb[0].mxu0 %v1042
  %v1603 = vpop.f32.mrb[0].mxu0
  %v1604 = vadd.f32 %v299, %v1603
  %v1605 = vpop.f32.mrb[0].mxu0
  %v1606 = vpop.f32.mrb[0].mxu0
  %v1607 = vadd.f32 %v299, %v1606
  %v1608 = vpop.f32.mrb[0].mxu0
  %1609 = vmatprep.mubr.bf16.mxu0 0
  %1610 = vmatmul.mubr.bf16.gmra.mrb[0].mxu0 %v1045
  %v1611 = vpop.f32.mrb[0].mxu0
  %v1612 = vadd.f32 %v299, %v1611
  %v1613 = vpop.f32.mrb[0].mxu0
  %v1614 = vpop.f32.mrb[0].mxu0
  %v1615 = vadd.f32 %v299, %v1614
  %v1616 = vpop.f32.mrb[0].mxu0
  %1617 = vmatprep.mubr.bf16.mxu0 0
  %1618 = vmatmul.mubr.bf16.gmra.mrb[0].mxu0 %v1048
  %v1619 = vpop.f32.mrb[0].mxu0
  %v1620 = vadd.f32 %v299, %v1619
  %v1621 = vpop.f32.mrb[0].mxu0
  %v1622 = vpop.f32.mrb[0].mxu0
  %v1623 = vadd.f32 %v299, %v1622
  %v1624 = vpop.f32.mrb[0].mxu0
  %1625 = vmatprep.mubr.bf16.mxu0 0
  %1626 = vmatmul.mubr.bf16.gmra.mrb[0].mxu0 %v1051
  %v1627 = vpop.f32.mrb[0].mxu0
  %v1628 = vadd.f32 %v299, %v1627
  %v1629 = vpop.f32.mrb[0].mxu0
  %v1630 = vpop.f32.mrb[0].mxu0
  %v1631 = vadd.f32 %v299, %v1630
  %v1632 = vpop.f32.mrb[0].mxu0
  %1633 = vmatprep.mubr.bf16.mxu0 0
  %1634 = vmatmul.mubr.bf16.gmra.mrb[0].mxu0 %v1054
  %v1635 = vpop.f32.mrb[0].mxu0
  %v1636 = vadd.f32 %v299, %v1635
  %v1637 = vpop.f32.mrb[0].mxu0
  %v1638 = vpop.f32.mrb[0].mxu0
  %v1639 = vadd.f32 %v299, %v1638
  %v1640 = vpop.f32.mrb[0].mxu0
  %1641 = vmatprep.mubr.bf16.mxu0 0
  %1642 = vmatmul.mubr.bf16.gmra.mrb[0].mxu0 %v1057
  %v1643 = vpop.f32.mrb[0].mxu0
  %v1644 = vadd.f32 %v299, %v1643
  %v1645 = vpop.f32.mrb[0].mxu0
  %v1646 = vpop.f32.mrb[0].mxu0
  %v1647 = vadd.f32 %v299, %v1646
  %v1648 = vpop.f32.mrb[0].mxu0
  %1649 = vmatprep.mubr.bf16.mxu0 0
  %1650 = vmatmul.mubr.bf16.gmra.mrb[0].mxu0 %v1060
  %v1651 = vpop.f32.mrb[0].mxu0
  %v1652 = vadd.f32 %v299, %v1651
  %v1653 = vpop.f32.mrb[0].mxu0
  %v1654 = vpop.f32.mrb[0].mxu0
  %v1655 = vadd.f32 %v299, %v1654
  %v1656 = vpop.f32.mrb[0].mxu0
  %1657 = vmatprep.mubr.bf16.mxu0 0
  %1658 = vmatmul.mubr.bf16.gmra.mrb[0].mxu0 %v1063
  %v1659 = vpop.f32.mrb[0].mxu0
  %v1660 = vadd.f32 %v299, %v1659
  %v1661 = vpop.f32.mrb[0].mxu0
  %v1662 = vpop.f32.mrb[0].mxu0
  %v1663 = vadd.f32 %v299, %v1662
  %v1664 = vpop.f32.mrb[0].mxu0
  %1665 = vmatprep.mubr.bf16.mxu0 0
  %1666 = vmatmul.mubr.bf16.gmra.mrb[0].mxu0 %v1066
  %v1667 = vpop.f32.mrb[0].mxu0
  %v1668 = vadd.f32 %v299, %v1667
  %v1669 = vpop.f32.mrb[0].mxu0
  %v1670 = vpop.f32.mrb[0].mxu0
  %v1671 = vadd.f32 %v299, %v1670
  %v1672 = vpop.f32.mrb[0].mxu0
  %1673 = vmatprep.mubr.bf16.mxu0 0
  %1674 = vmatmul.mubr.bf16.gmra.mrb[0].mxu0 %v1069
  %v1675 = vpop.f32.mrb[0].mxu0
  %v1676 = vadd.f32 %v299, %v1675
  %v1677 = vpop.f32.mrb[0].mxu0
  %v1678 = vpop.f32.mrb[0].mxu0
  %v1679 = vadd.f32 %v299, %v1678
  %v1680 = vpop.f32.mrb[0].mxu0
  %1681 = vmatprep.mubr.bf16.mxu0 0
  %1682 = vmatmul.mubr.bf16.gmra.mrb[0].mxu0 %v1072
  %v1683 = vpop.f32.mrb[0].mxu0
  %v1684 = vadd.f32 %v299, %v1683
  %v1685 = vpop.f32.mrb[0].mxu0
  %v1686 = vpop.f32.mrb[0].mxu0
  %v1687 = vadd.f32 %v299, %v1686
  %v1688 = vpop.f32.mrb[0].mxu0
  %1689 = vmatprep.mubr.bf16.mxu0 0
  %1690 = vmatmul.mubr.bf16.gmra.mrb[0].mxu0 %v1075
  %v1691 = vpop.f32.mrb[0].mxu0
  %v1692 = vadd.f32 %v299, %v1691
  %v1693 = vpop.f32.mrb[0].mxu0
  %v1694 = vpop.f32.mrb[0].mxu0
  %v1695 = vadd.f32 %v299, %v1694
  %v1696 = vpop.f32.mrb[0].mxu0
  %1697 = vmatprep.mubr.bf16.mxu0 0
  %1698 = vmatmul.mubr.bf16.gmra.mrb[0].mxu0 %v1078
  %v1699 = vpop.f32.mrb[0].mxu0
  %v1700 = vadd.f32 %v299, %v1699
  %v1701 = vpop.f32.mrb[0].mxu0
  %v1702 = vpop.f32.mrb[0].mxu0
  %v1703 = vadd.f32 %v299, %v1702
  %v1704 = vpop.f32.mrb[0].mxu0
  %1705 = vmatprep.mubr.bf16.mxu0 0
  %1706 = vmatmul.mubr.bf16.gmra.mrb[0].mxu0 %v1081
  %v1707 = vpop.f32.mrb[0].mxu0
  %v1708 = vadd.f32 %v299, %v1707
  %v1709 = vpop.f32.mrb[0].mxu0
  %v1710 = vpop.f32.mrb[0].mxu0
  %v1711 = vadd.f32 %v299, %v1710
  %v1712 = vpop.f32.mrb[0].mxu0
  %1713 = vmatprep.mubr.bf16.mxu0 0
  %1714 = vmatmul.mubr.bf16.gmra.mrb[0].mxu0 %v1084
  %v1715 = vpop.f32.mrb[0].mxu0
  %v1716 = vadd.f32 %v299, %v1715
  %v1717 = vpop.f32.mrb[0].mxu0
  %v1718 = vpop.f32.mrb[0].mxu0
  %v1719 = vadd.f32 %v299, %v1718
  %v1720 = vpop.f32.mrb[0].mxu0
  %1721 = vmatprep.mubr.bf16.mxu0 0
  %1722 = vmatmul.mubr.bf16.gmra.mrb[0].mxu0 %v1087
  %v1723 = vpop.f32.mrb[0].mxu0
  %v1724 = vadd.f32 %v299, %v1723
  %v1725 = vpop.f32.mrb[0].mxu0
  %v1726 = vpop.f32.mrb[0].mxu0
  %v1727 = vadd.f32 %v299, %v1726
  %v1728 = vpop.f32.mrb[0].mxu0
  %1729 = vmatprep.mubr.bf16.mxu0 0
  %1730 = vmatmul.mubr.bf16.gmra.mrb[0].mxu0 %v1090
  %v1731 = vpop.f32.mrb[0].mxu0
  %v1732 = vadd.f32 %v299, %v1731
  %v1733 = vpop.f32.mrb[0].mxu0
  %v1734 = vpop.f32.mrb[0].mxu0
  %v1735 = vadd.f32 %v299, %v1734
  %v1736 = vpop.f32.mrb[0].mxu0
  %1737 = vmatprep.mubr.bf16.mxu0 0
  %1738 = vmatmul.mubr.bf16.gmra.mrb[0].mxu0 %v1093
  %v1739 = vpop.f32.mrb[0].mxu0
  %v1740 = vadd.f32 %v299, %v1739
  %v1741 = vpop.f32.mrb[0].mxu0
  %v1742 = vpop.f32.mrb[0].mxu0
  %v1743 = vadd.f32 %v299, %v1742
  %v1744 = vpop.f32.mrb[0].mxu0
  %1745 = vmatprep.mubr.bf16.mxu0 0
  %1746 = vmatmul.mubr.bf16.gmra.mrb[0].mxu0 %v1096
  %v1747 = vpop.f32.mrb[0].mxu0
  %v1748 = vadd.f32 %v299, %v1747
  %v1749 = vpop.f32.mrb[0].mxu0
  %v1750 = vpop.f32.mrb[0].mxu0
  %v1751 = vadd.f32 %v299, %v1750
  %v1752 = vpop.f32.mrb[0].mxu0
  %1753 = vmatprep.mubr.bf16.mxu0 0
  %1754 = vmatmul.mubr.bf16.gmra.mrb[0].mxu0 %v1099
  %v1755 = vpop.f32.mrb[0].mxu0
  %v1756 = vadd.f32 %v299, %v1755
  %v1757 = vpop.f32.mrb[0].mxu0
  %v1758 = vpop.f32.mrb[0].mxu0
  %v1759 = vadd.f32 %v299, %v1758
  %v1760 = vpop.f32.mrb[0].mxu0
  %1761 = vmatprep.mubr.bf16.mxu0 0
  %1762 = vmatmul.mubr.bf16.gmra.mrb[0].mxu0 %v1102
  %v1763 = vpop.f32.mrb[0].mxu0
  %v1764 = vadd.f32 %v299, %v1763
  %v1765 = vpop.f32.mrb[0].mxu0
  %v1766 = vpop.f32.mrb[0].mxu0
  %v1767 = vadd.f32 %v299, %v1766
  %v1768 = vpop.f32.mrb[0].mxu0
  %1769 = vmatprep.mubr.bf16.mxu0 0
  %1770 = vmatmul.mubr.bf16.gmra.mrb[0].mxu0 %v1105
  %v1771 = vpop.f32.mrb[0].mxu0
  %v1772 = vadd.f32 %v299, %v1771
  %v1773 = vpop.f32.mrb[0].mxu0
  %v1774 = vpop.f32.mrb[0].mxu0
  %v1775 = vadd.f32 %v299, %v1774
  %v1776 = vpop.f32.mrb[0].mxu0
  %1777 = vmatprep.mubr.bf16.mxu0 0
  %1778 = vmatmul.mubr.bf16.gmra.mrb[0].mxu0 %v1108
  %v1779 = vpop.f32.mrb[0].mxu0
  %v1780 = vadd.f32 %v299, %v1779
  %v1781 = vpop.f32.mrb[0].mxu0
  %v1782 = vpop.f32.mrb[0].mxu0
  %v1783 = vadd.f32 %v299, %v1782
  %v1784 = vpop.f32.mrb[0].mxu0
  %1785 = vmatprep.mubr.bf16.mxu0 0
  %1786 = vmatmul.mubr.bf16.gmra.mrb[0].mxu0 %v1111
  %v1787 = vpop.f32.mrb[0].mxu0
  %v1788 = vadd.f32 %v299, %v1787
  %v1789 = vpop.f32.mrb[0].mxu0
  %v1790 = vpop.f32.mrb[0].mxu0
  %v1791 = vadd.f32 %v299, %v1790
  %v1792 = vpop.f32.mrb[0].mxu0
  %1793 = vmatprep.mubr.bf16.mxu0 0
  %1794 = vmatmul.mubr.bf16.gmra.mrb[0].mxu0 %v1114
  %v1795 = vpop.f32.mrb[0].mxu0
  %v1796 = vadd.f32 %v299, %v1795
  %v1797 = vpop.f32.mrb[0].mxu0
  %v1798 = vpop.f32.mrb[0].mxu0
  %v1799 = vadd.f32 %v299, %v1798
  %v1800 = vpop.f32.mrb[0].mxu0
  %1801 = vmatprep.mubr.bf16.mxu0 0
  %1802 = vmatmul.mubr.bf16.gmra.mrb[0].mxu0 %v1117
  %v1803 = vpop.f32.mrb[0].mxu0
  %v1804 = vadd.f32 %v299, %v1803
  %v1805 = vpop.f32.mrb[0].mxu0
  %v1806 = vpop.f32.mrb[0].mxu0
  %v1807 = vadd.f32 %v299, %v1806
  %v1808 = vpop.f32.mrb[0].mxu0
  %1809 = vmatprep.mubr.bf16.mxu0 0
  %1810 = vmatmul.mubr.bf16.gmra.mrb[0].mxu0 %v1120
  %v1811 = vpop.f32.mrb[0].mxu0
  %v1812 = vadd.f32 %v299, %v1811
  %v1813 = vpop.f32.mrb[0].mxu0
  %v1814 = vpop.f32.mrb[0].mxu0
  %v1815 = vadd.f32 %v299, %v1814
  %v1816 = vpop.f32.mrb[0].mxu0
  %1817 = vmatprep.mubr.bf16.mxu0 0
  %1818 = vmatmul.mubr.bf16.gmra.mrb[0].mxu0 %v1123
  %v1819 = vpop.f32.mrb[0].mxu0
  %v1820 = vadd.f32 %v299, %v1819
  %v1821 = vpop.f32.mrb[0].mxu0
  %v1822 = vpop.f32.mrb[0].mxu0
  %v1823 = vadd.f32 %v299, %v1822
  %v1824 = vpop.f32.mrb[0].mxu0
  %1825 = vmatprep.mubr.bf16.mxu0 0
  %1826 = vmatmul.mubr.bf16.gmra.mrb[0].mxu0 %v1126
  %v1827 = vpop.f32.mrb[0].mxu0
  %v1828 = vadd.f32 %v299, %v1827
  %v1829 = vpop.f32.mrb[0].mxu0
  %v1830 = vpop.f32.mrb[0].mxu0
  %v1831 = vadd.f32 %v299, %v1830
  %v1832 = vpop.f32.mrb[0].mxu0
  %1833 = vmatprep.mubr.bf16.mxu0 0
  %1834 = vmatmul.mubr.bf16.gmra.mrb[0].mxu0 %v1129
  %v1835 = vpop.f32.mrb[0].mxu0
  %v1836 = vadd.f32 %v299, %v1835
  %v1837 = vpop.f32.mrb[0].mxu0
  %v1838 = vpop.f32.mrb[0].mxu0
  %v1839 = vadd.f32 %v299, %v1838
  %v1840 = vpop.f32.mrb[0].mxu0
  %1841 = vmatprep.mubr.bf16.mxu0 0
  %1842 = vmatmul.mubr.bf16.gmra.mrb[0].mxu0 %v1132
  %v1843 = vpop.f32.mrb[0].mxu0
  %v1844 = vadd.f32 %v299, %v1843
  %v1845 = vpop.f32.mrb[0].mxu0
  %v1846 = vpop.f32.mrb[0].mxu0
  %v1847 = vadd.f32 %v299, %v1846
  %v1848 = vpop.f32.mrb[0].mxu0
  %1849 = vmatprep.mubr.bf16.mxu0 0
  %1850 = vmatmul.mubr.bf16.gmra.mrb[0].mxu0 %v1135
  %v1851 = vpop.f32.mrb[0].mxu0
  %v1852 = vadd.f32 %v299, %v1851
  %v1853 = vpop.f32.mrb[0].mxu0
  %v1854 = vpop.f32.mrb[0].mxu0
  %v1855 = vadd.f32 %v299, %v1854
  %v1856 = vpop.f32.mrb[0].mxu0
  %1857 = vmatprep.mubr.bf16.mxu0 0
  %1858 = vmatmul.mubr.bf16.gmra.mrb[0].mxu0 %v1138
  %v1859 = vpop.f32.mrb[0].mxu0
  %v1860 = vadd.f32 %v299, %v1859
  %v1861 = vpop.f32.mrb[0].mxu0
  %v1862 = vpop.f32.mrb[0].mxu0
  %v1863 = vadd.f32 %v299, %v1862
  %v1864 = vpop.f32.mrb[0].mxu0
  %1865 = vmatprep.mubr.bf16.mxu0 0
  %1866 = vmatmul.mubr.bf16.gmra.mrb[0].mxu0 %v1141
  %v1867 = vpop.f32.mrb[0].mxu0
  %v1868 = vadd.f32 %v299, %v1867
  %v1869 = vpop.f32.mrb[0].mxu0
  %v1870 = vpop.f32.mrb[0].mxu0
  %v1871 = vadd.f32 %v299, %v1870
  %v1872 = vpop.f32.mrb[0].mxu0
  %1873 = vmatprep.mubr.bf16.mxu0 0
  %1874 = vmatmul.mubr.bf16.gmra.mrb[0].mxu0 %v1144
  %v1875 = vpop.f32.mrb[0].mxu0
  %v1876 = vadd.f32 %v299, %v1875
  %v1877 = vpop.f32.mrb[0].mxu0
  %v1878 = vpop.f32.mrb[0].mxu0
  %v1879 = vadd.f32 %v299, %v1878
  %v1880 = vpop.f32.mrb[0].mxu0
  %1881 = vmatprep.mubr.bf16.mxu0 0
  %1882 = vmatmul.mubr.bf16.gmra.mrb[0].mxu0 %v1147
  %v1883 = vpop.f32.mrb[0].mxu0
  %v1884 = vadd.f32 %v299, %v1883
  %v1885 = vpop.f32.mrb[0].mxu0
  %v1886 = vpop.f32.mrb[0].mxu0
  %v1887 = vadd.f32 %v299, %v1886
  %v1888 = vpop.f32.mrb[0].mxu0
  %1889 = vmatprep.mubr.bf16.mxu0 0
  %1890 = vmatmul.mubr.bf16.gmra.mrb[0].mxu0 %v1150
  %v1891 = vpop.f32.mrb[0].mxu0
  %v1892 = vadd.f32 %v299, %v1891
  %v1893 = vpop.f32.mrb[0].mxu0
  %v1894 = vpop.f32.mrb[0].mxu0
  %v1895 = vadd.f32 %v299, %v1894
  %v1896 = vpop.f32.mrb[0].mxu0
  %1897 = vmatprep.mubr.bf16.mxu0 0
  %1898 = vmatmul.mubr.bf16.gmra.mrb[0].mxu0 %v1153
  %v1899 = vpop.f32.mrb[0].mxu0
  %v1900 = vadd.f32 %v299, %v1899
  %v1901 = vpop.f32.mrb[0].mxu0
  %v1902 = vpop.f32.mrb[0].mxu0
  %v1903 = vadd.f32 %v299, %v1902
  %v1904 = vpop.f32.mrb[0].mxu0
  %1905 = vmatprep.mubr.bf16.mxu0 0
  %1906 = vmatmul.mubr.bf16.gmra.mrb[0].mxu0 %v1156
  %v1907 = vpop.f32.mrb[0].mxu0
  %v1908 = vadd.f32 %v299, %v1907
  %v1909 = vpop.f32.mrb[0].mxu0
  %v1910 = vpop.f32.mrb[0].mxu0
  %v1911 = vadd.f32 %v299, %v1910
  %v1912 = vpop.f32.mrb[0].mxu0
  %1913 = vmatprep.mubr.bf16.mxu0 0
  %1914 = vmatmul.mubr.bf16.gmra.mrb[0].mxu0 %v1159
  %v1915 = vpop.f32.mrb[0].mxu0
  %v1916 = vadd.f32 %v299, %v1915
  %v1917 = vpop.f32.mrb[0].mxu0
  %v1918 = vpop.f32.mrb[0].mxu0
  %v1919 = vadd.f32 %v299, %v1918
  %v1920 = vpop.f32.mrb[0].mxu0
  %1921 = vmatprep.mubr.bf16.mxu0 0
  %1922 = vmatmul.mubr.bf16.gmra.mrb[0].mxu0 %v1162
  %v1923 = vpop.f32.mrb[0].mxu0
  %v1924 = vadd.f32 %v299, %v1923
  %v1925 = vpop.f32.mrb[0].mxu0
  %v1926 = vpop.f32.mrb[0].mxu0
  %v1927 = vadd.f32 %v299, %v1926
  %v1928 = vpop.f32.mrb[0].mxu0
  %1929 = vmatprep.mubr.bf16.mxu0 0
  %1930 = vmatmul.mubr.bf16.gmra.mrb[0].mxu0 %v1165
  %v1931 = vpop.f32.mrb[0].mxu0
  %v1932 = vadd.f32 %v299, %v1931
  %v1933 = vpop.f32.mrb[0].mxu0
  %v1934 = vpop.f32.mrb[0].mxu0
  %v1935 = vadd.f32 %v299, %v1934
  %v1936 = vpop.f32.mrb[0].mxu0
  %1937 = vmatprep.mubr.bf16.mxu0 0
  %1938 = vmatmul.mubr.bf16.gmra.mrb[0].mxu0 %v1168
  %v1939 = vpop.f32.mrb[0].mxu0
  %v1940 = vadd.f32 %v299, %v1939
  %v1941 = vpop.f32.mrb[0].mxu0
  %v1942 = vpop.f32.mrb[0].mxu0
  %v1943 = vadd.f32 %v299, %v1942
  %v1944 = vpop.f32.mrb[0].mxu0
  %1945 = vmatprep.mubr.bf16.mxu0 0
  %1946 = vmatmul.mubr.bf16.gmra.mrb[0].mxu0 %v1171
  %v1947 = vpop.f32.mrb[0].mxu0
  %v1948 = vadd.f32 %v299, %v1947
  %v1949 = vpop.f32.mrb[0].mxu0
  %v1950 = vpop.f32.mrb[0].mxu0
  %v1951 = vadd.f32 %v299, %v1950
  %v1952 = vpop.f32.mrb[0].mxu0
  %1953 = vmatprep.mubr.bf16.mxu0 0
  %1954 = vmatmul.mubr.bf16.gmra.mrb[0].mxu0 %v1174
  %v1955 = vpop.f32.mrb[0].mxu0
  %v1956 = vadd.f32 %v299, %v1955
  %v1957 = vpop.f32.mrb[0].mxu0
  %v1958 = vpop.f32.mrb[0].mxu0
  %v1959 = vadd.f32 %v299, %v1958
  %v1960 = vpop.f32.mrb[0].mxu0
  %1961 = vmatprep.mubr.bf16.mxu0 0
  %1962 = vmatmul.mubr.bf16.gmra.mrb[0].mxu0 %v1177
  %v1963 = vpop.f32.mrb[0].mxu0
  %v1964 = vadd.f32 %v299, %v1963
  %v1965 = vpop.f32.mrb[0].mxu0
  %v1966 = vpop.f32.mrb[0].mxu0
  %v1967 = vadd.f32 %v299, %v1966
  %v1968 = vpop.f32.mrb[0].mxu0
  %1969 = vmatprep.mubr.bf16.mxu0 0
  %1970 = vmatmul.mubr.bf16.gmra.mrb[0].mxu0 %v1180
  %v1971 = vpop.f32.mrb[0].mxu0
  %v1972 = vadd.f32 %v299, %v1971
  %v1973 = vpop.f32.mrb[0].mxu0
  %v1974 = vpop.f32.mrb[0].mxu0
  %v1975 = vadd.f32 %v299, %v1974
  %v1976 = vpop.f32.mrb[0].mxu0
  %1977 = vmatprep.mubr.bf16.mxu0 0
  %1978 = vmatmul.mubr.bf16.gmra.mrb[0].mxu0 %v1183
  %v1979 = vpop.f32.mrb[0].mxu0
  %v1980 = vadd.f32 %v299, %v1979
  %v1981 = vpop.f32.mrb[0].mxu0
  %v1982 = vpop.f32.mrb[0].mxu0
  %v1983 = vadd.f32 %v299, %v1982
  %v1984 = vpop.f32.mrb[0].mxu0
  %1985 = vmatprep.mubr.bf16.mxu0 0
  %1986 = vmatmul.mubr.bf16.gmra.mrb[0].mxu0 %v1186
  %v1987 = vpop.f32.mrb[0].mxu0
  %v1988 = vadd.f32 %v299, %v1987
  %v1989 = vpop.f32.mrb[0].mxu0
  %v1990 = vpop.f32.mrb[0].mxu0
  %v1991 = vadd.f32 %v299, %v1990
  %v1992 = vpop.f32.mrb[0].mxu0
  %1993 = vmatprep.mubr.bf16.mxu0 0
  %1994 = vmatmul.mubr.bf16.gmra.mrb[0].mxu0 %v1189
  %v1995 = vpop.f32.mrb[0].mxu0
  %v1996 = vadd.f32 %v299, %v1995
  %v1997 = vpop.f32.mrb[0].mxu0
  %v1998 = vpop.f32.mrb[0].mxu0
  %v1999 = vadd.f32 %v299, %v1998
  %v2000 = vpop.f32.mrb[0].mxu0
  %2001 = vmatprep.mubr.bf16.mxu0 0
  %2002 = vmatmul.mubr.bf16.gmra.mrb[0].mxu0 %v1192
  %v2003 = vpop.f32.mrb[0].mxu0
  %v2004 = vadd.f32 %v299, %v2003
  %v2005 = vpop.f32.mrb[0].mxu0
  %v2006 = vpop.f32.mrb[0].mxu0
  %v2007 = vadd.f32 %v299, %v2006
  %v2008 = vpop.f32.mrb[0].mxu0
  %2009 = vmatprep.mubr.bf16.mxu0 0
  %2010 = vmatmul.mubr.bf16.gmra.mrb[0].mxu0 %v1195
  %v2011 = vpop.f32.mrb[0].mxu0
  %v2012 = vadd.f32 %v299, %v2011
  %v2013 = vpop.f32.mrb[0].mxu0
  %v2014 = vpop.f32.mrb[0].mxu0
  %v2015 = vadd.f32 %v299, %v2014
  %v2016 = vpop.f32.mrb[0].mxu0
  %2017 = vmatprep.mubr.bf16.mxu0 0
  %2018 = vmatmul.mubr.bf16.gmra.mrb[0].mxu0 %v1198
  %v2019 = vpop.f32.mrb[0].mxu0
  %v2020 = vadd.f32 %v299, %v2019
  %v2021 = vpop.f32.mrb[0].mxu0
  %v2022 = vpop.f32.mrb[0].mxu0
  %v2023 = vadd.f32 %v299, %v2022
  %v2024 = vpop.f32.mrb[0].mxu0
  %2025 = vmatprep.mubr.bf16.mxu0 0
  %2026 = vmatmul.mubr.bf16.gmra.mrb[0].mxu0 %v1201
  %v2027 = vpop.f32.mrb[0].mxu0
  %v2028 = vadd.f32 %v299, %v2027
  %v2029 = vpop.f32.mrb[0].mxu0
  %v2030 = vpop.f32.mrb[0].mxu0
  %v2031 = vadd.f32 %v299, %v2030
  %v2032 = vpop.f32.mrb[0].mxu0
  %2033 = vmatprep.mubr.bf16.mxu0 0
  %2034 = vmatmul.mubr.bf16.gmra.mrb[0].mxu0 %v1204
  %v2035 = vpop.f32.mrb[0].mxu0
  %v2036 = vadd.f32 %v299, %v2035
  %v2037 = vpop.f32.mrb[0].mxu0
  %v2038 = vpop.f32.mrb[0].mxu0
  %v2039 = vadd.f32 %v299, %v2038
  %v2040 = vpop.f32.mrb[0].mxu0
  %2041 = vmatprep.mubr.bf16.mxu0 0
  %2042 = vmatmul.mubr.bf16.gmra.mrb[0].mxu0 %v1207
  %v2043 = vpop.f32.mrb[0].mxu0
  %v2044 = vadd.f32 %v299, %v2043
  %v2045 = vpop.f32.mrb[0].mxu0
  %v2046 = vpop.f32.mrb[0].mxu0
  %v2047 = vadd.f32 %v299, %v2046
  %v2048 = vpop.f32.mrb[0].mxu0
  %2049 = vmatprep.mubr.bf16.mxu0 0
  %2050 = vmatmul.mubr.bf16.gmra.mrb[0].mxu0 %v1210
  %v2051 = vpop.f32.mrb[0].mxu0
  %v2052 = vadd.f32 %v299, %v2051
  %v2053 = vpop.f32.mrb[0].mxu0
  %v2054 = vpop.f32.mrb[0].mxu0
  %v2055 = vadd.f32 %v299, %v2054
  %v2056 = vpop.f32.mrb[0].mxu0
  %2057 = vmatprep.mubr.bf16.mxu0 0
  %2058 = vmatmul.mubr.bf16.gmra.mrb[0].mxu0 %v1213
  %v2059 = vpop.f32.mrb[0].mxu0
  %v2060 = vadd.f32 %v299, %v2059
  %v2061 = vpop.f32.mrb[0].mxu0
  %v2062 = vpop.f32.mrb[0].mxu0
  %v2063 = vadd.f32 %v299, %v2062
  %v2064 = vpop.f32.mrb[0].mxu0
  %2065 = vmatprep.mubr.bf16.mxu0 0
  %2066 = vmatmul.mubr.bf16.gmra.mrb[0].mxu0 %v1216
  %v2067 = vpop.f32.mrb[0].mxu0
  %v2068 = vadd.f32 %v299, %v2067
  %v2069 = vpop.f32.mrb[0].mxu0
  %v2070 = vpop.f32.mrb[0].mxu0
  %v2071 = vadd.f32 %v299, %v2070
  %v2072 = vpop.f32.mrb[0].mxu0
  %2073 = vmatprep.mubr.bf16.mxu0 0
  %2074 = vmatmul.mubr.bf16.gmra.mrb[0].mxu0 %v1219
  %v2075 = vpop.f32.mrb[0].mxu0
  %v2076 = vadd.f32 %v299, %v2075
  %v2077 = vpop.f32.mrb[0].mxu0
  %v2078 = vpop.f32.mrb[0].mxu0
  %v2079 = vadd.f32 %v299, %v2078
  %v2080 = vpop.f32.mrb[0].mxu0
  %2081 = vmatprep.mubr.bf16.mxu0 0
  %2082 = vmatmul.mubr.bf16.gmra.mrb[0].mxu0 %v1222
  %v2083 = vpop.f32.mrb[0].mxu0
  %v2084 = vadd.f32 %v299, %v2083
  %v2085 = vpop.f32.mrb[0].mxu0
  %v2086 = vpop.f32.mrb[0].mxu0
  %v2087 = vadd.f32 %v299, %v2086
  %v2088 = vpop.f32.mrb[0].mxu0
  %2089 = vmatprep.mubr.bf16.mxu0 0
  %2090 = vmatmul.mubr.bf16.gmra.mrb[0].mxu0 %v1225
  %v2091 = vpop.f32.mrb[0].mxu0
  %v2092 = vadd.f32 %v299, %v2091
  %v2093 = vpop.f32.mrb[0].mxu0
  %v2094 = vpop.f32.mrb[0].mxu0
  %v2095 = vadd.f32 %v299, %v2094
  %v2096 = vpop.f32.mrb[0].mxu0
  %2097 = vmatprep.mubr.bf16.mxu0 0
  %2098 = vmatmul.mubr.bf16.gmra.mrb[0].mxu0 %v1228
  %v2099 = vpop.f32.mrb[0].mxu0
  %v2100 = vadd.f32 %v299, %v2099
  %v2101 = vpop.f32.mrb[0].mxu0
  %v2102 = vpop.f32.mrb[0].mxu0
  %v2103 = vadd.f32 %v299, %v2102
  %v2104 = vpop.f32.mrb[0].mxu0
  %2105 = vmatprep.mubr.bf16.mxu0 0
  %2106 = vmatmul.mubr.bf16.gmra.mrb[0].mxu0 %v1231
  %v2107 = vpop.f32.mrb[0].mxu0
  %v2108 = vadd.f32 %v299, %v2107
  %v2109 = vpop.f32.mrb[0].mxu0
  %v2110 = vpop.f32.mrb[0].mxu0
  %v2111 = vadd.f32 %v299, %v2110
  %v2112 = vpop.f32.mrb[0].mxu0
  %2113 = vmatprep.mubr.bf16.mxu0 0
  %2114 = vmatmul.mubr.bf16.gmra.mrb[0].mxu0 %v1234
  %v2115 = vpop.f32.mrb[0].mxu0
  %v2116 = vadd.f32 %v299, %v2115
  %v2117 = vpop.f32.mrb[0].mxu0
  %v2118 = vpop.f32.mrb[0].mxu0
  %v2119 = vadd.f32 %v299, %v2118
  %v2120 = vpop.f32.mrb[0].mxu0
  %2121 = vmatprep.mubr.bf16.mxu0 0
  %2122 = vmatmul.mubr.bf16.gmra.mrb[0].mxu0 %v1237
  %v2123 = vpop.f32.mrb[0].mxu0
  %v2124 = vadd.f32 %v299, %v2123
  %v2125 = vpop.f32.mrb[0].mxu0
  %v2126 = vpop.f32.mrb[0].mxu0
  %v2127 = vadd.f32 %v299, %v2126
  %v2128 = vpop.f32.mrb[0].mxu0
  %2129 = vmatprep.mubr.bf16.mxu0 0
  %2130 = vmatmul.mubr.bf16.gmra.mrb[0].mxu0 %v1240
  %v2131 = vpop.f32.mrb[0].mxu0
  %v2132 = vadd.f32 %v299, %v2131
  %v2133 = vpop.f32.mrb[0].mxu0
  %v2134 = vpop.f32.mrb[0].mxu0
  %v2135 = vadd.f32 %v299, %v2134
  %v2136 = vpop.f32.mrb[0].mxu0
  %2137 = vmatprep.mubr.bf16.mxu0 0
  %2138 = vmatmul.mubr.bf16.gmra.mrb[0].mxu0 %v1243
  %v2139 = vpop.f32.mrb[0].mxu0
  %v2140 = vadd.f32 %v299, %v2139
  %v2141 = vpop.f32.mrb[0].mxu0
  %v2142 = vpop.f32.mrb[0].mxu0
  %v2143 = vadd.f32 %v299, %v2142
  %v2144 = vpop.f32.mrb[0].mxu0
  %2145 = vmatprep.mubr.bf16.mxu0 0
  %2146 = vmatmul.mubr.bf16.gmra.mrb[0].mxu0 %v1246
  %v2147 = vpop.f32.mrb[0].mxu0
  %v2148 = vadd.f32 %v299, %v2147
  %v2149 = vpop.f32.mrb[0].mxu0
  %v2150 = vpop.f32.mrb[0].mxu0
  %v2151 = vadd.f32 %v299, %v2150
  %v2152 = vpop.f32.mrb[0].mxu0
  %2153 = vmatprep.mubr.bf16.mxu0 0
  %2154 = vmatmul.mubr.bf16.gmra.mrb[0].mxu0 %v1249
  %v2155 = vpop.f32.mrb[0].mxu0
  %v2156 = vadd.f32 %v299, %v2155
  %v2157 = vpop.f32.mrb[0].mxu0
  %v2158 = vpop.f32.mrb[0].mxu0
  %v2159 = vadd.f32 %v299, %v2158
  %v2160 = vpop.f32.mrb[0].mxu0
  %2161 = vmatprep.mubr.bf16.mxu0 0
  %2162 = vmatmul.mubr.bf16.gmra.mrb[0].mxu0 %v1252
  %v2163 = vpop.f32.mrb[0].mxu0
  %v2164 = vadd.f32 %v299, %v2163
  %v2165 = vpop.f32.mrb[0].mxu0
  %v2166 = vpop.f32.mrb[0].mxu0
  %v2167 = vadd.f32 %v299, %v2166
  %v2168 = vpop.f32.mrb[0].mxu0
  %2169 = vmatprep.mubr.bf16.mxu0 0
  %2170 = vmatmul.mubr.bf16.gmra.mrb[0].mxu0 %v1255
  %v2171 = vpop.f32.mrb[0].mxu0
  %v2172 = vadd.f32 %v299, %v2171
  %v2173 = vpop.f32.mrb[0].mxu0
  %v2174 = vpop.f32.mrb[0].mxu0
  %v2175 = vadd.f32 %v299, %v2174
  %v2176 = vpop.f32.mrb[0].mxu0
  %2177 = vmatprep.mubr.bf16.mxu0 0
  %2178 = vmatmul.mubr.bf16.gmra.mrb[0].mxu0 %v1258
  %v2179 = vpop.f32.mrb[0].mxu0
  %v2180 = vadd.f32 %v299, %v2179
  %v2181 = vpop.f32.mrb[0].mxu0
  %v2182 = vpop.f32.mrb[0].mxu0
  %v2183 = vadd.f32 %v299, %v2182
  %v2184 = vpop.f32.mrb[0].mxu0
  %2185 = vmatprep.mubr.bf16.mxu0 0
  %2186 = vmatmul.mubr.bf16.gmra.mrb[0].mxu0 %v1261
  %v2187 = vpop.f32.mrb[0].mxu0
  %v2188 = vadd.f32 %v299, %v2187
  %v2189 = vpop.f32.mrb[0].mxu0
  %v2190 = vpop.f32.mrb[0].mxu0
  %v2191 = vadd.f32 %v299, %v2190
  %v2192 = vpop.f32.mrb[0].mxu0
  %2193 = vmatprep.mubr.bf16.mxu0 0
  %2194 = vmatmul.mubr.bf16.gmra.mrb[0].mxu0 %v1264
  %v2195 = vpop.f32.mrb[0].mxu0
  %v2196 = vadd.f32 %v299, %v2195
  %v2197 = vpop.f32.mrb[0].mxu0
  %v2198 = vpop.f32.mrb[0].mxu0
  %v2199 = vadd.f32 %v299, %v2198
  %v2200 = vpop.f32.mrb[0].mxu0
  %2201 = vmatprep.mubr.bf16.mxu0 0
  %2202 = vmatmul.mubr.bf16.gmra.mrb[0].mxu0 %v1267
  %v2203 = vpop.f32.mrb[0].mxu0
  %v2204 = vadd.f32 %v299, %v2203
  %v2205 = vpop.f32.mrb[0].mxu0
  %v2206 = vpop.f32.mrb[0].mxu0
  %v2207 = vadd.f32 %v299, %v2206
  %v2208 = vpop.f32.mrb[0].mxu0
  %2209 = vmatprep.mubr.bf16.mxu0 0
  %2210 = vmatmul.mubr.bf16.gmra.mrb[0].mxu0 %v1270
  %v2211 = vpop.f32.mrb[0].mxu0
  %v2212 = vadd.f32 %v299, %v2211
  %v2213 = vpop.f32.mrb[0].mxu0
  %v2214 = vpop.f32.mrb[0].mxu0
  %v2215 = vadd.f32 %v299, %v2214
  %v2216 = vpop.f32.mrb[0].mxu0
  %2217 = vmatprep.mubr.bf16.mxu0 0
  %2218 = vmatmul.mubr.bf16.gmra.mrb[0].mxu0 %v1273
  %v2219 = vpop.f32.mrb[0].mxu0
  %v2220 = vadd.f32 %v299, %v2219
  %v2221 = vpop.f32.mrb[0].mxu0
  %v2222 = vpop.f32.mrb[0].mxu0
  %v2223 = vadd.f32 %v299, %v2222
  %v2224 = vpop.f32.mrb[0].mxu0
  %2225 = vmatprep.mubr.bf16.mxu0 0
  %2226 = vmatmul.mubr.bf16.gmra.mrb[0].mxu0 %v1276
  %v2227 = vpop.f32.mrb[0].mxu0
  %v2228 = vadd.f32 %v299, %v2227
  %v2229 = vpop.f32.mrb[0].mxu0
  %v2230 = vpop.f32.mrb[0].mxu0
  %v2231 = vadd.f32 %v299, %v2230
  %v2232 = vpop.f32.mrb[0].mxu0
  %2233 = vmatprep.mubr.bf16.mxu0 0
  %2234 = vmatmul.mubr.bf16.gmra.mrb[0].mxu0 %v1279
  %v2235 = vpop.f32.mrb[0].mxu0
  %v2236 = vadd.f32 %v299, %v2235
  %v2237 = vpop.f32.mrb[0].mxu0
  %v2238 = vpop.f32.mrb[0].mxu0
  %v2239 = vadd.f32 %v299, %v2238
  %v2240 = vpop.f32.mrb[0].mxu0
  %2241 = vmatprep.mubr.bf16.mxu0 0
  %2242 = vmatmul.mubr.bf16.gmra.mrb[0].mxu0 %v1282
  %v2243 = vpop.f32.mrb[0].mxu0
  %v2244 = vadd.f32 %v299, %v2243
  %v2245 = vpop.f32.mrb[0].mxu0
  %v2246 = vpop.f32.mrb[0].mxu0
  %v2247 = vadd.f32 %v299, %v2246
  %v2248 = vpop.f32.mrb[0].mxu0
  %2249 = vmatprep.mubr.bf16.mxu0 0
  %2250 = vmatmul.mubr.bf16.gmra.mrb[0].mxu0 %v1285
  %v2251 = vpop.f32.mrb[0].mxu0
  %v2252 = vadd.f32 %v299, %v2251
  %v2253 = vpop.f32.mrb[0].mxu0
  %v2254 = vpop.f32.mrb[0].mxu0
  %v2255 = vadd.f32 %v299, %v2254
  %v2256 = vpop.f32.mrb[0].mxu0
  %2257 = vmatprep.mubr.bf16.mxu0 0
  %2258 = vmatmul.mubr.bf16.gmra.mrb[0].mxu0 %v1288
  %v2259 = vpop.f32.mrb[0].mxu0
  %v2260 = vadd.f32 %v299, %v2259
  %v2261 = vpop.f32.mrb[0].mxu0
  %v2262 = vpop.f32.mrb[0].mxu0
  %v2263 = vadd.f32 %v299, %v2262
  %v2264 = vpop.f32.mrb[0].mxu0
  %2265 = vmatprep.mubr.bf16.mxu0 0
  %2266 = vmatmul.mubr.bf16.gmra.mrb[0].mxu0 %v1291
  %v2267 = vpop.f32.mrb[0].mxu0
  %v2268 = vadd.f32 %v299, %v2267
  %v2269 = vpop.f32.mrb[0].mxu0
  %v2270 = vpop.f32.mrb[0].mxu0
  %v2271 = vadd.f32 %v299, %v2270
  %v2272 = vpop.f32.mrb[0].mxu0
  %2273 = vmatprep.mubr.bf16.mxu0 0
  %2274 = vmatmul.mubr.bf16.gmra.mrb[0].mxu0 %v1294
  %v2275 = vpop.f32.mrb[0].mxu0
  %v2276 = vadd.f32 %v299, %v2275
  %v2277 = vpop.f32.mrb[0].mxu0
  %v2278 = vpop.f32.mrb[0].mxu0
  %v2279 = vadd.f32 %v299, %v2278
  %v2280 = vpop.f32.mrb[0].mxu0
  %2281 = vmatprep.mubr.bf16.mxu0 0
  %2282 = vmatmul.mubr.bf16.gmra.mrb[0].mxu0 %v1297
  %v2283 = vpop.f32.mrb[0].mxu0
  %v2284 = vadd.f32 %v299, %v2283
  %v2285 = vpop.f32.mrb[0].mxu0
  %v2286 = vpop.f32.mrb[0].mxu0
  %v2287 = vadd.f32 %v299, %v2286
  %v2288 = vpop.f32.mrb[0].mxu0
  %2289 = vmatprep.mubr.bf16.mxu0 0
  %2290 = vmatmul.mubr.bf16.gmra.mrb[0].mxu0 %v1300
  %v2291 = vpop.f32.mrb[0].mxu0
  %v2292 = vadd.f32 %v299, %v2291
  %v2293 = vpop.f32.mrb[0].mxu0
  %v2294 = vpop.f32.mrb[0].mxu0
  %v2295 = vadd.f32 %v299, %v2294
  %v2296 = vpop.f32.mrb[0].mxu0
  %2297 = vmatprep.mubr.bf16.mxu0 0
  %2298 = vmatmul.mubr.bf16.gmra.mrb[0].mxu0 %v1303
  %v2299 = vpop.f32.mrb[0].mxu0
  %v2300 = vadd.f32 %v299, %v2299
  %v2301 = vpop.f32.mrb[0].mxu0
  %v2302 = vpop.f32.mrb[0].mxu0
  %v2303 = vadd.f32 %v299, %v2302
  %v2304 = vpop.f32.mrb[0].mxu0
  %2305 = vmatprep.mubr.bf16.mxu0 0
  %2306 = vmatmul.mubr.bf16.gmra.mrb[0].mxu0 %v1306
  %v2307 = vpop.f32.mrb[0].mxu0
  %v2308 = vadd.f32 %v299, %v2307
  %v2309 = vpop.f32.mrb[0].mxu0
  %v2310 = vpop.f32.mrb[0].mxu0
  %v2311 = vadd.f32 %v299, %v2310
  %v2312 = vpop.f32.mrb[0].mxu0
  %2313 = vmatprep.mubr.bf16.mxu0 0
  %2314 = vmatmul.mubr.bf16.gmra.mrb[0].mxu0 %v1309
  %v2315 = vpop.f32.mrb[0].mxu0
  %v2316 = vadd.f32 %v299, %v2315
  %v2317 = vpop.f32.mrb[0].mxu0
  %v2318 = vpop.f32.mrb[0].mxu0
  %v2319 = vadd.f32 %v299, %v2318
  %v2320 = vpop.f32.mrb[0].mxu0
  %2321 = vmatprep.mubr.bf16.mxu0 0
  %2322 = vmatmul.mubr.bf16.gmra.mrb[0].mxu0 %v1312
  %v2323 = vpop.f32.mrb[0].mxu0
  %v2324 = vadd.f32 %v299, %v2323
  %v2325 = vpop.f32.mrb[0].mxu0
  %v2326 = vpop.f32.mrb[0].mxu0
  %v2327 = vadd.f32 %v299, %v2326
  %v2328 = vpop.f32.mrb[0].mxu0
  %2329 = vmatprep.mubr.bf16.mxu0 0
  %2330 = vmatmul.mubr.bf16.gmra.mrb[0].mxu0 %v1315
  %v2331 = vpop.f32.mrb[0].mxu0
  %v2332 = vadd.f32 %v299, %v2331
  %v2333 = vpop.f32.mrb[0].mxu0
  %v2334 = vpop.f32.mrb[0].mxu0
  %v2335 = vadd.f32 %v299, %v2334
  %v2336 = vpop.f32.mrb[0].mxu0
  %2337 = vmatprep.mubr.bf16.mxu0 0
  %2338 = vmatmul.mubr.bf16.gmra.mrb[0].mxu0 %v1318
  %v2339 = vpop.f32.mrb[0].mxu0
  %v2340 = vadd.f32 %v299, %v2339
  %v2341 = vpop.f32.mrb[0].mxu0
  %v2342 = vpop.f32.mrb[0].mxu0
  %v2343 = vadd.f32 %v299, %v2342
  %v2344 = vpop.f32.mrb[0].mxu0
  %2345 = vmatprep.mubr.bf16.mxu0 0
  %2346 = vmatmul.mubr.bf16.gmra.mrb[0].mxu0 %v1321
  %v2347 = vpop.f32.mrb[0].mxu0
  %v2348 = vadd.f32 %v299, %v2347
  %v2349 = vpop.f32.mrb[0].mxu0
  %v2350 = vpop.f32.mrb[0].mxu0
  %v2351 = vadd.f32 %v299, %v2350
  %v2352 = vpop.f32.mrb[0].mxu0
  %2353 = vmatprep.mubr.bf16.mxu0 0
  %2354 = vmatmul.mubr.bf16.gmra.mrb[0].mxu0 %v1324
  %v2355 = vpop.f32.mrb[0].mxu0
  %v2356 = vadd.f32 %v299, %v2355
  %v2357 = vpop.f32.mrb[0].mxu0
  %v2358 = vpop.f32.mrb[0].mxu0
  %v2359 = vadd.f32 %v299, %v2358
  %v2360 = vpop.f32.mrb[0].mxu0
  %2361 = vmatprep.mubr.bf16.mxu0 0
  %2362 = vmatmul.mubr.bf16.gmra.mrb[0].mxu0 %v1327
  %v2363 = vpop.f32.mrb[0].mxu0
  %v2364 = vadd.f32 %v299, %v2363
  %v2365 = vpop.f32.mrb[0].mxu0
  %v2366 = vpop.f32.mrb[0].mxu0
  %v2367 = vadd.f32 %v299, %v2366
  %v2368 = vpop.f32.mrb[0].mxu0
  %2369 = vmatprep.mubr.bf16.mxu0 0
  %2370 = vmatmul.mubr.bf16.gmra.mrb[0].mxu0 %v1330
  %v2371 = vpop.f32.mrb[0].mxu0
  %v2372 = vadd.f32 %v299, %v2371
  %v2373 = vpop.f32.mrb[0].mxu0
  %v2374 = vpop.f32.mrb[0].mxu0
  %v2375 = vadd.f32 %v299, %v2374
  %v2376 = vpop.f32.mrb[0].mxu0
  %2377 = vmatprep.mubr.bf16.mxu0 0
  %2378 = vmatmul.mubr.bf16.gmra.mrb[0].mxu0 %v1333
  %v2379 = vpop.f32.mrb[0].mxu0
  %v2380 = vadd.f32 %v299, %v2379
  %v2381 = vpop.f32.mrb[0].mxu0
  %v2382 = vpop.f32.mrb[0].mxu0
  %v2383 = vadd.f32 %v299, %v2382
  %v2384 = vpop.f32.mrb[0].mxu0
  %2385 = vmatprep.mubr.bf16.mxu0 0
  %2386 = vmatmul.mubr.bf16.gmra.mrb[0].mxu0 %v1336
  %v2387 = vpop.f32.mrb[0].mxu0
  %v2388 = vadd.f32 %v299, %v2387
  %v2389 = vpop.f32.mrb[0].mxu0
  %v2390 = vpop.f32.mrb[0].mxu0
  %v2391 = vadd.f32 %v299, %v2390
  %v2392 = vpop.f32.mrb[0].mxu0
  %2393 = vmatprep.mubr.bf16.mxu0 0
  %2394 = vmatmul.mubr.bf16.gmra.mrb[0].mxu0 %v1339
  %v2395 = vpop.f32.mrb[0].mxu0
  %v2396 = vadd.f32 %v299, %v2395
  %v2397 = vpop.f32.mrb[0].mxu0
  %v2398 = vpop.f32.mrb[0].mxu0
  %v2399 = vadd.f32 %v299, %v2398
  %v2400 = vpop.f32.mrb[0].mxu0
  %2401 = vdwg.mxu0
  %v2402 = vmax.f32 %v1380, 0.0
  %v2403 = vmax.f32 %v1383, 0.0
  %v2404 = vmax.f32 %v1388, 0.0
  %v2405 = vmax.f32 %v1391, 0.0
  %v2406 = vmax.f32 %v1396, 0.0
  %v2407 = vmax.f32 %v1399, 0.0
  %v2408 = vmax.f32 %v1404, 0.0
  %v2409 = vmax.f32 %v1407, 0.0
  %v2410 = vmax.f32 %v1412, 0.0
  %v2411 = vmax.f32 %v1415, 0.0
  %v2412 = vmax.f32 %v1420, 0.0
  %v2413 = vmax.f32 %v1423, 0.0
  %v2414 = vmax.f32 %v1428, 0.0
  %v2415 = vmax.f32 %v1431, 0.0
  %v2416 = vmax.f32 %v1436, 0.0
  %v2417 = vmax.f32 %v1439, 0.0
  %v2418 = vmax.f32 %v1444, 0.0
  %v2419 = vmax.f32 %v1447, 0.0
  %v2420 = vmax.f32 %v1452, 0.0
  %v2421 = vmax.f32 %v1455, 0.0
  %v2422 = vmax.f32 %v1460, 0.0
  %v2423 = vmax.f32 %v1463, 0.0
  %v2424 = vmax.f32 %v1468, 0.0
  %v2425 = vmax.f32 %v1471, 0.0
  %v2426 = vmax.f32 %v1476, 0.0
  %v2427 = vmax.f32 %v1479, 0.0
  %v2428 = vmax.f32 %v1484, 0.0
  %v2429 = vmax.f32 %v1487, 0.0
  %v2430 = vmax.f32 %v1492, 0.0
  %v2431 = vmax.f32 %v1495, 0.0
  %v2432 = vmax.f32 %v1500, 0.0
  %v2433 = vmax.f32 %v1503, 0.0
  %v2434 = vmax.f32 %v1508, 0.0
  %v2435 = vmax.f32 %v1511, 0.0
  %v2436 = vmax.f32 %v1516, 0.0
  %v2437 = vmax.f32 %v1519, 0.0
  %v2438 = vmax.f32 %v1524, 0.0
  %v2439 = vmax.f32 %v1527, 0.0
  %v2440 = vmax.f32 %v1532, 0.0
  %v2441 = vmax.f32 %v1535, 0.0
  %v2442 = vmax.f32 %v1540, 0.0
  %v2443 = vmax.f32 %v1543, 0.0
  %v2444 = vmax.f32 %v1548, 0.0
  %v2445 = vmax.f32 %v1551, 0.0
  %v2446 = vmax.f32 %v1556, 0.0
  %v2447 = vmax.f32 %v1559, 0.0
  %v2448 = vmax.f32 %v1564, 0.0
  %v2449 = vmax.f32 %v1567, 0.0
  %v2450 = vmax.f32 %v1572, 0.0
  %v2451 = vmax.f32 %v1575, 0.0
  %v2452 = vmax.f32 %v1580, 0.0
  %v2453 = vmax.f32 %v1583, 0.0
  %v2454 = vmax.f32 %v1588, 0.0
  %v2455 = vmax.f32 %v1591, 0.0
  %v2456 = vmax.f32 %v1596, 0.0
  %v2457 = vmax.f32 %v1599, 0.0
  %v2458 = vmax.f32 %v1604, 0.0
  %v2459 = vmax.f32 %v1607, 0.0
  %v2460 = vmax.f32 %v1612, 0.0
  %v2461 = vmax.f32 %v1615, 0.0
  %v2462 = vmax.f32 %v1620, 0.0
  %v2463 = vmax.f32 %v1623, 0.0
  %v2464 = vmax.f32 %v1628, 0.0
  %v2465 = vmax.f32 %v1631, 0.0
  %v2466 = vmax.f32 %v1636, 0.0
  %v2467 = vmax.f32 %v1639, 0.0
  %v2468 = vmax.f32 %v1644, 0.0
  %v2469 = vmax.f32 %v1647, 0.0
  %v2470 = vmax.f32 %v1652, 0.0
  %v2471 = vmax.f32 %v1655, 0.0
  %v2472 = vmax.f32 %v1660, 0.0
  %v2473 = vmax.f32 %v1663, 0.0
  %v2474 = vmax.f32 %v1668, 0.0
  %v2475 = vmax.f32 %v1671, 0.0
  %v2476 = vmax.f32 %v1676, 0.0
  %v2477 = vmax.f32 %v1679, 0.0
  %v2478 = vmax.f32 %v1684, 0.0
  %v2479 = vmax.f32 %v1687, 0.0
  %v2480 = vmax.f32 %v1692, 0.0
  %v2481 = vmax.f32 %v1695, 0.0
  %v2482 = vmax.f32 %v1700, 0.0
  %v2483 = vmax.f32 %v1703, 0.0
  %v2484 = vmax.f32 %v1708, 0.0
  %v2485 = vmax.f32 %v1711, 0.0
  %v2486 = vmax.f32 %v1716, 0.0
  %v2487 = vmax.f32 %v1719, 0.0
  %v2488 = vmax.f32 %v1724, 0.0
  %v2489 = vmax.f32 %v1727, 0.0
  %v2490 = vmax.f32 %v1732, 0.0
  %v2491 = vmax.f32 %v1735, 0.0
  %v2492 = vmax.f32 %v1740, 0.0
  %v2493 = vmax.f32 %v1743, 0.0
  %v2494 = vmax.f32 %v1748, 0.0
  %v2495 = vmax.f32 %v1751, 0.0
  %v2496 = vmax.f32 %v1756, 0.0
  %v2497 = vmax.f32 %v1759, 0.0
  %v2498 = vmax.f32 %v1764, 0.0
  %v2499 = vmax.f32 %v1767, 0.0
  %v2500 = vmax.f32 %v1772, 0.0
  %v2501 = vmax.f32 %v1775, 0.0
  %v2502 = vmax.f32 %v1780, 0.0
  %v2503 = vmax.f32 %v1783, 0.0
  %v2504 = vmax.f32 %v1788, 0.0
  %v2505 = vmax.f32 %v1791, 0.0
  %v2506 = vmax.f32 %v1796, 0.0
  %v2507 = vmax.f32 %v1799, 0.0
  %v2508 = vmax.f32 %v1804, 0.0
  %v2509 = vmax.f32 %v1807, 0.0
  %v2510 = vmax.f32 %v1812, 0.0
  %v2511 = vmax.f32 %v1815, 0.0
  %v2512 = vmax.f32 %v1820, 0.0
  %v2513 = vmax.f32 %v1823, 0.0
  %v2514 = vmax.f32 %v1828, 0.0
  %v2515 = vmax.f32 %v1831, 0.0
  %v2516 = vmax.f32 %v1836, 0.0
  %v2517 = vmax.f32 %v1839, 0.0
  %v2518 = vmax.f32 %v1844, 0.0
  %v2519 = vmax.f32 %v1847, 0.0
  %v2520 = vmax.f32 %v1852, 0.0
  %v2521 = vmax.f32 %v1855, 0.0
  %v2522 = vmax.f32 %v1860, 0.0
  %v2523 = vmax.f32 %v1863, 0.0
  %v2524 = vmax.f32 %v1868, 0.0
  %v2525 = vmax.f32 %v1871, 0.0
  %v2526 = vmax.f32 %v1876, 0.0
  %v2527 = vmax.f32 %v1879, 0.0
  %v2528 = vmax.f32 %v1884, 0.0
  %v2529 = vmax.f32 %v1887, 0.0
  %v2530 = vmax.f32 %v1892, 0.0
  %v2531 = vmax.f32 %v1895, 0.0
  %v2532 = vmax.f32 %v1900, 0.0
  %v2533 = vmax.f32 %v1903, 0.0
  %v2534 = vmax.f32 %v1908, 0.0
  %v2535 = vmax.f32 %v1911, 0.0
  %v2536 = vmax.f32 %v1916, 0.0
  %v2537 = vmax.f32 %v1919, 0.0
  %v2538 = vmax.f32 %v1924, 0.0
  %v2539 = vmax.f32 %v1927, 0.0
  %v2540 = vmax.f32 %v1932, 0.0
  %v2541 = vmax.f32 %v1935, 0.0
  %v2542 = vmax.f32 %v1940, 0.0
  %v2543 = vmax.f32 %v1943, 0.0
  %v2544 = vmax.f32 %v1948, 0.0
  %v2545 = vmax.f32 %v1951, 0.0
  %v2546 = vmax.f32 %v1956, 0.0
  %v2547 = vmax.f32 %v1959, 0.0
  %v2548 = vmax.f32 %v1964, 0.0
  %v2549 = vmax.f32 %v1967, 0.0
  %v2550 = vmax.f32 %v1972, 0.0
  %v2551 = vmax.f32 %v1975, 0.0
  %v2552 = vmax.f32 %v1980, 0.0
  %v2553 = vmax.f32 %v1983, 0.0
  %v2554 = vmax.f32 %v1988, 0.0
  %v2555 = vmax.f32 %v1991, 0.0
  %v2556 = vmax.f32 %v1996, 0.0
  %v2557 = vmax.f32 %v1999, 0.0
  %v2558 = vmax.f32 %v2004, 0.0
  %v2559 = vmax.f32 %v2007, 0.0
  %v2560 = vmax.f32 %v2012, 0.0
  %v2561 = vmax.f32 %v2015, 0.0
  %v2562 = vmax.f32 %v2020, 0.0
  %v2563 = vmax.f32 %v2023, 0.0
  %v2564 = vmax.f32 %v2028, 0.0
  %v2565 = vmax.f32 %v2031, 0.0
  %v2566 = vmax.f32 %v2036, 0.0
  %v2567 = vmax.f32 %v2039, 0.0
  %v2568 = vmax.f32 %v2044, 0.0
  %v2569 = vmax.f32 %v2047, 0.0
  %v2570 = vmax.f32 %v2052, 0.0
  %v2571 = vmax.f32 %v2055, 0.0
  %v2572 = vmax.f32 %v2060, 0.0
  %v2573 = vmax.f32 %v2063, 0.0
  %v2574 = vmax.f32 %v2068, 0.0
  %v2575 = vmax.f32 %v2071, 0.0
  %v2576 = vmax.f32 %v2076, 0.0
  %v2577 = vmax.f32 %v2079, 0.0
  %v2578 = vmax.f32 %v2084, 0.0
  %v2579 = vmax.f32 %v2087, 0.0
  %v2580 = vmax.f32 %v2092, 0.0
  %v2581 = vmax.f32 %v2095, 0.0
  %v2582 = vmax.f32 %v2100, 0.0
  %v2583 = vmax.f32 %v2103, 0.0
  %v2584 = vmax.f32 %v2108, 0.0
  %v2585 = vmax.f32 %v2111, 0.0
  %v2586 = vmax.f32 %v2116, 0.0
  %v2587 = vmax.f32 %v2119, 0.0
  %v2588 = vmax.f32 %v2124, 0.0
  %v2589 = vmax.f32 %v2127, 0.0
  %v2590 = vmax.f32 %v2132, 0.0
  %v2591 = vmax.f32 %v2135, 0.0
  %v2592 = vmax.f32 %v2140, 0.0
  %v2593 = vmax.f32 %v2143, 0.0
  %v2594 = vmax.f32 %v2148, 0.0
  %v2595 = vmax.f32 %v2151, 0.0
  %v2596 = vmax.f32 %v2156, 0.0
  %v2597 = vmax.f32 %v2159, 0.0
  %v2598 = vmax.f32 %v2164, 0.0
  %v2599 = vmax.f32 %v2167, 0.0
  %v2600 = vmax.f32 %v2172, 0.0
  %v2601 = vmax.f32 %v2175, 0.0
  %v2602 = vmax.f32 %v2180, 0.0
  %v2603 = vmax.f32 %v2183, 0.0
  %v2604 = vmax.f32 %v2188, 0.0
  %v2605 = vmax.f32 %v2191, 0.0
  %v2606 = vmax.f32 %v2196, 0.0
  %v2607 = vmax.f32 %v2199, 0.0
  %v2608 = vmax.f32 %v2204, 0.0
  %v2609 = vmax.f32 %v2207, 0.0
  %v2610 = vmax.f32 %v2212, 0.0
  %v2611 = vmax.f32 %v2215, 0.0
  %v2612 = vmax.f32 %v2220, 0.0
  %v2613 = vmax.f32 %v2223, 0.0
  %v2614 = vmax.f32 %v2228, 0.0
  %v2615 = vmax.f32 %v2231, 0.0
  %v2616 = vmax.f32 %v2236, 0.0
  %v2617 = vmax.f32 %v2239, 0.0
  %v2618 = vmax.f32 %v2244, 0.0
  %v2619 = vmax.f32 %v2247, 0.0
  %v2620 = vmax.f32 %v2252, 0.0
  %v2621 = vmax.f32 %v2255, 0.0
  %v2622 = vmax.f32 %v2260, 0.0
  %v2623 = vmax.f32 %v2263, 0.0
  %v2624 = vmax.f32 %v2268, 0.0
  %v2625 = vmax.f32 %v2271, 0.0
  %v2626 = vmax.f32 %v2276, 0.0
  %v2627 = vmax.f32 %v2279, 0.0
  %v2628 = vmax.f32 %v2284, 0.0
  %v2629 = vmax.f32 %v2287, 0.0
  %v2630 = vmax.f32 %v2292, 0.0
  %v2631 = vmax.f32 %v2295, 0.0
  %v2632 = vmax.f32 %v2300, 0.0
  %v2633 = vmax.f32 %v2303, 0.0
  %v2634 = vmax.f32 %v2308, 0.0
  %v2635 = vmax.f32 %v2311, 0.0
  %v2636 = vmax.f32 %v2316, 0.0
  %v2637 = vmax.f32 %v2319, 0.0
  %v2638 = vmax.f32 %v2324, 0.0
  %v2639 = vmax.f32 %v2327, 0.0
  %v2640 = vmax.f32 %v2332, 0.0
  %v2641 = vmax.f32 %v2335, 0.0
  %v2642 = vmax.f32 %v2340, 0.0
  %v2643 = vmax.f32 %v2343, 0.0
  %v2644 = vmax.f32 %v2348, 0.0
  %v2645 = vmax.f32 %v2351, 0.0
  %v2646 = vmax.f32 %v2356, 0.0
  %v2647 = vmax.f32 %v2359, 0.0
  %v2648 = vmax.f32 %v2364, 0.0
  %v2649 = vmax.f32 %v2367, 0.0
  %v2650 = vmax.f32 %v2372, 0.0
  %v2651 = vmax.f32 %v2375, 0.0
  %v2652 = vmax.f32 %v2380, 0.0
  %v2653 = vmax.f32 %v2383, 0.0
  %v2654 = vmax.f32 %v2388, 0.0
  %v2655 = vmax.f32 %v2391, 0.0
  %v2656 = vmax.f32 %v2396, 0.0
  %v2657 = vmax.f32 %v2399, 0.0
  %vm2658 = vcmask 261120
  %v2659 = vsel %vm2658, %v2402, 0.0
  %v2660 = vsel %vm2658, %v2403, 0.0
  %v2661 = vadd.f32 %v2659, %v2660
  %v2662 = vsel %vm2658, %v2404, 0.0
  %v2663 = vadd.f32 %v2661, %v2662
  %v2664 = vsel %vm2658, %v2405, 0.0
  %v2665 = vadd.f32 %v2663, %v2664
  %v2666 = vsel %vm2658, %v2406, 0.0
  %v2667 = vadd.f32 %v2665, %v2666
  %v2668 = vsel %vm2658, %v2407, 0.0
  %v2669 = vadd.f32 %v2667, %v2668
  %v2670 = vsel %vm2658, %v2408, 0.0
  %v2671 = vadd.f32 %v2669, %v2670
  %v2672 = vsel %vm2658, %v2409, 0.0
  %v2673 = vadd.f32 %v2671, %v2672
  %v2674 = vsel %vm2658, %v2410, 0.0
  %v2675 = vadd.f32 %v2673, %v2674
  %v2676 = vsel %vm2658, %v2411, 0.0
  %v2677 = vadd.f32 %v2675, %v2676
  %v2678 = vsel %vm2658, %v2412, 0.0
  %v2679 = vadd.f32 %v2677, %v2678
  %v2680 = vsel %vm2658, %v2413, 0.0
  %v2681 = vadd.f32 %v2679, %v2680
  %v2682 = vsel %vm2658, %v2414, 0.0
  %v2683 = vadd.f32 %v2681, %v2682
  %v2684 = vsel %vm2658, %v2415, 0.0
  %v2685 = vadd.f32 %v2683, %v2684
  %v2686 = vsel %vm2658, %v2416, 0.0
  %v2687 = vadd.f32 %v2685, %v2686
  %v2688 = vsel %vm2658, %v2417, 0.0
  %v2689 = vadd.f32 %v2687, %v2688
  %v2690 = vsel %vm2658, %v2418, 0.0
  %v2691 = vadd.f32 %v2689, %v2690
  %v2692 = vsel %vm2658, %v2419, 0.0
  %v2693 = vadd.f32 %v2691, %v2692
  %v2694 = vsel %vm2658, %v2420, 0.0
  %v2695 = vadd.f32 %v2693, %v2694
  %v2696 = vsel %vm2658, %v2421, 0.0
  %v2697 = vadd.f32 %v2695, %v2696
  %v2698 = vsel %vm2658, %v2422, 0.0
  %v2699 = vadd.f32 %v2697, %v2698
  %v2700 = vsel %vm2658, %v2423, 0.0
  %v2701 = vadd.f32 %v2699, %v2700
  %v2702 = vsel %vm2658, %v2424, 0.0
  %v2703 = vadd.f32 %v2701, %v2702
  %v2704 = vsel %vm2658, %v2425, 0.0
  %v2705 = vadd.f32 %v2703, %v2704
  %v2706 = vsel %vm2658, %v2426, 0.0
  %v2707 = vadd.f32 %v2705, %v2706
  %v2708 = vsel %vm2658, %v2427, 0.0
  %v2709 = vadd.f32 %v2707, %v2708
  %v2710 = vsel %vm2658, %v2428, 0.0
  %v2711 = vadd.f32 %v2709, %v2710
  %v2712 = vsel %vm2658, %v2429, 0.0
  %v2713 = vadd.f32 %v2711, %v2712
  %v2714 = vsel %vm2658, %v2430, 0.0
  %v2715 = vadd.f32 %v2713, %v2714
  %v2716 = vsel %vm2658, %v2431, 0.0
  %v2717 = vadd.f32 %v2715, %v2716
  %v2718 = vsel %vm2658, %v2432, 0.0
  %v2719 = vadd.f32 %v2717, %v2718
  %v2720 = vsel %vm2658, %v2433, 0.0
  %v2721 = vadd.f32 %v2719, %v2720
  %v2722 = vrot.slane %v2721, 4
  %v2723 = vadd.f32 %v2721, %v2722
  %v2724 = vrot.slane %v2723, 2
  %v2725 = vadd.f32 %v2723, %v2724
  %v2726 = vrot.slane %v2725, 1
  %v2727 = vadd.f32 %v2725, %v2726
  %v2728 = vsel %vm2658, %v2434, 0.0
  %v2729 = vsel %vm2658, %v2435, 0.0
  %v2730 = vadd.f32 %v2728, %v2729
  %v2731 = vsel %vm2658, %v2436, 0.0
  %v2732 = vadd.f32 %v2730, %v2731
  %v2733 = vsel %vm2658, %v2437, 0.0
  %v2734 = vadd.f32 %v2732, %v2733
  %v2735 = vsel %vm2658, %v2438, 0.0
  %v2736 = vadd.f32 %v2734, %v2735
  %v2737 = vsel %vm2658, %v2439, 0.0
  %v2738 = vadd.f32 %v2736, %v2737
  %v2739 = vsel %vm2658, %v2440, 0.0
  %v2740 = vadd.f32 %v2738, %v2739
  %v2741 = vsel %vm2658, %v2441, 0.0
  %v2742 = vadd.f32 %v2740, %v2741
  %v2743 = vsel %vm2658, %v2442, 0.0
  %v2744 = vadd.f32 %v2742, %v2743
  %v2745 = vsel %vm2658, %v2443, 0.0
  %v2746 = vadd.f32 %v2744, %v2745
  %v2747 = vsel %vm2658, %v2444, 0.0
  %v2748 = vadd.f32 %v2746, %v2747
  %v2749 = vsel %vm2658, %v2445, 0.0
  %v2750 = vadd.f32 %v2748, %v2749
  %v2751 = vsel %vm2658, %v2446, 0.0
  %v2752 = vadd.f32 %v2750, %v2751
  %v2753 = vsel %vm2658, %v2447, 0.0
  %v2754 = vadd.f32 %v2752, %v2753
  %v2755 = vsel %vm2658, %v2448, 0.0
  %v2756 = vadd.f32 %v2754, %v2755
  %v2757 = vsel %vm2658, %v2449, 0.0
  %v2758 = vadd.f32 %v2756, %v2757
  %v2759 = vsel %vm2658, %v2450, 0.0
  %v2760 = vadd.f32 %v2758, %v2759
  %v2761 = vsel %vm2658, %v2451, 0.0
  %v2762 = vadd.f32 %v2760, %v2761
  %v2763 = vsel %vm2658, %v2452, 0.0
  %v2764 = vadd.f32 %v2762, %v2763
  %v2765 = vsel %vm2658, %v2453, 0.0
  %v2766 = vadd.f32 %v2764, %v2765
  %v2767 = vsel %vm2658, %v2454, 0.0
  %v2768 = vadd.f32 %v2766, %v2767
  %v2769 = vsel %vm2658, %v2455, 0.0
  %v2770 = vadd.f32 %v2768, %v2769
  %v2771 = vsel %vm2658, %v2456, 0.0
  %v2772 = vadd.f32 %v2770, %v2771
  %v2773 = vsel %vm2658, %v2457, 0.0
  %v2774 = vadd.f32 %v2772, %v2773
  %v2775 = vsel %vm2658, %v2458, 0.0
  %v2776 = vadd.f32 %v2774, %v2775
  %v2777 = vsel %vm2658, %v2459, 0.0
  %v2778 = vadd.f32 %v2776, %v2777
  %v2779 = vsel %vm2658, %v2460, 0.0
  %v2780 = vadd.f32 %v2778, %v2779
  %v2781 = vsel %vm2658, %v2461, 0.0
  %v2782 = vadd.f32 %v2780, %v2781
  %v2783 = vsel %vm2658, %v2462, 0.0
  %v2784 = vadd.f32 %v2782, %v2783
  %v2785 = vsel %vm2658, %v2463, 0.0
  %v2786 = vadd.f32 %v2784, %v2785
  %v2787 = vsel %vm2658, %v2464, 0.0
  %v2788 = vadd.f32 %v2786, %v2787
  %v2789 = vsel %vm2658, %v2465, 0.0
  %v2790 = vadd.f32 %v2788, %v2789
  %v2791 = vrot.slane %v2790, 4
  %v2792 = vadd.f32 %v2790, %v2791
  %v2793 = vrot.slane %v2792, 2
  %v2794 = vadd.f32 %v2792, %v2793
  %v2795 = vrot.slane %v2794, 1
  %v2796 = vadd.f32 %v2794, %v2795
  %v2797 = vsel %vm2658, %v2466, 0.0
  %v2798 = vsel %vm2658, %v2467, 0.0
  %v2799 = vadd.f32 %v2797, %v2798
  %v2800 = vsel %vm2658, %v2468, 0.0
  %v2801 = vadd.f32 %v2799, %v2800
  %v2802 = vsel %vm2658, %v2469, 0.0
  %v2803 = vadd.f32 %v2801, %v2802
  %v2804 = vsel %vm2658, %v2470, 0.0
  %v2805 = vadd.f32 %v2803, %v2804
  %v2806 = vsel %vm2658, %v2471, 0.0
  %v2807 = vadd.f32 %v2805, %v2806
  %v2808 = vsel %vm2658, %v2472, 0.0
  %v2809 = vadd.f32 %v2807, %v2808
  %v2810 = vsel %vm2658, %v2473, 0.0
  %v2811 = vadd.f32 %v2809, %v2810
  %v2812 = vsel %vm2658, %v2474, 0.0
  %v2813 = vadd.f32 %v2811, %v2812
  %v2814 = vsel %vm2658, %v2475, 0.0
  %v2815 = vadd.f32 %v2813, %v2814
  %v2816 = vsel %vm2658, %v2476, 0.0
  %v2817 = vadd.f32 %v2815, %v2816
  %v2818 = vsel %vm2658, %v2477, 0.0
  %v2819 = vadd.f32 %v2817, %v2818
  %v2820 = vsel %vm2658, %v2478, 0.0
  %v2821 = vadd.f32 %v2819, %v2820
  %v2822 = vsel %vm2658, %v2479, 0.0
  %v2823 = vadd.f32 %v2821, %v2822
  %v2824 = vsel %vm2658, %v2480, 0.0
  %v2825 = vadd.f32 %v2823, %v2824
  %v2826 = vsel %vm2658, %v2481, 0.0
  %v2827 = vadd.f32 %v2825, %v2826
  %v2828 = vsel %vm2658, %v2482, 0.0
  %v2829 = vadd.f32 %v2827, %v2828
  %v2830 = vsel %vm2658, %v2483, 0.0
  %v2831 = vadd.f32 %v2829, %v2830
  %v2832 = vsel %vm2658, %v2484, 0.0
  %v2833 = vadd.f32 %v2831, %v2832
  %v2834 = vsel %vm2658, %v2485, 0.0
  %v2835 = vadd.f32 %v2833, %v2834
  %v2836 = vsel %vm2658, %v2486, 0.0
  %v2837 = vadd.f32 %v2835, %v2836
  %v2838 = vsel %vm2658, %v2487, 0.0
  %v2839 = vadd.f32 %v2837, %v2838
  %v2840 = vsel %vm2658, %v2488, 0.0
  %v2841 = vadd.f32 %v2839, %v2840
  %v2842 = vsel %vm2658, %v2489, 0.0
  %v2843 = vadd.f32 %v2841, %v2842
  %v2844 = vsel %vm2658, %v2490, 0.0
  %v2845 = vadd.f32 %v2843, %v2844
  %v2846 = vsel %vm2658, %v2491, 0.0
  %v2847 = vadd.f32 %v2845, %v2846
  %v2848 = vsel %vm2658, %v2492, 0.0
  %v2849 = vadd.f32 %v2847, %v2848
  %v2850 = vsel %vm2658, %v2493, 0.0
  %v2851 = vadd.f32 %v2849, %v2850
  %v2852 = vsel %vm2658, %v2494, 0.0
  %v2853 = vadd.f32 %v2851, %v2852
  %v2854 = vsel %vm2658, %v2495, 0.0
  %v2855 = vadd.f32 %v2853, %v2854
  %v2856 = vsel %vm2658, %v2496, 0.0
  %v2857 = vadd.f32 %v2855, %v2856
  %v2858 = vsel %vm2658, %v2497, 0.0
  %v2859 = vadd.f32 %v2857, %v2858
  %v2860 = vrot.slane %v2859, 4
  %v2861 = vadd.f32 %v2859, %v2860
  %v2862 = vrot.slane %v2861, 2
  %v2863 = vadd.f32 %v2861, %v2862
  %v2864 = vrot.slane %v2863, 1
  %v2865 = vadd.f32 %v2863, %v2864
  %v2866 = vsel %vm2658, %v2498, 0.0
  %v2867 = vsel %vm2658, %v2499, 0.0
  %v2868 = vadd.f32 %v2866, %v2867
  %v2869 = vsel %vm2658, %v2500, 0.0
  %v2870 = vadd.f32 %v2868, %v2869
  %v2871 = vsel %vm2658, %v2501, 0.0
  %v2872 = vadd.f32 %v2870, %v2871
  %v2873 = vsel %vm2658, %v2502, 0.0
  %v2874 = vadd.f32 %v2872, %v2873
  %v2875 = vsel %vm2658, %v2503, 0.0
  %v2876 = vadd.f32 %v2874, %v2875
  %v2877 = vsel %vm2658, %v2504, 0.0
  %v2878 = vadd.f32 %v2876, %v2877
  %v2879 = vsel %vm2658, %v2505, 0.0
  %v2880 = vadd.f32 %v2878, %v2879
  %v2881 = vsel %vm2658, %v2506, 0.0
  %v2882 = vadd.f32 %v2880, %v2881
  %v2883 = vsel %vm2658, %v2507, 0.0
  %v2884 = vadd.f32 %v2882, %v2883
  %v2885 = vsel %vm2658, %v2508, 0.0
  %v2886 = vadd.f32 %v2884, %v2885
  %v2887 = vsel %vm2658, %v2509, 0.0
  %v2888 = vadd.f32 %v2886, %v2887
  %v2889 = vsel %vm2658, %v2510, 0.0
  %v2890 = vadd.f32 %v2888, %v2889
  %v2891 = vsel %vm2658, %v2511, 0.0
  %v2892 = vadd.f32 %v2890, %v2891
  %v2893 = vsel %vm2658, %v2512, 0.0
  %v2894 = vadd.f32 %v2892, %v2893
  %v2895 = vsel %vm2658, %v2513, 0.0
  %v2896 = vadd.f32 %v2894, %v2895
  %v2897 = vsel %vm2658, %v2514, 0.0
  %v2898 = vadd.f32 %v2896, %v2897
  %v2899 = vsel %vm2658, %v2515, 0.0
  %v2900 = vadd.f32 %v2898, %v2899
  %v2901 = vsel %vm2658, %v2516, 0.0
  %v2902 = vadd.f32 %v2900, %v2901
  %v2903 = vsel %vm2658, %v2517, 0.0
  %v2904 = vadd.f32 %v2902, %v2903
  %v2905 = vsel %vm2658, %v2518, 0.0
  %v2906 = vadd.f32 %v2904, %v2905
  %v2907 = vsel %vm2658, %v2519, 0.0
  %v2908 = vadd.f32 %v2906, %v2907
  %v2909 = vsel %vm2658, %v2520, 0.0
  %v2910 = vadd.f32 %v2908, %v2909
  %v2911 = vsel %vm2658, %v2521, 0.0
  %v2912 = vadd.f32 %v2910, %v2911
  %v2913 = vsel %vm2658, %v2522, 0.0
  %v2914 = vadd.f32 %v2912, %v2913
  %v2915 = vsel %vm2658, %v2523, 0.0
  %v2916 = vadd.f32 %v2914, %v2915
  %v2917 = vsel %vm2658, %v2524, 0.0
  %v2918 = vadd.f32 %v2916, %v2917
  %v2919 = vsel %vm2658, %v2525, 0.0
  %v2920 = vadd.f32 %v2918, %v2919
  %v2921 = vsel %vm2658, %v2526, 0.0
  %v2922 = vadd.f32 %v2920, %v2921
  %v2923 = vsel %vm2658, %v2527, 0.0
  %v2924 = vadd.f32 %v2922, %v2923
  %v2925 = vsel %vm2658, %v2528, 0.0
  %v2926 = vadd.f32 %v2924, %v2925
  %v2927 = vsel %vm2658, %v2529, 0.0
  %v2928 = vadd.f32 %v2926, %v2927
  %v2929 = vrot.slane %v2928, 4
  %v2930 = vadd.f32 %v2928, %v2929
  %v2931 = vrot.slane %v2930, 2
  %v2932 = vadd.f32 %v2930, %v2931
  %v2933 = vrot.slane %v2932, 1
  %v2934 = vadd.f32 %v2932, %v2933
  %v2935 = vsel %vm2658, %v2530, 0.0
  %v2936 = vsel %vm2658, %v2531, 0.0
  %v2937 = vadd.f32 %v2935, %v2936
  %v2938 = vsel %vm2658, %v2532, 0.0
  %v2939 = vadd.f32 %v2937, %v2938
  %v2940 = vsel %vm2658, %v2533, 0.0
  %v2941 = vadd.f32 %v2939, %v2940
  %v2942 = vsel %vm2658, %v2534, 0.0
  %v2943 = vadd.f32 %v2941, %v2942
  %v2944 = vsel %vm2658, %v2535, 0.0
  %v2945 = vadd.f32 %v2943, %v2944
  %v2946 = vsel %vm2658, %v2536, 0.0
  %v2947 = vadd.f32 %v2945, %v2946
  %v2948 = vsel %vm2658, %v2537, 0.0
  %v2949 = vadd.f32 %v2947, %v2948
  %v2950 = vsel %vm2658, %v2538, 0.0
  %v2951 = vadd.f32 %v2949, %v2950
  %v2952 = vsel %vm2658, %v2539, 0.0
  %v2953 = vadd.f32 %v2951, %v2952
  %v2954 = vsel %vm2658, %v2540, 0.0
  %v2955 = vadd.f32 %v2953, %v2954
  %v2956 = vsel %vm2658, %v2541, 0.0
  %v2957 = vadd.f32 %v2955, %v2956
  %v2958 = vsel %vm2658, %v2542, 0.0
  %v2959 = vadd.f32 %v2957, %v2958
  %v2960 = vsel %vm2658, %v2543, 0.0
  %v2961 = vadd.f32 %v2959, %v2960
  %v2962 = vsel %vm2658, %v2544, 0.0
  %v2963 = vadd.f32 %v2961, %v2962
  %v2964 = vsel %vm2658, %v2545, 0.0
  %v2965 = vadd.f32 %v2963, %v2964
  %v2966 = vsel %vm2658, %v2546, 0.0
  %v2967 = vadd.f32 %v2965, %v2966
  %v2968 = vsel %vm2658, %v2547, 0.0
  %v2969 = vadd.f32 %v2967, %v2968
  %v2970 = vsel %vm2658, %v2548, 0.0
  %v2971 = vadd.f32 %v2969, %v2970
  %v2972 = vsel %vm2658, %v2549, 0.0
  %v2973 = vadd.f32 %v2971, %v2972
  %v2974 = vsel %vm2658, %v2550, 0.0
  %v2975 = vadd.f32 %v2973, %v2974
  %v2976 = vsel %vm2658, %v2551, 0.0
  %v2977 = vadd.f32 %v2975, %v2976
  %v2978 = vsel %vm2658, %v2552, 0.0
  %v2979 = vadd.f32 %v2977, %v2978
  %v2980 = vsel %vm2658, %v2553, 0.0
  %v2981 = vadd.f32 %v2979, %v2980
  %v2982 = vsel %vm2658, %v2554, 0.0
  %v2983 = vadd.f32 %v2981, %v2982
  %v2984 = vsel %vm2658, %v2555, 0.0
  %v2985 = vadd.f32 %v2983, %v2984
  %v2986 = vsel %vm2658, %v2556, 0.0
  %v2987 = vadd.f32 %v2985, %v2986
  %v2988 = vsel %vm2658, %v2557, 0.0
  %v2989 = vadd.f32 %v2987, %v2988
  %v2990 = vsel %vm2658, %v2558, 0.0
  %v2991 = vadd.f32 %v2989, %v2990
  %v2992 = vsel %vm2658, %v2559, 0.0
  %v2993 = vadd.f32 %v2991, %v2992
  %v2994 = vsel %vm2658, %v2560, 0.0
  %v2995 = vadd.f32 %v2993, %v2994
  %v2996 = vsel %vm2658, %v2561, 0.0
  %v2997 = vadd.f32 %v2995, %v2996
  %v2998 = vrot.slane %v2997, 4
  %v2999 = vadd.f32 %v2997, %v2998
  %v3000 = vrot.slane %v2999, 2
  %v3001 = vadd.f32 %v2999, %v3000
  %v3002 = vrot.slane %v3001, 1
  %v3003 = vadd.f32 %v3001, %v3002
  %v3004 = vsel %vm2658, %v2562, 0.0
  %v3005 = vsel %vm2658, %v2563, 0.0
  %v3006 = vadd.f32 %v3004, %v3005
  %v3007 = vsel %vm2658, %v2564, 0.0
  %v3008 = vadd.f32 %v3006, %v3007
  %v3009 = vsel %vm2658, %v2565, 0.0
  %v3010 = vadd.f32 %v3008, %v3009
  %v3011 = vsel %vm2658, %v2566, 0.0
  %v3012 = vadd.f32 %v3010, %v3011
  %v3013 = vsel %vm2658, %v2567, 0.0
  %v3014 = vadd.f32 %v3012, %v3013
  %v3015 = vsel %vm2658, %v2568, 0.0
  %v3016 = vadd.f32 %v3014, %v3015
  %v3017 = vsel %vm2658, %v2569, 0.0
  %v3018 = vadd.f32 %v3016, %v3017
  %v3019 = vsel %vm2658, %v2570, 0.0
  %v3020 = vadd.f32 %v3018, %v3019
  %v3021 = vsel %vm2658, %v2571, 0.0
  %v3022 = vadd.f32 %v3020, %v3021
  %v3023 = vsel %vm2658, %v2572, 0.0
  %v3024 = vadd.f32 %v3022, %v3023
  %v3025 = vsel %vm2658, %v2573, 0.0
  %v3026 = vadd.f32 %v3024, %v3025
  %v3027 = vsel %vm2658, %v2574, 0.0
  %v3028 = vadd.f32 %v3026, %v3027
  %v3029 = vsel %vm2658, %v2575, 0.0
  %v3030 = vadd.f32 %v3028, %v3029
  %v3031 = vsel %vm2658, %v2576, 0.0
  %v3032 = vadd.f32 %v3030, %v3031
  %v3033 = vsel %vm2658, %v2577, 0.0
  %v3034 = vadd.f32 %v3032, %v3033
  %v3035 = vsel %vm2658, %v2578, 0.0
  %v3036 = vadd.f32 %v3034, %v3035
  %v3037 = vsel %vm2658, %v2579, 0.0
  %v3038 = vadd.f32 %v3036, %v3037
  %v3039 = vsel %vm2658, %v2580, 0.0
  %v3040 = vadd.f32 %v3038, %v3039
  %v3041 = vsel %vm2658, %v2581, 0.0
  %v3042 = vadd.f32 %v3040, %v3041
  %v3043 = vsel %vm2658, %v2582, 0.0
  %v3044 = vadd.f32 %v3042, %v3043
  %v3045 = vsel %vm2658, %v2583, 0.0
  %v3046 = vadd.f32 %v3044, %v3045
  %v3047 = vsel %vm2658, %v2584, 0.0
  %v3048 = vadd.f32 %v3046, %v3047
  %v3049 = vsel %vm2658, %v2585, 0.0
  %v3050 = vadd.f32 %v3048, %v3049
  %v3051 = vsel %vm2658, %v2586, 0.0
  %v3052 = vadd.f32 %v3050, %v3051
  %v3053 = vsel %vm2658, %v2587, 0.0
  %v3054 = vadd.f32 %v3052, %v3053
  %v3055 = vsel %vm2658, %v2588, 0.0
  %v3056 = vadd.f32 %v3054, %v3055
  %v3057 = vsel %vm2658, %v2589, 0.0
  %v3058 = vadd.f32 %v3056, %v3057
  %v3059 = vsel %vm2658, %v2590, 0.0
  %v3060 = vadd.f32 %v3058, %v3059
  %v3061 = vsel %vm2658, %v2591, 0.0
  %v3062 = vadd.f32 %v3060, %v3061
  %v3063 = vsel %vm2658, %v2592, 0.0
  %v3064 = vadd.f32 %v3062, %v3063
  %v3065 = vsel %vm2658, %v2593, 0.0
  %v3066 = vadd.f32 %v3064, %v3065
  %v3067 = vrot.slane %v3066, 4
  %v3068 = vadd.f32 %v3066, %v3067
  %v3069 = vrot.slane %v3068, 2
  %v3070 = vadd.f32 %v3068, %v3069
  %v3071 = vrot.slane %v3070, 1
  %v3072 = vadd.f32 %v3070, %v3071
  %v3073 = vsel %vm2658, %v2594, 0.0
  %v3074 = vsel %vm2658, %v2595, 0.0
  %v3075 = vadd.f32 %v3073, %v3074
  %v3076 = vsel %vm2658, %v2596, 0.0
  %v3077 = vadd.f32 %v3075, %v3076
  %v3078 = vsel %vm2658, %v2597, 0.0
  %v3079 = vadd.f32 %v3077, %v3078
  %v3080 = vsel %vm2658, %v2598, 0.0
  %v3081 = vadd.f32 %v3079, %v3080
  %v3082 = vsel %vm2658, %v2599, 0.0
  %v3083 = vadd.f32 %v3081, %v3082
  %v3084 = vsel %vm2658, %v2600, 0.0
  %v3085 = vadd.f32 %v3083, %v3084
  %v3086 = vsel %vm2658, %v2601, 0.0
  %v3087 = vadd.f32 %v3085, %v3086
  %v3088 = vsel %vm2658, %v2602, 0.0
  %v3089 = vadd.f32 %v3087, %v3088
  %v3090 = vsel %vm2658, %v2603, 0.0
  %v3091 = vadd.f32 %v3089, %v3090
  %v3092 = vsel %vm2658, %v2604, 0.0
  %v3093 = vadd.f32 %v3091, %v3092
  %v3094 = vsel %vm2658, %v2605, 0.0
  %v3095 = vadd.f32 %v3093, %v3094
  %v3096 = vsel %vm2658, %v2606, 0.0
  %v3097 = vadd.f32 %v3095, %v3096
  %v3098 = vsel %vm2658, %v2607, 0.0
  %v3099 = vadd.f32 %v3097, %v3098
  %v3100 = vsel %vm2658, %v2608, 0.0
  %v3101 = vadd.f32 %v3099, %v3100
  %v3102 = vsel %vm2658, %v2609, 0.0
  %v3103 = vadd.f32 %v3101, %v3102
  %v3104 = vsel %vm2658, %v2610, 0.0
  %v3105 = vadd.f32 %v3103, %v3104
  %v3106 = vsel %vm2658, %v2611, 0.0
  %v3107 = vadd.f32 %v3105, %v3106
  %v3108 = vsel %vm2658, %v2612, 0.0
  %v3109 = vadd.f32 %v3107, %v3108
  %v3110 = vsel %vm2658, %v2613, 0.0
  %v3111 = vadd.f32 %v3109, %v3110
  %v3112 = vsel %vm2658, %v2614, 0.0
  %v3113 = vadd.f32 %v3111, %v3112
  %v3114 = vsel %vm2658, %v2615, 0.0
  %v3115 = vadd.f32 %v3113, %v3114
  %v3116 = vsel %vm2658, %v2616, 0.0
  %v3117 = vadd.f32 %v3115, %v3116
  %v3118 = vsel %vm2658, %v2617, 0.0
  %v3119 = vadd.f32 %v3117, %v3118
  %v3120 = vsel %vm2658, %v2618, 0.0
  %v3121 = vadd.f32 %v3119, %v3120
  %v3122 = vsel %vm2658, %v2619, 0.0
  %v3123 = vadd.f32 %v3121, %v3122
  %v3124 = vsel %vm2658, %v2620, 0.0
  %v3125 = vadd.f32 %v3123, %v3124
  %v3126 = vsel %vm2658, %v2621, 0.0
  %v3127 = vadd.f32 %v3125, %v3126
  %v3128 = vsel %vm2658, %v2622, 0.0
  %v3129 = vadd.f32 %v3127, %v3128
  %v3130 = vsel %vm2658, %v2623, 0.0
  %v3131 = vadd.f32 %v3129, %v3130
  %v3132 = vsel %vm2658, %v2624, 0.0
  %v3133 = vadd.f32 %v3131, %v3132
  %v3134 = vsel %vm2658, %v2625, 0.0
  %v3135 = vadd.f32 %v3133, %v3134
  %v3136 = vrot.slane %v3135, 4
  %v3137 = vadd.f32 %v3135, %v3136
  %v3138 = vrot.slane %v3137, 2
  %v3139 = vadd.f32 %v3137, %v3138
  %v3140 = vrot.slane %v3139, 1
  %v3141 = vadd.f32 %v3139, %v3140
  %v3142 = vsel %vm2658, %v2626, 0.0
  %v3143 = vsel %vm2658, %v2627, 0.0
  %v3144 = vadd.f32 %v3142, %v3143
  %v3145 = vsel %vm2658, %v2628, 0.0
  %v3146 = vadd.f32 %v3144, %v3145
  %v3147 = vsel %vm2658, %v2629, 0.0
  %v3148 = vadd.f32 %v3146, %v3147
  %v3149 = vsel %vm2658, %v2630, 0.0
  %v3150 = vadd.f32 %v3148, %v3149
  %v3151 = vsel %vm2658, %v2631, 0.0
  %v3152 = vadd.f32 %v3150, %v3151
  %v3153 = vsel %vm2658, %v2632, 0.0
  %v3154 = vadd.f32 %v3152, %v3153
  %v3155 = vsel %vm2658, %v2633, 0.0
  %v3156 = vadd.f32 %v3154, %v3155
  %v3157 = vsel %vm2658, %v2634, 0.0
  %v3158 = vadd.f32 %v3156, %v3157
  %v3159 = vsel %vm2658, %v2635, 0.0
  %v3160 = vadd.f32 %v3158, %v3159
  %v3161 = vsel %vm2658, %v2636, 0.0
  %v3162 = vadd.f32 %v3160, %v3161
  %v3163 = vsel %vm2658, %v2637, 0.0
  %v3164 = vadd.f32 %v3162, %v3163
  %v3165 = vsel %vm2658, %v2638, 0.0
  %v3166 = vadd.f32 %v3164, %v3165
  %v3167 = vsel %vm2658, %v2639, 0.0
  %v3168 = vadd.f32 %v3166, %v3167
  %v3169 = vsel %vm2658, %v2640, 0.0
  %v3170 = vadd.f32 %v3168, %v3169
  %v3171 = vsel %vm2658, %v2641, 0.0
  %v3172 = vadd.f32 %v3170, %v3171
  %v3173 = vsel %vm2658, %v2642, 0.0
  %v3174 = vadd.f32 %v3172, %v3173
  %v3175 = vsel %vm2658, %v2643, 0.0
  %v3176 = vadd.f32 %v3174, %v3175
  %v3177 = vsel %vm2658, %v2644, 0.0
  %v3178 = vadd.f32 %v3176, %v3177
  %v3179 = vsel %vm2658, %v2645, 0.0
  %v3180 = vadd.f32 %v3178, %v3179
  %v3181 = vsel %vm2658, %v2646, 0.0
  %v3182 = vadd.f32 %v3180, %v3181
  %v3183 = vsel %vm2658, %v2647, 0.0
  %v3184 = vadd.f32 %v3182, %v3183
  %v3185 = vsel %vm2658, %v2648, 0.0
  %v3186 = vadd.f32 %v3184, %v3185
  %v3187 = vsel %vm2658, %v2649, 0.0
  %v3188 = vadd.f32 %v3186, %v3187
  %v3189 = vsel %vm2658, %v2650, 0.0
  %v3190 = vadd.f32 %v3188, %v3189
  %v3191 = vsel %vm2658, %v2651, 0.0
  %v3192 = vadd.f32 %v3190, %v3191
  %v3193 = vsel %vm2658, %v2652, 0.0
  %v3194 = vadd.f32 %v3192, %v3193
  %v3195 = vsel %vm2658, %v2653, 0.0
  %v3196 = vadd.f32 %v3194, %v3195
  %v3197 = vsel %vm2658, %v2654, 0.0
  %v3198 = vadd.f32 %v3196, %v3197
  %v3199 = vsel %vm2658, %v2655, 0.0
  %v3200 = vadd.f32 %v3198, %v3199
  %v3201 = vsel %vm2658, %v2656, 0.0
  %v3202 = vadd.f32 %v3200, %v3201
  %v3203 = vsel %vm2658, %v2657, 0.0
  %v3204 = vadd.f32 %v3202, %v3203
  %v3205 = vrot.slane %v3204, 4
  %v3206 = vadd.f32 %v3204, %v3205
  %v3207 = vrot.slane %v3206, 2
  %v3208 = vadd.f32 %v3206, %v3207
  %v3209 = vrot.slane %v3208, 1
  %v3210 = vadd.f32 %v3208, %v3209
  %v3211 = vrcp.pop 256.0
  %v3212 = vmul.f32 %v2727, %v3211
  %v3213 = vmul.f32 %v2796, %v3211
  %v3214 = vmul.f32 %v2865, %v3211
  %v3215 = vmul.f32 %v2934, %v3211
  %v3216 = vmul.f32 %v3003, %v3211
  %v3217 = vmul.f32 %v3072, %v3211
  %v3218 = vmul.f32 %v3141, %v3211
  %v3219 = vmul.f32 %v3210, %v3211
  %v3220 = vpack.c.bf16 %v3212, %v3212
  %v3221 = vpack.c.bf16 %v3213, %v3213
  %v3222 = vpack.c.bf16 %v3214, %v3214
  %v3223 = vpack.c.bf16 %v3215, %v3215
  %v3224 = vpack.c.bf16 %v3216, %v3216
  %v3225 = vpack.c.bf16 %v3217, %v3217
  %v3226 = vpack.c.bf16 %v3218, %v3218
  %v3227 = vpack.c.bf16 %v3219, %v3219
  %v3228 = vld [vmem:[%s3] sm:$0xf]
  %v3229 = vld [vmem:[%s3 + $0x4] sm:$0xf]
  %v3230 = vld [vmem:[%s3 + $0x8] sm:$0xf]
  %v3231 = vld [vmem:[%s3 + $0xc] sm:$0xf]
  %v3232 = vld [vmem:[%s4] sm:$0x1]
  %v3234 = vlaneseq
  %v3235 = vshrl.u32 %v3234, 7
  %v3236 = vsub.s32 0, %v3235
  %v3237 = vrot.slane %v3232, %v3236
  %v3247 = vunpack.c.l.b16 %v3220
  %v3248 = vunpack.c.l.b16 %v3221
  %v3249 = vunpack.c.l.b16 %v3222
  %v3250 = vunpack.c.l.b16 %v3223
  %v3251 = vunpack.c.l.b16 %v3224
  %v3252 = vunpack.c.l.b16 %v3225
  %v3253 = vunpack.c.l.b16 %v3226
  %v3254 = vunpack.c.l.b16 %v3227
  %vm3255 = vcmask 1041409
  %v3256 = vsel %vm3255, %v3248, %v3247
  %vm3257 = vcmask 1042434
  %v3258 = vsel %vm3257, %v3249, %v3256
  %vm3259 = vcmask 1043459
  %v3260 = vsel %vm3259, %v3250, %v3258
  %vm3261 = vcmask 1044484
  %v3262 = vsel %vm3261, %v3251, %v3260
  %vm3263 = vcmask 1045509
  %v3264 = vsel %vm3263, %v3252, %v3262
  %vm3265 = vcmask 1046534
  %v3266 = vsel %vm3265, %v3253, %v3264
  %vm3267 = vcmask 1047559
  %v3268 = vsel %vm3267, %v3254, %v3266
  %v3269 = vpack.c.b16 %v3268, %v3268
  %v3274 = vunpack.c.l.b16 %v3228
  %v3275 = vunpack.c.l.b16 %v3229
  %v3276 = vunpack.c.l.b16 %v3230
  %v3277 = vunpack.c.l.b16 %v3231
  %v3278 = vpack.c.b16 %v3275, %v3274
  %v3279 = vpack.c.b16 %v3277, %v3276
  %v3283 = vsel %vm2658, %v3269, 0
  %3285 = vmatprep.subr.bf16.mxu0 0
  %3286 = vmatpush1.bf16.msra.mxu0 %v3278
  %3287 = vmatprep.subr.bf16.mxu0 0
  %3288 = vmatpush1.bf16.msra.mxu0 %v3279
  %3289 = vmatprep.subr.bf16.mxu0 0
  %3290 = vmatpush1.bf16.msra.mxu0 0
  %3291 = vmatprep.subr.bf16.mxu0 0
  %3292 = vmatpush1.bf16.msra.mxu0 0
  %3293 = vmatprep.subr.bf16.mxu0 0
  %3294 = vmatpush1.bf16.msra.mxu0 0
  %3295 = vmatprep.subr.bf16.mxu0 0
  %3296 = vmatpush1.bf16.msra.mxu0 0
  %3297 = vmatprep.subr.bf16.mxu0 0
  %3298 = vmatpush1.bf16.msra.mxu0 0
  %3299 = vmatprep.subr.bf16.mxu0 0
  %3300 = vmatpush1.bf16.msra.mxu0 0
  %3301 = vmatprep.subr.bf16.mxu0 0
  %3302 = vmatpush1.bf16.msra.mxu0 0
  %3303 = vmatprep.subr.bf16.mxu0 0
  %3304 = vmatpush1.bf16.msra.mxu0 0
  %3305 = vmatprep.subr.bf16.mxu0 0
  %3306 = vmatpush1.bf16.msra.mxu0 0
  %3307 = vmatprep.subr.bf16.mxu0 0
  %3308 = vmatpush1.bf16.msra.mxu0 0
  %3309 = vmatprep.subr.bf16.mxu0 0
  %3310 = vmatpush1.bf16.msra.mxu0 0
  %3311 = vmatprep.subr.bf16.mxu0 0
  %3312 = vmatpush1.bf16.msra.mxu0 0
  %3313 = vmatprep.subr.bf16.mxu0 0
  %3314 = vmatpush1.bf16.msra.mxu0 0
  %3315 = vmatprep.subr.bf16.mxu0 0
  %3316 = vmatpush1.bf16.msra.mxu0 0
  %3317 = vmatprep.mubr.bf16.mxu0 0
  %3318 = vmatmul.mubr.bf16.gmra.mrb[0].mxu0 %v3283
  %v3319 = vpop.f32.mrb[0].mxu0
  %v3320 = vadd.f32 %v3237, %v3319
  %v3321 = vpop.f32.mrb[0].mxu0
  %v3322 = vpop.f32.mrb[0].mxu0
  %v3323 = vpop.f32.mrb[0].mxu0
  %3324 = vdwg.mxu0
  %v3325 = vmax.f32 %v3320, 0.0
  %v3326 = vpack.c.bf16 %v3325, %v3325
  %v3327 = vld [vmem:[%s5] sm:$0xf]
  %v3328 = vld [vmem:[%s5 + $0x4] sm:$0xf]
  %v3329 = vld [vmem:[%s5 + $0x8] sm:$0xf]
  %v3330 = vld [vmem:[%s5 + $0xc] sm:$0xf]
  %v3331 = vld [vmem:[%s5 + $0x10] sm:$0xf]
  %v3332 = vld [vmem:[%s5 + $0x14] sm:$0xf]
  %v3333 = vld [vmem:[%s5 + $0x18] sm:$0xf]
  %v3334 = vld [vmem:[%s5 + $0x1c] sm:$0xf]
  %v3335 = vld [vmem:[%s5 + $0x20] sm:$0xf]
  %v3336 = vld [vmem:[%s5 + $0x24] sm:$0xf]
  %v3337 = vld [vmem:[%s5 + $0x28] sm:$0xf]
  %v3338 = vld [vmem:[%s5 + $0x2c] sm:$0xf]
  %v3339 = vld [vmem:[%s5 + $0x30] sm:$0xf]
  %v3340 = vld [vmem:[%s5 + $0x34] sm:$0xf]
  %v3341 = vld [vmem:[%s5 + $0x38] sm:$0xf]
  %v3342 = vld [vmem:[%s5 + $0x3c] sm:$0xf]
  %v3343 = vld [vmem:[%s6] sm:$0x1]
  %v3345 = vlaneseq
  %v3346 = vshrl.u32 %v3345, 7
  %v3347 = vsub.s32 0, %v3346
  %v3348 = vrot.slane %v3343, %v3347
  %v3366 = vunpack.c.l.b16 %v3327
  %v3367 = vunpack.c.l.b16 %v3328
  %v3368 = vunpack.c.l.b16 %v3329
  %v3369 = vunpack.c.l.b16 %v3330
  %v3370 = vunpack.c.l.b16 %v3331
  %v3371 = vunpack.c.l.b16 %v3332
  %v3372 = vunpack.c.l.b16 %v3333
  %v3373 = vunpack.c.l.b16 %v3334
  %v3374 = vunpack.c.l.b16 %v3335
  %v3375 = vunpack.c.l.b16 %v3336
  %v3376 = vunpack.c.l.b16 %v3337
  %v3377 = vunpack.c.l.b16 %v3338
  %v3378 = vunpack.c.l.b16 %v3339
  %v3379 = vunpack.c.l.b16 %v3340
  %v3380 = vunpack.c.l.b16 %v3341
  %v3381 = vunpack.c.l.b16 %v3342
  %v3382 = vpack.c.b16 %v3367, %v3366
  %v3383 = vpack.c.b16 %v3369, %v3368
  %v3384 = vpack.c.b16 %v3371, %v3370
  %v3385 = vpack.c.b16 %v3373, %v3372
  %v3386 = vpack.c.b16 %v3375, %v3374
  %v3387 = vpack.c.b16 %v3377, %v3376
  %v3388 = vpack.c.b16 %v3379, %v3378
  %v3389 = vpack.c.b16 %v3381, %v3380
  %3398 = vmatprep.subr.bf16.mxu0 0
  %3399 = vmatpush1.bf16.msra.mxu0 %v3382
  %3400 = vmatprep.subr.bf16.mxu0 0
  %3401 = vmatpush1.bf16.msra.mxu0 %v3383
  %3402 = vmatprep.subr.bf16.mxu0 0
  %3403 = vmatpush1.bf16.msra.mxu0 %v3384
  %3404 = vmatprep.subr.bf16.mxu0 0
  %3405 = vmatpush1.bf16.msra.mxu0 %v3385
  %3406 = vmatprep.subr.bf16.mxu0 0
  %3407 = vmatpush1.bf16.msra.mxu0 %v3386
  %3408 = vmatprep.subr.bf16.mxu0 0
  %3409 = vmatpush1.bf16.msra.mxu0 %v3387
  %3410 = vmatprep.subr.bf16.mxu0 0
  %3411 = vmatpush1.bf16.msra.mxu0 %v3388
  %3412 = vmatprep.subr.bf16.mxu0 0
  %3413 = vmatpush1.bf16.msra.mxu0 %v3389
  %3414 = vmatprep.subr.bf16.mxu0 0
  %3415 = vmatpush1.bf16.msra.mxu0 0
  %3416 = vmatprep.subr.bf16.mxu0 0
  %3417 = vmatpush1.bf16.msra.mxu0 0
  %3418 = vmatprep.subr.bf16.mxu0 0
  %3419 = vmatpush1.bf16.msra.mxu0 0
  %3420 = vmatprep.subr.bf16.mxu0 0
  %3421 = vmatpush1.bf16.msra.mxu0 0
  %3422 = vmatprep.subr.bf16.mxu0 0
  %3423 = vmatpush1.bf16.msra.mxu0 0
  %3424 = vmatprep.subr.bf16.mxu0 0
  %3425 = vmatpush1.bf16.msra.mxu0 0
  %3426 = vmatprep.subr.bf16.mxu0 0
  %3427 = vmatpush1.bf16.msra.mxu0 0
  %3428 = vmatprep.subr.bf16.mxu0 0
  %3429 = vmatpush1.bf16.msra.mxu0 0
  %3430 = vmatprep.mubr.bf16.mxu0 0
  %3431 = vmatmul.mubr.bf16.gmra.mrb[0].mxu0 %v3326
  %v3432 = vpop.f32.mrb[0].mxu0
  %v3433 = vadd.f32 %v3348, %v3432
  %v3434 = vpop.f32.mrb[0].mxu0
  %v3435 = vpop.f32.mrb[0].mxu0
  %v3436 = vpop.f32.mrb[0].mxu0
  %3437 = vdwg.mxu0
  %v3438 = vpack.c.bf16 %v3433, %v3433
  %v3439 = vld [vmem:[%s7] sm:$0xf]
  %v3440 = vld [vmem:[%s7 + $0x4] sm:$0xf]
  %v3441 = vld [vmem:[%s7 + $0x8] sm:$0xf]
  %v3442 = vld [vmem:[%s7 + $0xc] sm:$0xf]
  %v3443 = vld [vmem:[%s7 + $0x10] sm:$0xf]
  %v3444 = vld [vmem:[%s7 + $0x14] sm:$0xf]
  %v3445 = vld [vmem:[%s7 + $0x18] sm:$0xf]
  %v3446 = vld [vmem:[%s7 + $0x1c] sm:$0xf]
  %v3447 = vld [vmem:[%s7 + $0x20] sm:$0xf]
  %v3448 = vld [vmem:[%s7 + $0x24] sm:$0xf]
  %v3449 = vld [vmem:[%s7 + $0x28] sm:$0xf]
  %v3450 = vld [vmem:[%s7 + $0x2c] sm:$0xf]
  %v3451 = vld [vmem:[%s7 + $0x30] sm:$0xf]
  %v3452 = vld [vmem:[%s7 + $0x34] sm:$0xf]
  %v3453 = vld [vmem:[%s7 + $0x38] sm:$0xf]
  %v3454 = vld [vmem:[%s7 + $0x3c] sm:$0xf]
  %v3455 = vld [vmem:[%s8] sm:$0x1]
  %v3457 = vlaneseq
  %v3458 = vshrl.u32 %v3457, 7
  %v3459 = vsub.s32 0, %v3458
  %v3460 = vrot.slane %v3455, %v3459
  %v3478 = vunpack.c.l.b16 %v3439
  %v3479 = vunpack.c.l.b16 %v3440
  %v3480 = vunpack.c.l.b16 %v3441
  %v3481 = vunpack.c.l.b16 %v3442
  %v3482 = vunpack.c.l.b16 %v3443
  %v3483 = vunpack.c.l.b16 %v3444
  %v3484 = vunpack.c.l.b16 %v3445
  %v3485 = vunpack.c.l.b16 %v3446
  %v3486 = vunpack.c.l.b16 %v3447
  %v3487 = vunpack.c.l.b16 %v3448
  %v3488 = vunpack.c.l.b16 %v3449
  %v3489 = vunpack.c.l.b16 %v3450
  %v3490 = vunpack.c.l.b16 %v3451
  %v3491 = vunpack.c.l.b16 %v3452
  %v3492 = vunpack.c.l.b16 %v3453
  %v3493 = vunpack.c.l.b16 %v3454
  %v3494 = vpack.c.b16 %v3479, %v3478
  %v3495 = vpack.c.b16 %v3481, %v3480
  %v3496 = vpack.c.b16 %v3483, %v3482
  %v3497 = vpack.c.b16 %v3485, %v3484
  %v3498 = vpack.c.b16 %v3487, %v3486
  %v3499 = vpack.c.b16 %v3489, %v3488
  %v3500 = vpack.c.b16 %v3491, %v3490
  %v3501 = vpack.c.b16 %v3493, %v3492
  %3510 = vmatprep.subr.bf16.mxu0 0
  %3511 = vmatpush1.bf16.msra.mxu0 %v3494
  %3512 = vmatprep.subr.bf16.mxu0 0
  %3513 = vmatpush1.bf16.msra.mxu0 %v3495
  %3514 = vmatprep.subr.bf16.mxu0 0
  %3515 = vmatpush1.bf16.msra.mxu0 %v3496
  %3516 = vmatprep.subr.bf16.mxu0 0
  %3517 = vmatpush1.bf16.msra.mxu0 %v3497
  %3518 = vmatprep.subr.bf16.mxu0 0
  %3519 = vmatpush1.bf16.msra.mxu0 %v3498
  %3520 = vmatprep.subr.bf16.mxu0 0
  %3521 = vmatpush1.bf16.msra.mxu0 %v3499
  %3522 = vmatprep.subr.bf16.mxu0 0
  %3523 = vmatpush1.bf16.msra.mxu0 %v3500
  %3524 = vmatprep.subr.bf16.mxu0 0
  %3525 = vmatpush1.bf16.msra.mxu0 %v3501
  %3526 = vmatprep.subr.bf16.mxu0 0
  %3527 = vmatpush1.bf16.msra.mxu0 0
  %3528 = vmatprep.subr.bf16.mxu0 0
  %3529 = vmatpush1.bf16.msra.mxu0 0
  %3530 = vmatprep.subr.bf16.mxu0 0
  %3531 = vmatpush1.bf16.msra.mxu0 0
  %3532 = vmatprep.subr.bf16.mxu0 0
  %3533 = vmatpush1.bf16.msra.mxu0 0
  %3534 = vmatprep.subr.bf16.mxu0 0
  %3535 = vmatpush1.bf16.msra.mxu0 0
  %3536 = vmatprep.subr.bf16.mxu0 0
  %3537 = vmatpush1.bf16.msra.mxu0 0
  %3538 = vmatprep.subr.bf16.mxu0 0
  %3539 = vmatpush1.bf16.msra.mxu0 0
  %3540 = vmatprep.subr.bf16.mxu0 0
  %3541 = vmatpush1.bf16.msra.mxu0 0
  %3542 = vmatprep.mubr.bf16.mxu0 0
  %3543 = vmatmul.mubr.bf16.gmra.mrb[0].mxu0 %v3438
  %v3544 = vpop.f32.mrb[0].mxu0
  %v3545 = vadd.f32 %v3460, %v3544
  %v3546 = vpop.f32.mrb[0].mxu0
  %v3547 = vpop.f32.mrb[0].mxu0
  %v3548 = vpop.f32.mrb[0].mxu0
  %3549 = vdwg.mxu0
  %v3550 = vpack.c.bf16 %v3545, %v3545
  %3551 = vst [vmem:[%s9] sm:$0xf] %v3550
  // Predicated region
  $region38: #{classifier_forward.1} parent=0 // pred_check
    _
  $region39: #{classifier_forward.1} parent=0 // pred_check_branch
    %3553 = sbr.rel (0) target = $region41
  $region40: #{classifier_forward.1} parent=0 // pred_region
    _
  $region41: #{classifier_forward.1} parent=0 // pred_fallthru
    _
  // Predicated region
  $region42: #{classifier_forward.1} parent=0 // pred_check
    _
  $region43: #{classifier_forward.1} parent=0 // pred_check_branch
    %3555 = sbr.rel (0) target = $region45
  $region44: #{classifier_forward.1} parent=0 // pred_region
    _
  $region45: #{classifier_forward.1} parent=0 // pred_fallthru
    _

</llo_original>
